<compile_context>
chip_gen: v7x
topology: tpu7x:2x2x1
jax: 0.10.0
libtpu: 0.0.40
codegen_flags: <defaults>
</compile_context>

<pallas_src>
import functools

import jax
import jax.numpy as jnp
from jax import lax
from jax.experimental import pallas as pl
from jax.experimental.pallas import tpu as pltpu


# ------------------------------ fused kernel --------------------------------

def _bigtwo_kernel(B, T,
                   enc_in_ref,
                   ew1_ref, eb1_ref, ew2_ref, eb2_ref,
                   wih_ref, whh_ref, bl_ref,
                   d1wh_ref, d1wx_ref, d1b_ref,
                   d2w_ref, d2b_ref,
                   pw1_ref, pb1_ref, pw2a_ref, pw2b_ref, pw2c_ref, pb2_ref,
                   d3w_ref, d3b_ref, d4w_ref, d4b_ref,
                   out_ref):
    f32 = jnp.float32
    H = 32

    def dot(a, b):
        # f32 activations x bf16 weights (promoted) with f32 accumulation.
        return jnp.dot(a, b, preferred_element_type=f32)

    # ---- shared encoder over all row-stacked 52-chunks of x and z ----------
    # rows [0, 6B)        : x chunks, ordered (chunk j, batch b)
    # rows [6B, 6B + 4TB) : z chunks, ordered (chunk k, time t, batch b)
    e1 = jnp.maximum(dot(enc_in_ref[...], ew1_ref[...]) + eb1_ref[...], 0.0)
    enc = jnp.maximum(dot(e1, ew2_ref[...]) + eb2_ref[...], 0.0)      # (6B+4TB, 16)

    NX = 6 * B
    NZ = T * B

    # ---- LSTM input projection, hoisted & K-chunked over the 4 z chunks ----
    # Result zp is (T*B, 128) in time-major (t, b) row order.
    zp = bl_ref[...]                                                  # (1,128) bias
    for k in range(4):
        zchunk = enc[NX + k * NZ: NX + (k + 1) * NZ, :]               # (T*B, 16)
        zp = zp + dot(zchunk, wih_ref[k * 16:(k + 1) * 16, :])        # (T*B, 128)

    whh = whh_ref[...].astype(f32)                                    # (32, 128), cast once

    lane = lax.broadcasted_iota(jnp.int32, (B, 4 * H), 1)
    g_mask = (lane >= 2 * H) & (lane < 3 * H)                         # tanh ("g") lanes
    half = jnp.where(g_mask, 1.0, 0.5).astype(f32)                    # pre-scale for sigmoid lanes

    # ---- LSTM recurrence (gate order i, f, g, o as in PyTorch) -------------
    h = jnp.zeros((B, H), f32)
    c = jnp.zeros((B, H), f32)
    for t in range(T):                                                # static unroll, T=8
        gates = zp[t * B:(t + 1) * B, :] + dot(h, whh)                # (B, 128)
        tg = jnp.tanh(gates * half)                                   # ONE EUP pass / step
        act = jnp.where(g_mask, tg, 0.5 * tg + 0.5)                   # sigmoid(x)=0.5*tanh(x/2)+0.5
        i_g = act[:, 0:H]
        f_g = act[:, H:2 * H]
        g_g = act[:, 2 * H:3 * H]
        o_g = act[:, 3 * H:4 * H]
        c = f_g * c + i_g * g_g
        h = o_g * jnp.tanh(c)
    # h == lstm_out[:, -1, :] for a single-layer batch_first LSTM.

    # ---- dense1 on concat([h, x_encoded]) ----------------------------------
    # x_encoded folded in via 6 accumulating (B,16)@(16,256) matmuls.
    y1 = dot(h, d1wh_ref[...]) + d1b_ref[...]                         # (B, 256)
    for j in range(6):
        y1 = y1 + dot(enc[j * B:(j + 1) * B, :],
                      d1wx_ref[j * 16:(j + 1) * 16, :])
    y1 = jnp.maximum(y1, 0.0)
    # TODO(synk): nn.Dropout(0.2) in the training path treated as identity
    #             (eval-mode dropout); torch-RNG masking not reproduced.
    y2 = jnp.maximum(dot(y1, d2w_ref[...]) + d2b_ref[...], 0.0)       # (B, 224)

    # ---- 3 predict heads ----------------------------------------------------
    ph = jnp.maximum(dot(y2, pw1_ref[...]) + pb1_ref[...], 0.0)       # (B, 384)
    h0 = dot(ph[:, 0:128],   pw2a_ref[...])                           # (B, 16)
    h1 = dot(ph[:, 128:256], pw2b_ref[...])                           # (B, 16)
    h2 = dot(ph[:, 256:384], pw2c_ref[...])                           # (B, 16)
    hold = jnp.concatenate([h0, h1, h2], axis=-1) + pb2_ref[...]      # (B, 48)

    # ---- value head: dense3 -> ReLU -> dense4 as VPU mult + lane reduce -----
    y3 = jnp.maximum(dot(y2, d3w_ref[...]) + d3b_ref[...], 0.0)       # (B, 128)
    yv = jnp.sum(y3 * d4w_ref[...], axis=-1, keepdims=True) + d4b_ref[...]  # (B, 1)

    # ---- single lane-dense packed output: [hold(48) | y(1) | pad(79)] -------
    pad = jnp.zeros((B, 128 - 49), f32)
    out_ref[...] = jnp.concatenate([hold, yv, pad], axis=-1)          # (B, 128)


# ------------------------------ JAX wrapper ----------------------------------

_VMEM = pl.BlockSpec(memory_space=pltpu.MemorySpace.VMEM)


def bigtwo_forward(params, x, z):
    """x: (B, 6*52), z: (B, T, 4*52) -> (y (B,1), holdings (B,3,16))."""
    B = x.shape[0]
    T = z.shape[1]

    # Row-stack all 52-chunks that go through the shared encoder.
    # x chunks ordered (chunk, batch); z chunks ordered (chunk, time, batch)
    # so every in-kernel consumer slice is a contiguous row range.
    x_rows = x.reshape(B, 6, 52).transpose(1, 0, 2).reshape(6 * B, 52)
    z_rows = z.reshape(B, T, 4, 52).transpose(2, 1, 0, 3).reshape(4 * T * B, 52)
    enc_in = jnp.concatenate([x_rows, z_rows], axis=0)                # (6B + 4TB, 52)

    flat = params["flat"]
    kernel = functools.partial(_bigtwo_kernel, B, T)
    out = pl.pallas_call(
        kernel,
        out_shape=jax.ShapeDtypeStruct((B, 128), jnp.float32),
        in_specs=[_VMEM] * (1 + len(flat)),
        out_specs=_VMEM,
        cost_estimate=pl.CostEstimate(flops=2_600_000,
                                      transcendentals=2_600,
                                      bytes_accessed=500_000),
    )(enc_in, *flat)

    y = out[:, 48:49]
    holdings = out[:, 0:48].reshape(B, 3, 16)
    return y, holdings


# --------------------------- parameter construction --------------------------

def _linear(key, fan_in, fan_out):
    """PyTorch-style uniform(-1/sqrt(fan_in), 1/sqrt(fan_in)); W stored (in,out)."""
    kw, kb = jax.random.split(key)
    bound = 1.0 / float(fan_in) ** 0.5
    w = jax.random.uniform(kw, (fan_in, fan_out), jnp.float32, -bound, bound)
    b = jax.random.uniform(kb, (1, fan_out), jnp.float32, -bound, bound)
    return w, b


def make_params(key):
    keys = jax.random.split(key, 16)
    bf = jnp.bfloat16

    # shared encoder: Linear(52,52) -> ReLU -> Linear(52,16) -> ReLU
    ew1, eb1 = _linear(keys[0], 52, 52)
    ew2, eb2 = _linear(keys[1], 52, 16)

    # LSTM (input 64, hidden 32) — gate order i, f, g, o along the 128 columns.
    hb = 1.0 / 32.0 ** 0.5
    wih = jax.random.uniform(keys[2], (64, 128), jnp.float32, -hb, hb)
    whh = jax.random.uniform(keys[3], (32, 128), jnp.float32, -hb, hb)
    bih = jax.random.uniform(keys[4], (1, 128), jnp.float32, -hb, hb)
    bhh = jax.random.uniform(keys[5], (1, 128), jnp.float32, -hb, hb)
    blstm = bih + bhh

    # dense stack
    d1w, d1b = _linear(keys[6], 32 + 96, 256)
    d1wh, d1wx = d1w[:32], d1w[32:]               # concat order: [lstm_out, x_encoded]
    d2w, d2b = _linear(keys[7], 256, 224)
    d3w, d3b = _linear(keys[8], 224, 128)
    d4w, d4b = _linear(keys[9], 128, 1)
    d4w_row = d4w.T                               # (1,128) — consumed on the VPU path

    # 3 predict heads: Linear(224,128) -> ReLU -> Linear(128,16), stacked dim=1.
    pw1s, pb1s, pw2s, pb2s = [], [], [], []
    for i in range(3):
        w1, b1 = _linear(keys[10 + 2 * i], 224, 128)
        w2, b2 = _linear(keys[11 + 2 * i], 128, 16)
        pw1s.append(w1); pb1s.append(b1); pw2s.append(w2); pb2s.append(b2)
    pw1 = jnp.concatenate(pw1s, axis=1)           # (224, 384) — heads side by side
    pb1 = jnp.concatenate(pb1s, axis=1)           # (1, 384)
    pb2 = jnp.concatenate(pb2s, axis=1)           # (1, 48)

    # Matmul weights in bf16 (halves weight DMA); biases / VPU weights stay f32.
    flat = (ew1.astype(bf), eb1, ew2.astype(bf), eb2,
            wih.astype(bf), whh.astype(bf), blstm,
            d1wh.astype(bf), d1wx.astype(bf), d1b,
            d2w.astype(bf), d2b,
            pw1.astype(bf), pb1,
            pw2s[0].astype(bf), pw2s[1].astype(bf), pw2s[2].astype(bf), pb2,
            d3w.astype(bf), d3b,
            d4w_row, d4b)
    return {"flat": flat}


# ------------------------- pure-JAX reference (check) ------------------------

def reference_forward(params, x, z):
    (ew1, eb1, ew2, eb2, wih, whh, bl, d1wh, d1wx, d1b, d2w, d2b,
     pw1, pb1, pw2a, pw2b, pw2c, pb2, d3w, d3b, d4w_row, d4b) = params["flat"]
    f32 = jnp.float32
    hp = jax.lax.Precision.HIGHEST

    def mm(a, b):
        return jnp.dot(a, b.astype(f32), precision=hp)

    def enc_fn(v):
        h1 = jnp.maximum(mm(v, ew1) + eb1, 0.0)
        return jnp.maximum(mm(h1, ew2) + eb2, 0.0)

    B, T = x.shape[0], z.shape[1]
    xe = enc_fn(x.reshape(B * 6, 52)).reshape(B, 96)
    ze = enc_fn(z.reshape(B * T * 4, 52)).reshape(B, T, 64)

    h = jnp.zeros((B, 32), f32)
    c = jnp.zeros((B, 32), f32)
    for t in range(T):
        g = mm(ze[:, t, :], wih) + bl + mm(h, whh)
        i_g = jax.nn.sigmoid(g[:, 0:32])
        f_g = jax.nn.sigmoid(g[:, 32:64])
        g_g = jnp.tanh(g[:, 64:96])
        o_g = jax.nn.sigmoid(g[:, 96:128])
        c = f_g * c + i_g * g_g
        h = o_g * jnp.tanh(c)

    y1 = jnp.maximum(mm(h, d1wh) + mm(xe, d1wx) + d1b, 0.0)
    y2 = jnp.maximum(mm(y1, d2w) + d2b, 0.0)
    ph = jnp.maximum(mm(y2, pw1) + pb1, 0.0)
    hold = jnp.concatenate([mm(ph[:, 0:128], pw2a),
                            mm(ph[:, 128:256], pw2b),
                            mm(ph[:, 256:384], pw2c)], axis=-1) + pb2
    y3 = jnp.maximum(mm(y2, d3w) + d3b, 0.0)
    y = jnp.sum(y3 * d4w_row, axis=-1, keepdims=True) + d4b
    return y, hold.reshape(B, 3, 16)


# ---------------------------------- main --------------------------------------

if __name__ == "__main__":
    key = jax.random.PRNGKey(0)
    kp, kx, kz = jax.random.split(key, 3)

    B, T = 2, 8
    params = make_params(kp)
    x = jax.random.normal(kx, (B, 6 * 52), jnp.float32)      # (2, 312)
    z = jax.random.normal(kz, (B, T, 4 * 52), jnp.float32)   # (2, 8, 208)

    fwd = jax.jit(lambda xx, zz: bigtwo_forward(params, xx, zz))
    y, holdings = fwd(x, z)
    jax.block_until_ready((y, holdings))

    assert y.shape == (B, 1) and y.dtype == jnp.float32
    assert holdings.shape == (B, 3, 16) and holdings.dtype == jnp.float32

    # Correctness self-check against a pure-JAX reference using the same weights.
    y_r, hold_r = reference_forward(params, x, z)
    assert jnp.allclose(y, y_r, atol=5e-2, rtol=5e-2)
    assert jnp.allclose(holdings, hold_r, atol=5e-2, rtol=5e-2)

    print("KERNEL_OK")
</pallas_src>

<mosaic_0001>
module attributes {stable_mosaic.version = 11 : i64} {
  func.func @_bigtwo_kernel(%arg0: memref<76x52xf32, #tpu.memory_space<vmem>>, %arg1: memref<52x52xbf16, #tpu.memory_space<vmem>>, %arg2: memref<1x52xf32, #tpu.memory_space<vmem>>, %arg3: memref<52x16xbf16, #tpu.memory_space<vmem>>, %arg4: memref<1x16xf32, #tpu.memory_space<vmem>>, %arg5: memref<64x128xbf16, #tpu.memory_space<vmem>>, %arg6: memref<32x128xbf16, #tpu.memory_space<vmem>>, %arg7: memref<1x128xf32, #tpu.memory_space<vmem>>, %arg8: memref<32x256xbf16, #tpu.memory_space<vmem>>, %arg9: memref<96x256xbf16, #tpu.memory_space<vmem>>, %arg10: memref<1x256xf32, #tpu.memory_space<vmem>>, %arg11: memref<256x224xbf16, #tpu.memory_space<vmem>>, %arg12: memref<1x224xf32, #tpu.memory_space<vmem>>, %arg13: memref<224x384xbf16, #tpu.memory_space<vmem>>, %arg14: memref<1x384xf32, #tpu.memory_space<vmem>>, %arg15: memref<128x16xbf16, #tpu.memory_space<vmem>>, %arg16: memref<128x16xbf16, #tpu.memory_space<vmem>>, %arg17: memref<128x16xbf16, #tpu.memory_space<vmem>>, %arg18: memref<1x48xf32, #tpu.memory_space<vmem>>, %arg19: memref<224x128xbf16, #tpu.memory_space<vmem>>, %arg20: memref<1x128xf32, #tpu.memory_space<vmem>>, %arg21: memref<1x128xf32, #tpu.memory_space<vmem>>, %arg22: memref<1x1xf32, #tpu.memory_space<vmem>>, %arg23: memref<2x128xf32, #tpu.memory_space<vmem>>) attributes {dimension_semantics = [], scalar_prefetch = 0 : i64, scratch_operands = 0 : i64, tpu.core_type = #tpu.core_type<tc>} {
    %c0 = arith.constant 0 : index
    %c0_0 = arith.constant 0 : index
    %0 = vector.load %arg0[%c0, %c0_0] : memref<76x52xf32, #tpu.memory_space<vmem>>, vector<76x52xf32>
    %c0_1 = arith.constant 0 : index
    %c0_2 = arith.constant 0 : index
    %1 = vector.load %arg1[%c0_1, %c0_2] : memref<52x52xbf16, #tpu.memory_space<vmem>>, vector<52x52xbf16>
    %cst = arith.constant dense<0.000000e+00> : vector<76x52xf32>
    %2 = tpu.matmul %0, %1, %cst {dimension_numbers = #tpu.dot_dimension_numbers<[1], [0], [0], [1], [0, 0, 1, 1], [], []>} : vector<76x52xf32>, vector<52x52xbf16>, vector<76x52xf32> -> vector<76x52xf32>
    %c0_3 = arith.constant 0 : index
    %c0_4 = arith.constant 0 : index
    %3 = vector.load %arg2[%c0_3, %c0_4] : memref<1x52xf32, #tpu.memory_space<vmem>>, vector<1x52xf32>
    %4 = vector.broadcast %3 : vector<1x52xf32> to vector<76x52xf32>
    %5 = arith.addf %2, %4 : vector<76x52xf32>
    %cst_5 = arith.constant 0.000000e+00 : f32
    %6 = vector.broadcast %cst_5 : f32 to vector<76x52xf32>
    %7 = arith.maximumf %5, %6 : vector<76x52xf32>
    %c0_6 = arith.constant 0 : index
    %c0_7 = arith.constant 0 : index
    %8 = vector.load %arg3[%c0_6, %c0_7] : memref<52x16xbf16, #tpu.memory_space<vmem>>, vector<52x16xbf16>
    %cst_8 = arith.constant dense<0.000000e+00> : vector<76x16xf32>
    %9 = tpu.matmul %7, %8, %cst_8 {dimension_numbers = #tpu.dot_dimension_numbers<[1], [0], [0], [1], [0, 0, 1, 1], [], []>} : vector<76x52xf32>, vector<52x16xbf16>, vector<76x16xf32> -> vector<76x16xf32>
    %c0_9 = arith.constant 0 : index
    %c0_10 = arith.constant 0 : index
    %10 = vector.load %arg4[%c0_9, %c0_10] : memref<1x16xf32, #tpu.memory_space<vmem>>, vector<1x16xf32>
    %11 = vector.broadcast %10 : vector<1x16xf32> to vector<76x16xf32>
    %12 = arith.addf %9, %11 : vector<76x16xf32>
    %cst_11 = arith.constant 0.000000e+00 : f32
    %13 = vector.broadcast %cst_11 : f32 to vector<76x16xf32>
    %14 = arith.maximumf %12, %13 : vector<76x16xf32>
    %c0_12 = arith.constant 0 : index
    %c0_13 = arith.constant 0 : index
    %15 = vector.load %arg7[%c0_12, %c0_13] : memref<1x128xf32, #tpu.memory_space<vmem>>, vector<1x128xf32>
    %16 = vector.extract_strided_slice %14 {offsets = [12, 0], sizes = [16, 16], strides = [1, 1]} : vector<76x16xf32> to vector<16x16xf32>
    %c0_14 = arith.constant 0 : index
    %c0_15 = arith.constant 0 : index
    %17 = vector.load %arg5[%c0_14, %c0_15] : memref<64x128xbf16, #tpu.memory_space<vmem>>, vector<16x128xbf16>
    %cst_16 = arith.constant dense<0.000000e+00> : vector<16x128xf32>
    %18 = tpu.matmul %16, %17, %cst_16 {dimension_numbers = #tpu.dot_dimension_numbers<[1], [0], [0], [1], [0, 0, 1, 1], [], []>} : vector<16x16xf32>, vector<16x128xbf16>, vector<16x128xf32> -> vector<16x128xf32>
    %19 = vector.broadcast %15 : vector<1x128xf32> to vector<16x128xf32>
    %20 = arith.addf %19, %18 : vector<16x128xf32>
    %21 = vector.extract_strided_slice %14 {offsets = [28, 0], sizes = [16, 16], strides = [1, 1]} : vector<76x16xf32> to vector<16x16xf32>
    %c16 = arith.constant 16 : index
    %c0_17 = arith.constant 0 : index
    %22 = vector.load %arg5[%c16, %c0_17] : memref<64x128xbf16, #tpu.memory_space<vmem>>, vector<16x128xbf16>
    %cst_18 = arith.constant dense<0.000000e+00> : vector<16x128xf32>
    %23 = tpu.matmul %21, %22, %cst_18 {dimension_numbers = #tpu.dot_dimension_numbers<[1], [0], [0], [1], [0, 0, 1, 1], [], []>} : vector<16x16xf32>, vector<16x128xbf16>, vector<16x128xf32> -> vector<16x128xf32>
    %24 = arith.addf %20, %23 : vector<16x128xf32>
    %25 = vector.extract_strided_slice %14 {offsets = [44, 0], sizes = [16, 16], strides = [1, 1]} : vector<76x16xf32> to vector<16x16xf32>
    %c32 = arith.constant 32 : index
    %c0_19 = arith.constant 0 : index
    %26 = vector.load %arg5[%c32, %c0_19] : memref<64x128xbf16, #tpu.memory_space<vmem>>, vector<16x128xbf16>
    %cst_20 = arith.constant dense<0.000000e+00> : vector<16x128xf32>
    %27 = tpu.matmul %25, %26, %cst_20 {dimension_numbers = #tpu.dot_dimension_numbers<[1], [0], [0], [1], [0, 0, 1, 1], [], []>} : vector<16x16xf32>, vector<16x128xbf16>, vector<16x128xf32> -> vector<16x128xf32>
    %28 = arith.addf %24, %27 : vector<16x128xf32>
    %29 = vector.extract_strided_slice %14 {offsets = [60, 0], sizes = [16, 16], strides = [1, 1]} : vector<76x16xf32> to vector<16x16xf32>
    %c48 = arith.constant 48 : index
    %c0_21 = arith.constant 0 : index
    %30 = vector.load %arg5[%c48, %c0_21] : memref<64x128xbf16, #tpu.memory_space<vmem>>, vector<16x128xbf16>
    %cst_22 = arith.constant dense<0.000000e+00> : vector<16x128xf32>
    %31 = tpu.matmul %29, %30, %cst_22 {dimension_numbers = #tpu.dot_dimension_numbers<[1], [0], [0], [1], [0, 0, 1, 1], [], []>} : vector<16x16xf32>, vector<16x128xbf16>, vector<16x128xf32> -> vector<16x128xf32>
    %32 = arith.addf %28, %31 : vector<16x128xf32>
    %c0_23 = arith.constant 0 : index
    %c0_24 = arith.constant 0 : index
    %33 = vector.load %arg6[%c0_23, %c0_24] : memref<32x128xbf16, #tpu.memory_space<vmem>>, vector<32x128xbf16>
    %34 = arith.extf %33 : vector<32x128xbf16> to vector<32x128xf32>
    %35 = tpu.iota {dimensions = array<i32: 1>} : vector<2x128xi32>
    %c64_i32 = arith.constant 64 : i32
    %36 = vector.broadcast %c64_i32 : i32 to vector<2x128xi32>
    %37 = arith.cmpi sge, %35, %36 : vector<2x128xi32>
    %c96_i32 = arith.constant 96 : i32
    %38 = vector.broadcast %c96_i32 : i32 to vector<2x128xi32>
    %39 = arith.cmpi slt, %35, %38 : vector<2x128xi32>
    %40 = arith.andi %37, %39 : vector<2x128xi1>
    %cst_25 = arith.constant 1.000000e+00 : f32
    %cst_26 = arith.constant 5.000000e-01 : f32
    %41 = vector.broadcast %cst_25 : f32 to vector<2x128xf32>
    %42 = vector.broadcast %cst_26 : f32 to vector<2x128xf32>
    %43 = arith.select %40, %41, %42 : vector<2x128xi1>, vector<2x128xf32>
    %cst_27 = arith.constant 0.000000e+00 : f32
    %44 = vector.broadcast %cst_27 : f32 to vector<2x32xf32>
    %cst_28 = arith.constant 0.000000e+00 : f32
    %45 = vector.broadcast %cst_28 : f32 to vector<2x32xf32>
    %46 = vector.extract_strided_slice %32 {offsets = [0, 0], sizes = [2, 128], strides = [1, 1]} : vector<16x128xf32> to vector<2x128xf32>
    %cst_29 = arith.constant dense<0.000000e+00> : vector<2x128xf32>
    %47 = tpu.matmul %44, %34, %cst_29 {dimension_numbers = #tpu.dot_dimension_numbers<[1], [0], [0], [1], [0, 0, 1, 1], [], []>} : vector<2x32xf32>, vector<32x128xf32>, vector<2x128xf32> -> vector<2x128xf32>
    %48 = arith.addf %46, %47 : vector<2x128xf32>
    %49 = arith.mulf %48, %43 : vector<2x128xf32>
    %50 = math.tanh %49 : vector<2x128xf32>
    %cst_30 = arith.constant 5.000000e-01 : f32
    %51 = vector.broadcast %cst_30 : f32 to vector<2x128xf32>
    %52 = arith.mulf %51, %50 : vector<2x128xf32>
    %cst_31 = arith.constant 5.000000e-01 : f32
    %53 = vector.broadcast %cst_31 : f32 to vector<2x128xf32>
    %54 = arith.addf %52, %53 : vector<2x128xf32>
    %55 = arith.select %40, %50, %54 : vector<2x128xi1>, vector<2x128xf32>
    %56 = vector.extract_strided_slice %55 {offsets = [0, 0], sizes = [2, 32], strides = [1, 1]} : vector<2x128xf32> to vector<2x32xf32>
    %57 = vector.extract_strided_slice %55 {offsets = [0, 32], sizes = [2, 32], strides = [1, 1]} : vector<2x128xf32> to vector<2x32xf32>
    %58 = vector.extract_strided_slice %55 {offsets = [0, 64], sizes = [2, 32], strides = [1, 1]} : vector<2x128xf32> to vector<2x32xf32>
    %59 = vector.extract_strided_slice %55 {offsets = [0, 96], sizes = [2, 32], strides = [1, 1]} : vector<2x128xf32> to vector<2x32xf32>
    %60 = arith.mulf %57, %45 : vector<2x32xf32>
    %61 = arith.mulf %56, %58 : vector<2x32xf32>
    %62 = arith.addf %60, %61 : vector<2x32xf32>
    %63 = math.tanh %62 : vector<2x32xf32>
    %64 = arith.mulf %59, %63 : vector<2x32xf32>
    %65 = vector.extract_strided_slice %32 {offsets = [2, 0], sizes = [2, 128], strides = [1, 1]} : vector<16x128xf32> to vector<2x128xf32>
    %cst_32 = arith.constant dense<0.000000e+00> : vector<2x128xf32>
    %66 = tpu.matmul %64, %34, %cst_32 {dimension_numbers = #tpu.dot_dimension_numbers<[1], [0], [0], [1], [0, 0, 1, 1], [], []>} : vector<2x32xf32>, vector<32x128xf32>, vector<2x128xf32> -> vector<2x128xf32>
    %67 = arith.addf %65, %66 : vector<2x128xf32>
    %68 = arith.mulf %67, %43 : vector<2x128xf32>
    %69 = math.tanh %68 : vector<2x128xf32>
    %cst_33 = arith.constant 5.000000e-01 : f32
    %70 = vector.broadcast %cst_33 : f32 to vector<2x128xf32>
    %71 = arith.mulf %70, %69 : vector<2x128xf32>
    %cst_34 = arith.constant 5.000000e-01 : f32
    %72 = vector.broadcast %cst_34 : f32 to vector<2x128xf32>
    %73 = arith.addf %71, %72 : vector<2x128xf32>
    %74 = arith.select %40, %69, %73 : vector<2x128xi1>, vector<2x128xf32>
    %75 = vector.extract_strided_slice %74 {offsets = [0, 0], sizes = [2, 32], strides = [1, 1]} : vector<2x128xf32> to vector<2x32xf32>
    %76 = vector.extract_strided_slice %74 {offsets = [0, 32], sizes = [2, 32], strides = [1, 1]} : vector<2x128xf32> to vector<2x32xf32>
    %77 = vector.extract_strided_slice %74 {offsets = [0, 64], sizes = [2, 32], strides = [1, 1]} : vector<2x128xf32> to vector<2x32xf32>
    %78 = vector.extract_strided_slice %74 {offsets = [0, 96], sizes = [2, 32], strides = [1, 1]} : vector<2x128xf32> to vector<2x32xf32>
    %79 = arith.mulf %76, %62 : vector<2x32xf32>
    %80 = arith.mulf %75, %77 : vector<2x32xf32>
    %81 = arith.addf %79, %80 : vector<2x32xf32>
    %82 = math.tanh %81 : vector<2x32xf32>
    %83 = arith.mulf %78, %82 : vector<2x32xf32>
    %84 = vector.extract_strided_slice %32 {offsets = [4, 0], sizes = [2, 128], strides = [1, 1]} : vector<16x128xf32> to vector<2x128xf32>
    %cst_35 = arith.constant dense<0.000000e+00> : vector<2x128xf32>
    %85 = tpu.matmul %83, %34, %cst_35 {dimension_numbers = #tpu.dot_dimension_numbers<[1], [0], [0], [1], [0, 0, 1, 1], [], []>} : vector<2x32xf32>, vector<32x128xf32>, vector<2x128xf32> -> vector<2x128xf32>
    %86 = arith.addf %84, %85 : vector<2x128xf32>
    %87 = arith.mulf %86, %43 : vector<2x128xf32>
    %88 = math.tanh %87 : vector<2x128xf32>
    %cst_36 = arith.constant 5.000000e-01 : f32
    %89 = vector.broadcast %cst_36 : f32 to vector<2x128xf32>
    %90 = arith.mulf %89, %88 : vector<2x128xf32>
    %cst_37 = arith.constant 5.000000e-01 : f32
    %91 = vector.broadcast %cst_37 : f32 to vector<2x128xf32>
    %92 = arith.addf %90, %91 : vector<2x128xf32>
    %93 = arith.select %40, %88, %92 : vector<2x128xi1>, vector<2x128xf32>
    %94 = vector.extract_strided_slice %93 {offsets = [0, 0], sizes = [2, 32], strides = [1, 1]} : vector<2x128xf32> to vector<2x32xf32>
    %95 = vector.extract_strided_slice %93 {offsets = [0, 32], sizes = [2, 32], strides = [1, 1]} : vector<2x128xf32> to vector<2x32xf32>
    %96 = vector.extract_strided_slice %93 {offsets = [0, 64], sizes = [2, 32], strides = [1, 1]} : vector<2x128xf32> to vector<2x32xf32>
    %97 = vector.extract_strided_slice %93 {offsets = [0, 96], sizes = [2, 32], strides = [1, 1]} : vector<2x128xf32> to vector<2x32xf32>
    %98 = arith.mulf %95, %81 : vector<2x32xf32>
    %99 = arith.mulf %94, %96 : vector<2x32xf32>
    %100 = arith.addf %98, %99 : vector<2x32xf32>
    %101 = math.tanh %100 : vector<2x32xf32>
    %102 = arith.mulf %97, %101 : vector<2x32xf32>
    %103 = vector.extract_strided_slice %32 {offsets = [6, 0], sizes = [2, 128], strides = [1, 1]} : vector<16x128xf32> to vector<2x128xf32>
    %cst_38 = arith.constant dense<0.000000e+00> : vector<2x128xf32>
    %104 = tpu.matmul %102, %34, %cst_38 {dimension_numbers = #tpu.dot_dimension_numbers<[1], [0], [0], [1], [0, 0, 1, 1], [], []>} : vector<2x32xf32>, vector<32x128xf32>, vector<2x128xf32> -> vector<2x128xf32>
    %105 = arith.addf %103, %104 : vector<2x128xf32>
    %106 = arith.mulf %105, %43 : vector<2x128xf32>
    %107 = math.tanh %106 : vector<2x128xf32>
    %cst_39 = arith.constant 5.000000e-01 : f32
    %108 = vector.broadcast %cst_39 : f32 to vector<2x128xf32>
    %109 = arith.mulf %108, %107 : vector<2x128xf32>
    %cst_40 = arith.constant 5.000000e-01 : f32
    %110 = vector.broadcast %cst_40 : f32 to vector<2x128xf32>
    %111 = arith.addf %109, %110 : vector<2x128xf32>
    %112 = arith.select %40, %107, %111 : vector<2x128xi1>, vector<2x128xf32>
    %113 = vector.extract_strided_slice %112 {offsets = [0, 0], sizes = [2, 32], strides = [1, 1]} : vector<2x128xf32> to vector<2x32xf32>
    %114 = vector.extract_strided_slice %112 {offsets = [0, 32], sizes = [2, 32], strides = [1, 1]} : vector<2x128xf32> to vector<2x32xf32>
    %115 = vector.extract_strided_slice %112 {offsets = [0, 64], sizes = [2, 32], strides = [1, 1]} : vector<2x128xf32> to vector<2x32xf32>
    %116 = vector.extract_strided_slice %112 {offsets = [0, 96], sizes = [2, 32], strides = [1, 1]} : vector<2x128xf32> to vector<2x32xf32>
    %117 = arith.mulf %114, %100 : vector<2x32xf32>
    %118 = arith.mulf %113, %115 : vector<2x32xf32>
    %119 = arith.addf %117, %118 : vector<2x32xf32>
    %120 = math.tanh %119 : vector<2x32xf32>
    %121 = arith.mulf %116, %120 : vector<2x32xf32>
    %122 = vector.extract_strided_slice %32 {offsets = [8, 0], sizes = [2, 128], strides = [1, 1]} : vector<16x128xf32> to vector<2x128xf32>
    %cst_41 = arith.constant dense<0.000000e+00> : vector<2x128xf32>
    %123 = tpu.matmul %121, %34, %cst_41 {dimension_numbers = #tpu.dot_dimension_numbers<[1], [0], [0], [1], [0, 0, 1, 1], [], []>} : vector<2x32xf32>, vector<32x128xf32>, vector<2x128xf32> -> vector<2x128xf32>
    %124 = arith.addf %122, %123 : vector<2x128xf32>
    %125 = arith.mulf %124, %43 : vector<2x128xf32>
    %126 = math.tanh %125 : vector<2x128xf32>
    %cst_42 = arith.constant 5.000000e-01 : f32
    %127 = vector.broadcast %cst_42 : f32 to vector<2x128xf32>
    %128 = arith.mulf %127, %126 : vector<2x128xf32>
    %cst_43 = arith.constant 5.000000e-01 : f32
    %129 = vector.broadcast %cst_43 : f32 to vector<2x128xf32>
    %130 = arith.addf %128, %129 : vector<2x128xf32>
    %131 = arith.select %40, %126, %130 : vector<2x128xi1>, vector<2x128xf32>
    %132 = vector.extract_strided_slice %131 {offsets = [0, 0], sizes = [2, 32], strides = [1, 1]} : vector<2x128xf32> to vector<2x32xf32>
    %133 = vector.extract_strided_slice %131 {offsets = [0, 32], sizes = [2, 32], strides = [1, 1]} : vector<2x128xf32> to vector<2x32xf32>
    %134 = vector.extract_strided_slice %131 {offsets = [0, 64], sizes = [2, 32], strides = [1, 1]} : vector<2x128xf32> to vector<2x32xf32>
    %135 = vector.extract_strided_slice %131 {offsets = [0, 96], sizes = [2, 32], strides = [1, 1]} : vector<2x128xf32> to vector<2x32xf32>
    %136 = arith.mulf %133, %119 : vector<2x32xf32>
    %137 = arith.mulf %132, %134 : vector<2x32xf32>
    %138 = arith.addf %136, %137 : vector<2x32xf32>
    %139 = math.tanh %138 : vector<2x32xf32>
    %140 = arith.mulf %135, %139 : vector<2x32xf32>
    %141 = vector.extract_strided_slice %32 {offsets = [10, 0], sizes = [2, 128], strides = [1, 1]} : vector<16x128xf32> to vector<2x128xf32>
    %cst_44 = arith.constant dense<0.000000e+00> : vector<2x128xf32>
    %142 = tpu.matmul %140, %34, %cst_44 {dimension_numbers = #tpu.dot_dimension_numbers<[1], [0], [0], [1], [0, 0, 1, 1], [], []>} : vector<2x32xf32>, vector<32x128xf32>, vector<2x128xf32> -> vector<2x128xf32>
    %143 = arith.addf %141, %142 : vector<2x128xf32>
    %144 = arith.mulf %143, %43 : vector<2x128xf32>
    %145 = math.tanh %144 : vector<2x128xf32>
    %cst_45 = arith.constant 5.000000e-01 : f32
    %146 = vector.broadcast %cst_45 : f32 to vector<2x128xf32>
    %147 = arith.mulf %146, %145 : vector<2x128xf32>
    %cst_46 = arith.constant 5.000000e-01 : f32
    %148 = vector.broadcast %cst_46 : f32 to vector<2x128xf32>
    %149 = arith.addf %147, %148 : vector<2x128xf32>
    %150 = arith.select %40, %145, %149 : vector<2x128xi1>, vector<2x128xf32>
    %151 = vector.extract_strided_slice %150 {offsets = [0, 0], sizes = [2, 32], strides = [1, 1]} : vector<2x128xf32> to vector<2x32xf32>
    %152 = vector.extract_strided_slice %150 {offsets = [0, 32], sizes = [2, 32], strides = [1, 1]} : vector<2x128xf32> to vector<2x32xf32>
    %153 = vector.extract_strided_slice %150 {offsets = [0, 64], sizes = [2, 32], strides = [1, 1]} : vector<2x128xf32> to vector<2x32xf32>
    %154 = vector.extract_strided_slice %150 {offsets = [0, 96], sizes = [2, 32], strides = [1, 1]} : vector<2x128xf32> to vector<2x32xf32>
    %155 = arith.mulf %152, %138 : vector<2x32xf32>
    %156 = arith.mulf %151, %153 : vector<2x32xf32>
    %157 = arith.addf %155, %156 : vector<2x32xf32>
    %158 = math.tanh %157 : vector<2x32xf32>
    %159 = arith.mulf %154, %158 : vector<2x32xf32>
    %160 = vector.extract_strided_slice %32 {offsets = [12, 0], sizes = [2, 128], strides = [1, 1]} : vector<16x128xf32> to vector<2x128xf32>
    %cst_47 = arith.constant dense<0.000000e+00> : vector<2x128xf32>
    %161 = tpu.matmul %159, %34, %cst_47 {dimension_numbers = #tpu.dot_dimension_numbers<[1], [0], [0], [1], [0, 0, 1, 1], [], []>} : vector<2x32xf32>, vector<32x128xf32>, vector<2x128xf32> -> vector<2x128xf32>
    %162 = arith.addf %160, %161 : vector<2x128xf32>
    %163 = arith.mulf %162, %43 : vector<2x128xf32>
    %164 = math.tanh %163 : vector<2x128xf32>
    %cst_48 = arith.constant 5.000000e-01 : f32
    %165 = vector.broadcast %cst_48 : f32 to vector<2x128xf32>
    %166 = arith.mulf %165, %164 : vector<2x128xf32>
    %cst_49 = arith.constant 5.000000e-01 : f32
    %167 = vector.broadcast %cst_49 : f32 to vector<2x128xf32>
    %168 = arith.addf %166, %167 : vector<2x128xf32>
    %169 = arith.select %40, %164, %168 : vector<2x128xi1>, vector<2x128xf32>
    %170 = vector.extract_strided_slice %169 {offsets = [0, 0], sizes = [2, 32], strides = [1, 1]} : vector<2x128xf32> to vector<2x32xf32>
    %171 = vector.extract_strided_slice %169 {offsets = [0, 32], sizes = [2, 32], strides = [1, 1]} : vector<2x128xf32> to vector<2x32xf32>
    %172 = vector.extract_strided_slice %169 {offsets = [0, 64], sizes = [2, 32], strides = [1, 1]} : vector<2x128xf32> to vector<2x32xf32>
    %173 = vector.extract_strided_slice %169 {offsets = [0, 96], sizes = [2, 32], strides = [1, 1]} : vector<2x128xf32> to vector<2x32xf32>
    %174 = arith.mulf %171, %157 : vector<2x32xf32>
    %175 = arith.mulf %170, %172 : vector<2x32xf32>
    %176 = arith.addf %174, %175 : vector<2x32xf32>
    %177 = math.tanh %176 : vector<2x32xf32>
    %178 = arith.mulf %173, %177 : vector<2x32xf32>
    %179 = vector.extract_strided_slice %32 {offsets = [14, 0], sizes = [2, 128], strides = [1, 1]} : vector<16x128xf32> to vector<2x128xf32>
    %cst_50 = arith.constant dense<0.000000e+00> : vector<2x128xf32>
    %180 = tpu.matmul %178, %34, %cst_50 {dimension_numbers = #tpu.dot_dimension_numbers<[1], [0], [0], [1], [0, 0, 1, 1], [], []>} : vector<2x32xf32>, vector<32x128xf32>, vector<2x128xf32> -> vector<2x128xf32>
    %181 = arith.addf %179, %180 : vector<2x128xf32>
    %182 = arith.mulf %181, %43 : vector<2x128xf32>
    %183 = math.tanh %182 : vector<2x128xf32>
    %cst_51 = arith.constant 5.000000e-01 : f32
    %184 = vector.broadcast %cst_51 : f32 to vector<2x128xf32>
    %185 = arith.mulf %184, %183 : vector<2x128xf32>
    %cst_52 = arith.constant 5.000000e-01 : f32
    %186 = vector.broadcast %cst_52 : f32 to vector<2x128xf32>
    %187 = arith.addf %185, %186 : vector<2x128xf32>
    %188 = arith.select %40, %183, %187 : vector<2x128xi1>, vector<2x128xf32>
    %189 = vector.extract_strided_slice %188 {offsets = [0, 0], sizes = [2, 32], strides = [1, 1]} : vector<2x128xf32> to vector<2x32xf32>
    %190 = vector.extract_strided_slice %188 {offsets = [0, 32], sizes = [2, 32], strides = [1, 1]} : vector<2x128xf32> to vector<2x32xf32>
    %191 = vector.extract_strided_slice %188 {offsets = [0, 64], sizes = [2, 32], strides = [1, 1]} : vector<2x128xf32> to vector<2x32xf32>
    %192 = vector.extract_strided_slice %188 {offsets = [0, 96], sizes = [2, 32], strides = [1, 1]} : vector<2x128xf32> to vector<2x32xf32>
    %193 = arith.mulf %190, %176 : vector<2x32xf32>
    %194 = arith.mulf %189, %191 : vector<2x32xf32>
    %195 = arith.addf %193, %194 : vector<2x32xf32>
    %196 = math.tanh %195 : vector<2x32xf32>
    %197 = arith.mulf %192, %196 : vector<2x32xf32>
    %c0_53 = arith.constant 0 : index
    %c0_54 = arith.constant 0 : index
    %198 = vector.load %arg8[%c0_53, %c0_54] : memref<32x256xbf16, #tpu.memory_space<vmem>>, vector<32x256xbf16>
    %cst_55 = arith.constant dense<0.000000e+00> : vector<2x256xf32>
    %199 = tpu.matmul %197, %198, %cst_55 {dimension_numbers = #tpu.dot_dimension_numbers<[1], [0], [0], [1], [0, 0, 1, 1], [], []>} : vector<2x32xf32>, vector<32x256xbf16>, vector<2x256xf32> -> vector<2x256xf32>
    %c0_56 = arith.constant 0 : index
    %c0_57 = arith.constant 0 : index
    %200 = vector.load %arg10[%c0_56, %c0_57] : memref<1x256xf32, #tpu.memory_space<vmem>>, vector<1x256xf32>
    %201 = vector.broadcast %200 : vector<1x256xf32> to vector<2x256xf32>
    %202 = arith.addf %199, %201 : vector<2x256xf32>
    %203 = vector.extract_strided_slice %14 {offsets = [0, 0], sizes = [2, 16], strides = [1, 1]} : vector<76x16xf32> to vector<2x16xf32>
    %c0_58 = arith.constant 0 : index
    %c0_59 = arith.constant 0 : index
    %204 = vector.load %arg9[%c0_58, %c0_59] : memref<96x256xbf16, #tpu.memory_space<vmem>>, vector<16x256xbf16>
    %cst_60 = arith.constant dense<0.000000e+00> : vector<2x256xf32>
    %205 = tpu.matmul %203, %204, %cst_60 {dimension_numbers = #tpu.dot_dimension_numbers<[1], [0], [0], [1], [0, 0, 1, 1], [], []>} : vector<2x16xf32>, vector<16x256xbf16>, vector<2x256xf32> -> vector<2x256xf32>
    %206 = arith.addf %202, %205 : vector<2x256xf32>
    %207 = vector.extract_strided_slice %14 {offsets = [2, 0], sizes = [2, 16], strides = [1, 1]} : vector<76x16xf32> to vector<2x16xf32>
    %c16_61 = arith.constant 16 : index
    %c0_62 = arith.constant 0 : index
    %208 = vector.load %arg9[%c16_61, %c0_62] : memref<96x256xbf16, #tpu.memory_space<vmem>>, vector<16x256xbf16>
    %cst_63 = arith.constant dense<0.000000e+00> : vector<2x256xf32>
    %209 = tpu.matmul %207, %208, %cst_63 {dimension_numbers = #tpu.dot_dimension_numbers<[1], [0], [0], [1], [0, 0, 1, 1], [], []>} : vector<2x16xf32>, vector<16x256xbf16>, vector<2x256xf32> -> vector<2x256xf32>
    %210 = arith.addf %206, %209 : vector<2x256xf32>
    %211 = vector.extract_strided_slice %14 {offsets = [4, 0], sizes = [2, 16], strides = [1, 1]} : vector<76x16xf32> to vector<2x16xf32>
    %c32_64 = arith.constant 32 : index
    %c0_65 = arith.constant 0 : index
    %212 = vector.load %arg9[%c32_64, %c0_65] : memref<96x256xbf16, #tpu.memory_space<vmem>>, vector<16x256xbf16>
    %cst_66 = arith.constant dense<0.000000e+00> : vector<2x256xf32>
    %213 = tpu.matmul %211, %212, %cst_66 {dimension_numbers = #tpu.dot_dimension_numbers<[1], [0], [0], [1], [0, 0, 1, 1], [], []>} : vector<2x16xf32>, vector<16x256xbf16>, vector<2x256xf32> -> vector<2x256xf32>
    %214 = arith.addf %210, %213 : vector<2x256xf32>
    %215 = vector.extract_strided_slice %14 {offsets = [6, 0], sizes = [2, 16], strides = [1, 1]} : vector<76x16xf32> to vector<2x16xf32>
    %c48_67 = arith.constant 48 : index
    %c0_68 = arith.constant 0 : index
    %216 = vector.load %arg9[%c48_67, %c0_68] : memref<96x256xbf16, #tpu.memory_space<vmem>>, vector<16x256xbf16>
    %cst_69 = arith.constant dense<0.000000e+00> : vector<2x256xf32>
    %217 = tpu.matmul %215, %216, %cst_69 {dimension_numbers = #tpu.dot_dimension_numbers<[1], [0], [0], [1], [0, 0, 1, 1], [], []>} : vector<2x16xf32>, vector<16x256xbf16>, vector<2x256xf32> -> vector<2x256xf32>
    %218 = arith.addf %214, %217 : vector<2x256xf32>
    %219 = vector.extract_strided_slice %14 {offsets = [8, 0], sizes = [2, 16], strides = [1, 1]} : vector<76x16xf32> to vector<2x16xf32>
    %c64 = arith.constant 64 : index
    %c0_70 = arith.constant 0 : index
    %220 = vector.load %arg9[%c64, %c0_70] : memref<96x256xbf16, #tpu.memory_space<vmem>>, vector<16x256xbf16>
    %cst_71 = arith.constant dense<0.000000e+00> : vector<2x256xf32>
    %221 = tpu.matmul %219, %220, %cst_71 {dimension_numbers = #tpu.dot_dimension_numbers<[1], [0], [0], [1], [0, 0, 1, 1], [], []>} : vector<2x16xf32>, vector<16x256xbf16>, vector<2x256xf32> -> vector<2x256xf32>
    %222 = arith.addf %218, %221 : vector<2x256xf32>
    %223 = vector.extract_strided_slice %14 {offsets = [10, 0], sizes = [2, 16], strides = [1, 1]} : vector<76x16xf32> to vector<2x16xf32>
    %c80 = arith.constant 80 : index
    %c0_72 = arith.constant 0 : index
    %224 = vector.load %arg9[%c80, %c0_72] : memref<96x256xbf16, #tpu.memory_space<vmem>>, vector<16x256xbf16>
    %cst_73 = arith.constant dense<0.000000e+00> : vector<2x256xf32>
    %225 = tpu.matmul %223, %224, %cst_73 {dimension_numbers = #tpu.dot_dimension_numbers<[1], [0], [0], [1], [0, 0, 1, 1], [], []>} : vector<2x16xf32>, vector<16x256xbf16>, vector<2x256xf32> -> vector<2x256xf32>
    %226 = arith.addf %222, %225 : vector<2x256xf32>
    %cst_74 = arith.constant 0.000000e+00 : f32
    %227 = vector.broadcast %cst_74 : f32 to vector<2x256xf32>
    %228 = arith.maximumf %226, %227 : vector<2x256xf32>
    %c0_75 = arith.constant 0 : index
    %c0_76 = arith.constant 0 : index
    %229 = vector.load %arg11[%c0_75, %c0_76] : memref<256x224xbf16, #tpu.memory_space<vmem>>, vector<256x224xbf16>
    %cst_77 = arith.constant dense<0.000000e+00> : vector<2x224xf32>
    %230 = tpu.matmul %228, %229, %cst_77 {dimension_numbers = #tpu.dot_dimension_numbers<[1], [0], [0], [1], [0, 0, 1, 1], [], []>} : vector<2x256xf32>, vector<256x224xbf16>, vector<2x224xf32> -> vector<2x224xf32>
    %c0_78 = arith.constant 0 : index
    %c0_79 = arith.constant 0 : index
    %231 = vector.load %arg12[%c0_78, %c0_79] : memref<1x224xf32, #tpu.memory_space<vmem>>, vector<1x224xf32>
    %232 = vector.broadcast %231 : vector<1x224xf32> to vector<2x224xf32>
    %233 = arith.addf %230, %232 : vector<2x224xf32>
    %cst_80 = arith.constant 0.000000e+00 : f32
    %234 = vector.broadcast %cst_80 : f32 to vector<2x224xf32>
    %235 = arith.maximumf %233, %234 : vector<2x224xf32>
    %c0_81 = arith.constant 0 : index
    %c0_82 = arith.constant 0 : index
    %236 = vector.load %arg13[%c0_81, %c0_82] : memref<224x384xbf16, #tpu.memory_space<vmem>>, vector<224x384xbf16>
    %cst_83 = arith.constant dense<0.000000e+00> : vector<2x384xf32>
    %237 = tpu.matmul %235, %236, %cst_83 {dimension_numbers = #tpu.dot_dimension_numbers<[1], [0], [0], [1], [0, 0, 1, 1], [], []>} : vector<2x224xf32>, vector<224x384xbf16>, vector<2x384xf32> -> vector<2x384xf32>
    %c0_84 = arith.constant 0 : index
    %c0_85 = arith.constant 0 : index
    %238 = vector.load %arg14[%c0_84, %c0_85] : memref<1x384xf32, #tpu.memory_space<vmem>>, vector<1x384xf32>
    %239 = vector.broadcast %238 : vector<1x384xf32> to vector<2x384xf32>
    %240 = arith.addf %237, %239 : vector<2x384xf32>
    %cst_86 = arith.constant 0.000000e+00 : f32
    %241 = vector.broadcast %cst_86 : f32 to vector<2x384xf32>
    %242 = arith.maximumf %240, %241 : vector<2x384xf32>
    %243 = vector.extract_strided_slice %242 {offsets = [0, 0], sizes = [2, 128], strides = [1, 1]} : vector<2x384xf32> to vector<2x128xf32>
    %c0_87 = arith.constant 0 : index
    %c0_88 = arith.constant 0 : index
    %244 = vector.load %arg15[%c0_87, %c0_88] : memref<128x16xbf16, #tpu.memory_space<vmem>>, vector<128x16xbf16>
    %cst_89 = arith.constant dense<0.000000e+00> : vector<2x16xf32>
    %245 = tpu.matmul %243, %244, %cst_89 {dimension_numbers = #tpu.dot_dimension_numbers<[1], [0], [0], [1], [0, 0, 1, 1], [], []>} : vector<2x128xf32>, vector<128x16xbf16>, vector<2x16xf32> -> vector<2x16xf32>
    %246 = vector.extract_strided_slice %242 {offsets = [0, 128], sizes = [2, 128], strides = [1, 1]} : vector<2x384xf32> to vector<2x128xf32>
    %c0_90 = arith.constant 0 : index
    %c0_91 = arith.constant 0 : index
    %247 = vector.load %arg16[%c0_90, %c0_91] : memref<128x16xbf16, #tpu.memory_space<vmem>>, vector<128x16xbf16>
    %cst_92 = arith.constant dense<0.000000e+00> : vector<2x16xf32>
    %248 = tpu.matmul %246, %247, %cst_92 {dimension_numbers = #tpu.dot_dimension_numbers<[1], [0], [0], [1], [0, 0, 1, 1], [], []>} : vector<2x128xf32>, vector<128x16xbf16>, vector<2x16xf32> -> vector<2x16xf32>
    %249 = vector.extract_strided_slice %242 {offsets = [0, 256], sizes = [2, 128], strides = [1, 1]} : vector<2x384xf32> to vector<2x128xf32>
    %c0_93 = arith.constant 0 : index
    %c0_94 = arith.constant 0 : index
    %250 = vector.load %arg17[%c0_93, %c0_94] : memref<128x16xbf16, #tpu.memory_space<vmem>>, vector<128x16xbf16>
    %cst_95 = arith.constant dense<0.000000e+00> : vector<2x16xf32>
    %251 = tpu.matmul %249, %250, %cst_95 {dimension_numbers = #tpu.dot_dimension_numbers<[1], [0], [0], [1], [0, 0, 1, 1], [], []>} : vector<2x128xf32>, vector<128x16xbf16>, vector<2x16xf32> -> vector<2x16xf32>
    %252 = tpu.concatenate %245, %248, %251 in 1 : vector<2x16xf32>, vector<2x16xf32>, vector<2x16xf32> -> vector<2x48xf32>
    %c0_96 = arith.constant 0 : index
    %c0_97 = arith.constant 0 : index
    %253 = vector.load %arg18[%c0_96, %c0_97] : memref<1x48xf32, #tpu.memory_space<vmem>>, vector<1x48xf32>
    %254 = vector.broadcast %253 : vector<1x48xf32> to vector<2x48xf32>
    %255 = arith.addf %252, %254 : vector<2x48xf32>
    %c0_98 = arith.constant 0 : index
    %c0_99 = arith.constant 0 : index
    %256 = vector.load %arg19[%c0_98, %c0_99] : memref<224x128xbf16, #tpu.memory_space<vmem>>, vector<224x128xbf16>
    %cst_100 = arith.constant dense<0.000000e+00> : vector<2x128xf32>
    %257 = tpu.matmul %235, %256, %cst_100 {dimension_numbers = #tpu.dot_dimension_numbers<[1], [0], [0], [1], [0, 0, 1, 1], [], []>} : vector<2x224xf32>, vector<224x128xbf16>, vector<2x128xf32> -> vector<2x128xf32>
    %c0_101 = arith.constant 0 : index
    %c0_102 = arith.constant 0 : index
    %258 = vector.load %arg20[%c0_101, %c0_102] : memref<1x128xf32, #tpu.memory_space<vmem>>, vector<1x128xf32>
    %259 = vector.broadcast %258 : vector<1x128xf32> to vector<2x128xf32>
    %260 = arith.addf %257, %259 : vector<2x128xf32>
    %cst_103 = arith.constant 0.000000e+00 : f32
    %261 = vector.broadcast %cst_103 : f32 to vector<2x128xf32>
    %262 = arith.maximumf %260, %261 : vector<2x128xf32>
    %c0_104 = arith.constant 0 : index
    %c0_105 = arith.constant 0 : index
    %263 = vector.load %arg21[%c0_104, %c0_105] : memref<1x128xf32, #tpu.memory_space<vmem>>, vector<1x128xf32>
    %264 = vector.broadcast %263 : vector<1x128xf32> to vector<2x128xf32>
    %265 = arith.mulf %262, %264 : vector<2x128xf32>
    %cst_106 = arith.constant dense<0.000000e+00> : vector<2xf32>
    %266 = vector.multi_reduction <add>, %265, %cst_106 [1] : vector<2x128xf32> to vector<2xf32>
    %267 = vector.shape_cast %266 : vector<2xf32> to vector<2x1xf32>
    %c0_107 = arith.constant 0 : index
    %c0_108 = arith.constant 0 : index
    %268 = vector.load %arg22[%c0_107, %c0_108] : memref<1x1xf32, #tpu.memory_space<vmem>>, vector<1x1xf32>
    %269 = vector.broadcast %268 : vector<1x1xf32> to vector<2x1xf32>
    %270 = arith.addf %267, %269 : vector<2x1xf32>
    %cst_109 = arith.constant 0.000000e+00 : f32
    %271 = vector.broadcast %cst_109 : f32 to vector<2x79xf32>
    %272 = tpu.concatenate %255, %270, %271 in 1 : vector<2x48xf32>, vector<2x1xf32>, vector<2x79xf32> -> vector<2x128xf32>
    %c0_110 = arith.constant 0 : index
    %c0_111 = arith.constant 0 : index
    %273 = vector.load %arg23[%c0_110, %c0_111] : memref<2x128xf32, #tpu.memory_space<vmem>>, vector<2x128xf32>
    tpu.vector_store %arg23[%c0_110, %c0_111], %272 {strides = array<i32>} : memref<2x128xf32, #tpu.memory_space<vmem>>, vector<2x128xf32>,
    return
  }
}

</mosaic_0001>

<llo_original>
// kernel: _lambda_.1
$region0: #{_lambda_.1}
  #allocation0 [shape = 'u32[]', space=smem, size = 0x4, offset = 0x4, fixed_abs, tag = 'smem constant byte address 0x4 - core index']
  #allocation1 [shape = 'u32[144,128]{1,0:T(1,128)}', space=vmem, size = 0x12000, scoped, tag = 'internal scratch']
  #allocation2 [shape = 'f32[1,1]{1,0:T(1,128)S(1)}', space=vmem, size = 0x200, scoped, tag = 'scoped memory for _lambda_.1']
  %s0 = inlined_call_operand.vmem [shape: f32[76,52], index: 0, kind: input, shape index: {}]
  %s1 = inlined_call_operand.vmem [shape: bf16[52,52], index: 1, kind: input, shape index: {}]
  %s2 = inlined_call_operand.vmem [shape: f32[1,52], index: 2, kind: input, shape index: {}]
  %s3 = inlined_call_operand.vmem [shape: bf16[52,16], index: 3, kind: input, shape index: {}]
  %s4 = inlined_call_operand.vmem [shape: f32[1,16], index: 4, kind: input, shape index: {}]
  %s5 = inlined_call_operand.vmem [shape: bf16[64,128], index: 5, kind: input, shape index: {}]
  %s6 = inlined_call_operand.vmem [shape: bf16[32,128], index: 6, kind: input, shape index: {}]
  %s7 = inlined_call_operand.vmem [shape: f32[1,128], index: 7, kind: input, shape index: {}]
  %s8 = inlined_call_operand.vmem [shape: bf16[32,256], index: 8, kind: input, shape index: {}]
  %s9 = inlined_call_operand.vmem [shape: bf16[96,256], index: 9, kind: input, shape index: {}]
  %s10 = inlined_call_operand.vmem [shape: f32[1,256], index: 10, kind: input, shape index: {}]
  %s11 = inlined_call_operand.vmem [shape: bf16[256,224], index: 11, kind: input, shape index: {}]
  %s12 = inlined_call_operand.vmem [shape: f32[1,224], index: 12, kind: input, shape index: {}]
  %s13 = inlined_call_operand.vmem [shape: bf16[224,384], index: 13, kind: input, shape index: {}]
  %s14 = inlined_call_operand.vmem [shape: f32[1,384], index: 14, kind: input, shape index: {}]
  %s15 = inlined_call_operand.vmem [shape: bf16[128,16], index: 15, kind: input, shape index: {}]
  %s16 = inlined_call_operand.vmem [shape: bf16[128,16], index: 16, kind: input, shape index: {}]
  %s17 = inlined_call_operand.vmem [shape: bf16[128,16], index: 17, kind: input, shape index: {}]
  %s18 = inlined_call_operand.vmem [shape: f32[1,48], index: 18, kind: input, shape index: {}]
  %s19 = inlined_call_operand.vmem [shape: bf16[224,128], index: 19, kind: input, shape index: {}]
  %s20 = inlined_call_operand.vmem [shape: f32[1,128], index: 20, kind: input, shape index: {}]
  %s21 = inlined_call_operand.vmem [shape: f32[1,128], index: 21, kind: input, shape index: {}]
  %s22 = inlined_call_operand.<no memory space> [shape: f32[1,1], index: 22, kind: input, shape index: {}]
  %s23 = inlined_call_operand.vmem [shape: f32[2,128], index: 23, kind: output, shape index: {}]
  %s24 = sld [smem:[#allocation0]]
  $region102: #{_lambda_.1} parent=0
    _
  %s26 = ssub.s32 1, %s24
  %s27 = scalar_select 0, %s26, %s24
  %v28 = vstv %s22
  %29 = vst [vmem:[#allocation2] sm:$0x1] %v28
  // Predicated region
  $region2: #{_lambda_.1} parent=0 // pred_check
    _
  $region3: #{_lambda_.1} parent=0 // pred_check_branch
    %31 = sbr.rel (0) target = $region5
  $region4: #{_lambda_.1} parent=0 // pred_region
    _
  $region5: #{_lambda_.1} parent=0 // pred_fallthru
    _
  // Predicated region
  $region6: #{_lambda_.1} parent=0 // pred_check
    _
  $region7: #{_lambda_.1} parent=0 // pred_check_branch
    %33 = sbr.rel (0) target = $region9
  $region8: #{_lambda_.1} parent=0 // pred_region
    _
  $region9: #{_lambda_.1} parent=0 // pred_fallthru
    _
  // Predicated region
  $region10: #{_lambda_.1} parent=0 // pred_check
    _
  $region11: #{_lambda_.1} parent=0 // pred_check_branch
    %35 = sbr.rel (0) target = $region13
  $region12: #{_lambda_.1} parent=0 // pred_region
    _
  $region13: #{_lambda_.1} parent=0 // pred_fallthru
    _
  // Predicated region
  $region14: #{_lambda_.1} parent=0 // pred_check
    _
  $region15: #{_lambda_.1} parent=0 // pred_check_branch
    %37 = sbr.rel (0) target = $region17
  $region16: #{_lambda_.1} parent=0 // pred_region
    _
  $region17: #{_lambda_.1} parent=0 // pred_fallthru
    _
  // Predicated region
  $region18: #{_lambda_.1} parent=0 // pred_check
    _
  $region19: #{_lambda_.1} parent=0 // pred_check_branch
    %39 = sbr.rel (0) target = $region21
  $region20: #{_lambda_.1} parent=0 // pred_region
    _
  $region21: #{_lambda_.1} parent=0 // pred_fallthru
    _
  // Predicated region
  $region22: #{_lambda_.1} parent=0 // pred_check
    _
  $region23: #{_lambda_.1} parent=0 // pred_check_branch
    %41 = sbr.rel (0) target = $region25
  $region24: #{_lambda_.1} parent=0 // pred_region
    _
  $region25: #{_lambda_.1} parent=0 // pred_fallthru
    _
  // Predicated region
  $region26: #{_lambda_.1} parent=0 // pred_check
    _
  $region27: #{_lambda_.1} parent=0 // pred_check_branch
    %43 = sbr.rel (0) target = $region29
  $region28: #{_lambda_.1} parent=0 // pred_region
    _
  $region29: #{_lambda_.1} parent=0 // pred_fallthru
    _
  // Predicated region
  $region30: #{_lambda_.1} parent=0 // pred_check
    _
  $region31: #{_lambda_.1} parent=0 // pred_check_branch
    %45 = sbr.rel (0) target = $region33
  $region32: #{_lambda_.1} parent=0 // pred_region
    _
  $region33: #{_lambda_.1} parent=0 // pred_fallthru
    _
  // Predicated region
  $region34: #{_lambda_.1} parent=0 // pred_check
    _
  $region35: #{_lambda_.1} parent=0 // pred_check_branch
    %47 = sbr.rel (0) target = $region37
  $region36: #{_lambda_.1} parent=0 // pred_region
    _
  $region37: #{_lambda_.1} parent=0 // pred_fallthru
    _
  // Predicated region
  $region38: #{_lambda_.1} parent=0 // pred_check
    _
  $region39: #{_lambda_.1} parent=0 // pred_check_branch
    %49 = sbr.rel (0) target = $region41
  $region40: #{_lambda_.1} parent=0 // pred_region
    _
  $region41: #{_lambda_.1} parent=0 // pred_fallthru
    _
  // Predicated region
  $region42: #{_lambda_.1} parent=0 // pred_check
    _
  $region43: #{_lambda_.1} parent=0 // pred_check_branch
    %51 = sbr.rel (0) target = $region45
  $region44: #{_lambda_.1} parent=0 // pred_region
    _
  $region45: #{_lambda_.1} parent=0 // pred_fallthru
    _
  // Predicated region
  $region46: #{_lambda_.1} parent=0 // pred_check
    _
  $region47: #{_lambda_.1} parent=0 // pred_check_branch
    %53 = sbr.rel (0) target = $region49
  $region48: #{_lambda_.1} parent=0 // pred_region
    _
  $region49: #{_lambda_.1} parent=0 // pred_fallthru
    _
  // Predicated region
  $region50: #{_lambda_.1} parent=0 // pred_check
    _
  $region51: #{_lambda_.1} parent=0 // pred_check_branch
    %55 = sbr.rel (0) target = $region53
  $region52: #{_lambda_.1} parent=0 // pred_region
    _
  $region53: #{_lambda_.1} parent=0 // pred_fallthru
    _
  // Predicated region
  $region54: #{_lambda_.1} parent=0 // pred_check
    _
  $region55: #{_lambda_.1} parent=0 // pred_check_branch
    %57 = sbr.rel (0) target = $region57
  $region56: #{_lambda_.1} parent=0 // pred_region
    _
  $region57: #{_lambda_.1} parent=0 // pred_fallthru
    _
  // Predicated region
  $region58: #{_lambda_.1} parent=0 // pred_check
    _
  $region59: #{_lambda_.1} parent=0 // pred_check_branch
    %59 = sbr.rel (0) target = $region61
  $region60: #{_lambda_.1} parent=0 // pred_region
    _
  $region61: #{_lambda_.1} parent=0 // pred_fallthru
    _
  // Predicated region
  $region62: #{_lambda_.1} parent=0 // pred_check
    _
  $region63: #{_lambda_.1} parent=0 // pred_check_branch
    %61 = sbr.rel (0) target = $region65
  $region64: #{_lambda_.1} parent=0 // pred_region
    _
  $region65: #{_lambda_.1} parent=0 // pred_fallthru
    _
  // Predicated region
  $region66: #{_lambda_.1} parent=0 // pred_check
    _
  $region67: #{_lambda_.1} parent=0 // pred_check_branch
    %63 = sbr.rel (0) target = $region69
  $region68: #{_lambda_.1} parent=0 // pred_region
    _
  $region69: #{_lambda_.1} parent=0 // pred_fallthru
    _
  // Predicated region
  $region70: #{_lambda_.1} parent=0 // pred_check
    _
  $region71: #{_lambda_.1} parent=0 // pred_check_branch
    %65 = sbr.rel (0) target = $region73
  $region72: #{_lambda_.1} parent=0 // pred_region
    _
  $region73: #{_lambda_.1} parent=0 // pred_fallthru
    _
  // Predicated region
  $region74: #{_lambda_.1} parent=0 // pred_check
    _
  $region75: #{_lambda_.1} parent=0 // pred_check_branch
    %67 = sbr.rel (0) target = $region77
  $region76: #{_lambda_.1} parent=0 // pred_region
    _
  $region77: #{_lambda_.1} parent=0 // pred_fallthru
    _
  // Predicated region
  $region78: #{_lambda_.1} parent=0 // pred_check
    _
  $region79: #{_lambda_.1} parent=0 // pred_check_branch
    %69 = sbr.rel (0) target = $region81
  $region80: #{_lambda_.1} parent=0 // pred_region
    _
  $region81: #{_lambda_.1} parent=0 // pred_fallthru
    _
  // Predicated region
  $region82: #{_lambda_.1} parent=0 // pred_check
    _
  $region83: #{_lambda_.1} parent=0 // pred_check_branch
    %71 = sbr.rel (0) target = $region85
  $region84: #{_lambda_.1} parent=0 // pred_region
    _
  $region85: #{_lambda_.1} parent=0 // pred_fallthru
    _
  // Predicated region
  $region86: #{_lambda_.1} parent=0 // pred_check
    _
  $region87: #{_lambda_.1} parent=0 // pred_check_branch
    %73 = sbr.rel (0) target = $region89
  $region88: #{_lambda_.1} parent=0 // pred_region
    _
  $region89: #{_lambda_.1} parent=0 // pred_fallthru
    _
  // Predicated region
  $region90: #{_lambda_.1} parent=0 // pred_check
    _
  $region91: #{_lambda_.1} parent=0 // pred_check_branch
    %75 = sbr.rel (0) target = $region93
  $region92: #{_lambda_.1} parent=0 // pred_region
    _
  $region93: #{_lambda_.1} parent=0 // pred_fallthru
    _
  %v77 = vld [vmem:[%s0] sm:$0xff]
  %v78 = vld [vmem:[%s0 + $0x8] sm:$0xff]
  %v79 = vld [vmem:[%s0 + $0x10] sm:$0xff]
  %v80 = vld [vmem:[%s0 + $0x18] sm:$0xff]
  %v81 = vld [vmem:[%s0 + $0x20] sm:$0xff]
  %v82 = vld [vmem:[%s0 + $0x28] sm:$0xff]
  %v83 = vld [vmem:[%s0 + $0x30] sm:$0xff]
  %v84 = vld [vmem:[%s0 + $0x38] sm:$0xff]
  %v85 = vld [vmem:[%s0 + $0x40] sm:$0xff]
  %v86 = vld [vmem:[%s0 + $0x48] sm:$0xf]
  %v87 = vld [vmem:[%s1] sm:$0xf]
  %v88 = vld [vmem:[%s1 + $0x4] sm:$0xf]
  %v89 = vld [vmem:[%s1 + $0x8] sm:$0xf]
  %v90 = vld [vmem:[%s1 + $0xc] sm:$0xf]
  %v91 = vld [vmem:[%s1 + $0x10] sm:$0xf]
  %v92 = vld [vmem:[%s1 + $0x14] sm:$0xf]
  %v93 = vld [vmem:[%s1 + $0x18] sm:$0x3]
  %v94 = vld [vmem:[%s2] sm:$0x1]
  %v96 = vlaneseq
  %v97 = vshrl.u32 %v96, 7
  %v98 = vsub.s32 0, %v97
  %v99 = vrot.slane %v94, %v98
  %v108 = vunpack.c.l.b16 %v87
  %v109 = vunpack.c.l.b16 %v88
  %v110 = vunpack.c.l.b16 %v89
  %v111 = vunpack.c.l.b16 %v90
  %v112 = vunpack.c.l.b16 %v91
  %v113 = vunpack.c.l.b16 %v92
  %v114 = vunpack.c.l.b16 %v93
  %v115 = vpack.c.b16 %v109, %v108
  %v116 = vpack.c.b16 %v111, %v110
  %v117 = vpack.c.b16 %v113, %v112
  %v118 = vpack.c.b16 %v114, %v114
  %vm122 = vcmask 424960
  %v124 = vsel %vm122, %v77, 0
  %v127 = vsel %vm122, %v78, 0
  %v130 = vsel %vm122, %v79, 0
  %v133 = vsel %vm122, %v80, 0
  %v136 = vsel %vm122, %v81, 0
  %v139 = vsel %vm122, %v82, 0
  %v142 = vsel %vm122, %v83, 0
  %v145 = vsel %vm122, %v84, 0
  %v148 = vsel %vm122, %v85, 0
  %v151 = vsel %vm122, %v86, 0
  %vm153 = vcmask 1041408
  %v155 = vsel %vm153, %v118, 0
  %157 = vmatprep.subr.bf16.mxu0 0
  %158 = vmatpush1.bf16.msra.mxu0 %v115
  %159 = vmatprep.subr.bf16.mxu0 0
  %160 = vmatpush1.bf16.msra.mxu0 %v116
  %161 = vmatprep.subr.bf16.mxu0 0
  %162 = vmatpush1.bf16.msra.mxu0 %v117
  %163 = vmatprep.subr.bf16.mxu0 0
  %164 = vmatpush1.bf16.msra.mxu0 %v155
  %165 = vmatprep.subr.bf16.mxu0 0
  %166 = vmatpush1.bf16.msra.mxu0 0
  %167 = vmatprep.subr.bf16.mxu0 0
  %168 = vmatpush1.bf16.msra.mxu0 0
  %169 = vmatprep.subr.bf16.mxu0 0
  %170 = vmatpush1.bf16.msra.mxu0 0
  %171 = vmatprep.subr.bf16.mxu0 0
  %172 = vmatpush1.bf16.msra.mxu0 0
  %173 = vmatprep.subr.bf16.mxu0 0
  %174 = vmatpush1.bf16.msra.mxu0 0
  %175 = vmatprep.subr.bf16.mxu0 0
  %176 = vmatpush1.bf16.msra.mxu0 0
  %177 = vmatprep.subr.bf16.mxu0 0
  %178 = vmatpush1.bf16.msra.mxu0 0
  %179 = vmatprep.subr.bf16.mxu0 0
  %180 = vmatpush1.bf16.msra.mxu0 0
  %181 = vmatprep.subr.bf16.mxu0 0
  %182 = vmatpush1.bf16.msra.mxu0 0
  %183 = vmatprep.subr.bf16.mxu0 0
  %184 = vmatpush1.bf16.msra.mxu0 0
  %185 = vmatprep.subr.bf16.mxu0 0
  %186 = vmatpush1.bf16.msra.mxu0 0
  %187 = vmatprep.subr.bf16.mxu0 0
  %188 = vmatpush1.bf16.msra.mxu0 0
  %189 = vmatprep.mubr.f32.mxu0 0.0
  %190 = vmatmul.mubr.f32.gmra.mrb[0].mxu0 %v124
  %v191 = vpop.f32.mrb[0].mxu0
  %v192 = vadd.f32 %v99, %v191
  %v193 = vpop.f32.mrb[0].mxu0
  %194 = vmatprep.mubr.f32.mxu0 0.0
  %195 = vmatmul.mubr.f32.gmra.mrb[0].mxu0 %v127
  %v196 = vpop.f32.mrb[0].mxu0
  %v197 = vadd.f32 %v99, %v196
  %v198 = vpop.f32.mrb[0].mxu0
  %199 = vmatprep.mubr.f32.mxu0 0.0
  %200 = vmatmul.mubr.f32.gmra.mrb[0].mxu0 %v130
  %v201 = vpop.f32.mrb[0].mxu0
  %v202 = vadd.f32 %v99, %v201
  %v203 = vpop.f32.mrb[0].mxu0
  %204 = vmatprep.mubr.f32.mxu0 0.0
  %205 = vmatmul.mubr.f32.gmra.mrb[0].mxu0 %v133
  %v206 = vpop.f32.mrb[0].mxu0
  %v207 = vadd.f32 %v99, %v206
  %v208 = vpop.f32.mrb[0].mxu0
  %209 = vmatprep.mubr.f32.mxu0 0.0
  %210 = vmatmul.mubr.f32.gmra.mrb[0].mxu0 %v136
  %v211 = vpop.f32.mrb[0].mxu0
  %v212 = vadd.f32 %v99, %v211
  %v213 = vpop.f32.mrb[0].mxu0
  %214 = vmatprep.mubr.f32.mxu0 0.0
  %215 = vmatmul.mubr.f32.gmra.mrb[0].mxu0 %v139
  %v216 = vpop.f32.mrb[0].mxu0
  %v217 = vadd.f32 %v99, %v216
  %v218 = vpop.f32.mrb[0].mxu0
  %219 = vmatprep.mubr.f32.mxu0 0.0
  %220 = vmatmul.mubr.f32.gmra.mrb[0].mxu0 %v142
  %v221 = vpop.f32.mrb[0].mxu0
  %v222 = vadd.f32 %v99, %v221
  %v223 = vpop.f32.mrb[0].mxu0
  %224 = vmatprep.mubr.f32.mxu0 0.0
  %225 = vmatmul.mubr.f32.gmra.mrb[0].mxu0 %v145
  %v226 = vpop.f32.mrb[0].mxu0
  %v227 = vadd.f32 %v99, %v226
  %v228 = vpop.f32.mrb[0].mxu0
  %229 = vmatprep.mubr.f32.mxu0 0.0
  %230 = vmatmul.mubr.f32.gmra.mrb[0].mxu0 %v148
  %v231 = vpop.f32.mrb[0].mxu0
  %v232 = vadd.f32 %v99, %v231
  %v233 = vpop.f32.mrb[0].mxu0
  %234 = vmatprep.mubr.f32.mxu0 0.0
  %235 = vmatmul.mubr.f32.gmra.mrb[0].mxu0 %v151
  %v236 = vpop.f32.mrb[0].mxu0
  %v237 = vadd.f32 %v99, %v236
  %v238 = vpop.f32.mrb[0].mxu0
  %239 = vdwg.mxu0
  %v240 = vmax.f32 %v192, 0.0
  %v241 = vmax.f32 %v197, 0.0
  %v242 = vmax.f32 %v202, 0.0
  %v243 = vmax.f32 %v207, 0.0
  %v244 = vmax.f32 %v212, 0.0
  %v245 = vmax.f32 %v217, 0.0
  %v246 = vmax.f32 %v222, 0.0
  %v247 = vmax.f32 %v227, 0.0
  %v248 = vmax.f32 %v232, 0.0
  %v249 = vmax.f32 %v237, 0.0
  %v250 = vld [vmem:[%s3] sm:$0xf]
  %v251 = vld [vmem:[%s3 + $0x4] sm:$0xf]
  %v252 = vld [vmem:[%s3 + $0x8] sm:$0xf]
  %v253 = vld [vmem:[%s3 + $0xc] sm:$0xf]
  %v254 = vld [vmem:[%s3 + $0x10] sm:$0xf]
  %v255 = vld [vmem:[%s3 + $0x14] sm:$0xf]
  %v256 = vld [vmem:[%s3 + $0x18] sm:$0x3]
  %v257 = vld [vmem:[%s4] sm:$0x1]
  %v259 = vlaneseq
  %v260 = vshrl.u32 %v259, 7
  %v261 = vsub.s32 0, %v260
  %v262 = vrot.slane %v257, %v261
  %v271 = vunpack.c.l.b16 %v250
  %v272 = vunpack.c.l.b16 %v251
  %v273 = vunpack.c.l.b16 %v252
  %v274 = vunpack.c.l.b16 %v253
  %v275 = vunpack.c.l.b16 %v254
  %v276 = vunpack.c.l.b16 %v255
  %v277 = vunpack.c.l.b16 %v256
  %v278 = vpack.c.b16 %v272, %v271
  %v279 = vpack.c.b16 %v274, %v273
  %v280 = vpack.c.b16 %v276, %v275
  %v281 = vpack.c.b16 %v277, %v277
  %v286 = vsel %vm122, %v240, 0
  %v289 = vsel %vm122, %v241, 0
  %v292 = vsel %vm122, %v242, 0
  %v295 = vsel %vm122, %v243, 0
  %v298 = vsel %vm122, %v244, 0
  %v301 = vsel %vm122, %v245, 0
  %v304 = vsel %vm122, %v246, 0
  %v307 = vsel %vm122, %v247, 0
  %v310 = vsel %vm122, %v248, 0
  %v313 = vsel %vm122, %v249, 0
  %v316 = vsel %vm153, %v281, 0
  %318 = vmatprep.subr.bf16.mxu0 0
  %319 = vmatpush1.bf16.msra.mxu0 %v278
  %320 = vmatprep.subr.bf16.mxu0 0
  %321 = vmatpush1.bf16.msra.mxu0 %v279
  %322 = vmatprep.subr.bf16.mxu0 0
  %323 = vmatpush1.bf16.msra.mxu0 %v280
  %324 = vmatprep.subr.bf16.mxu0 0
  %325 = vmatpush1.bf16.msra.mxu0 %v316
  %326 = vmatprep.subr.bf16.mxu0 0
  %327 = vmatpush1.bf16.msra.mxu0 0
  %328 = vmatprep.subr.bf16.mxu0 0
  %329 = vmatpush1.bf16.msra.mxu0 0
  %330 = vmatprep.subr.bf16.mxu0 0
  %331 = vmatpush1.bf16.msra.mxu0 0
  %332 = vmatprep.subr.bf16.mxu0 0
  %333 = vmatpush1.bf16.msra.mxu0 0
  %334 = vmatprep.subr.bf16.mxu0 0
  %335 = vmatpush1.bf16.msra.mxu0 0
  %336 = vmatprep.subr.bf16.mxu0 0
  %337 = vmatpush1.bf16.msra.mxu0 0
  %338 = vmatprep.subr.bf16.mxu0 0
  %339 = vmatpush1.bf16.msra.mxu0 0
  %340 = vmatprep.subr.bf16.mxu0 0
  %341 = vmatpush1.bf16.msra.mxu0 0
  %342 = vmatprep.subr.bf16.mxu0 0
  %343 = vmatpush1.bf16.msra.mxu0 0
  %344 = vmatprep.subr.bf16.mxu0 0
  %345 = vmatpush1.bf16.msra.mxu0 0
  %346 = vmatprep.subr.bf16.mxu0 0
  %347 = vmatpush1.bf16.msra.mxu0 0
  %348 = vmatprep.subr.bf16.mxu0 0
  %349 = vmatpush1.bf16.msra.mxu0 0
  %350 = vmatprep.mubr.f32.mxu0 0.0
  %351 = vmatmul.mubr.f32.gmra.mrb[0].mxu0 %v286
  %v352 = vpop.f32.mrb[0].mxu0
  %v353 = vadd.f32 %v262, %v352
  %v354 = vpop.f32.mrb[0].mxu0
  %355 = vmatprep.mubr.f32.mxu0 0.0
  %356 = vmatmul.mubr.f32.gmra.mrb[0].mxu0 %v289
  %v357 = vpop.f32.mrb[0].mxu0
  %v358 = vadd.f32 %v262, %v357
  %v359 = vpop.f32.mrb[0].mxu0
  %360 = vmatprep.mubr.f32.mxu0 0.0
  %361 = vmatmul.mubr.f32.gmra.mrb[0].mxu0 %v292
  %v362 = vpop.f32.mrb[0].mxu0
  %v363 = vadd.f32 %v262, %v362
  %v364 = vpop.f32.mrb[0].mxu0
  %365 = vmatprep.mubr.f32.mxu0 0.0
  %366 = vmatmul.mubr.f32.gmra.mrb[0].mxu0 %v295
  %v367 = vpop.f32.mrb[0].mxu0
  %v368 = vadd.f32 %v262, %v367
  %v369 = vpop.f32.mrb[0].mxu0
  %370 = vmatprep.mubr.f32.mxu0 0.0
  %371 = vmatmul.mubr.f32.gmra.mrb[0].mxu0 %v298
  %v372 = vpop.f32.mrb[0].mxu0
  %v373 = vadd.f32 %v262, %v372
  %v374 = vpop.f32.mrb[0].mxu0
  %375 = vmatprep.mubr.f32.mxu0 0.0
  %376 = vmatmul.mubr.f32.gmra.mrb[0].mxu0 %v301
  %v377 = vpop.f32.mrb[0].mxu0
  %v378 = vadd.f32 %v262, %v377
  %v379 = vpop.f32.mrb[0].mxu0
  %380 = vmatprep.mubr.f32.mxu0 0.0
  %381 = vmatmul.mubr.f32.gmra.mrb[0].mxu0 %v304
  %v382 = vpop.f32.mrb[0].mxu0
  %v383 = vadd.f32 %v262, %v382
  %v384 = vpop.f32.mrb[0].mxu0
  %385 = vmatprep.mubr.f32.mxu0 0.0
  %386 = vmatmul.mubr.f32.gmra.mrb[0].mxu0 %v307
  %v387 = vpop.f32.mrb[0].mxu0
  %v388 = vadd.f32 %v262, %v387
  %v389 = vpop.f32.mrb[0].mxu0
  %390 = vmatprep.mubr.f32.mxu0 0.0
  %391 = vmatmul.mubr.f32.gmra.mrb[0].mxu0 %v310
  %v392 = vpop.f32.mrb[0].mxu0
  %v393 = vadd.f32 %v262, %v392
  %v394 = vpop.f32.mrb[0].mxu0
  %395 = vmatprep.mubr.f32.mxu0 0.0
  %396 = vmatmul.mubr.f32.gmra.mrb[0].mxu0 %v313
  %v397 = vpop.f32.mrb[0].mxu0
  %v398 = vadd.f32 %v262, %v397
  %v399 = vpop.f32.mrb[0].mxu0
  %400 = vdwg.mxu0
  %v401 = vmax.f32 %v353, 0.0
  %v402 = vmax.f32 %v358, 0.0
  %v403 = vmax.f32 %v363, 0.0
  %v404 = vmax.f32 %v368, 0.0
  %v405 = vmax.f32 %v373, 0.0
  %v406 = vmax.f32 %v378, 0.0
  %v407 = vmax.f32 %v383, 0.0
  %v408 = vmax.f32 %v388, 0.0
  %v409 = vmax.f32 %v393, 0.0
  %v410 = vmax.f32 %v398, 0.0
  %v411 = vld [vmem:[%s7] sm:$0x1]
  %v412 = vld [vmem:[%s5] sm:$0xf]
  %v413 = vld [vmem:[%s5 + $0x4] sm:$0xf]
  %vm417 = vcmask 1043456
  %v418 = vrot.slane %v402, 4
  %v419 = vrot.slane %v403, 4
  %v420 = vsel %vm417, %v418, %v419
  %v421 = vrot.slane %v404, 4
  %v422 = vsel %vm417, %v419, %v421
  %v425 = vunpack.c.l.b16 %v412
  %v426 = vunpack.c.l.b16 %v413
  %v427 = vpack.c.b16 %v426, %v425
  %vm429 = vcmask 130048
  %v430 = vsel %vm429, %v420, 0
  %v432 = vsel %vm429, %v422, 0
  %434 = vmatprep.subr.bf16.mxu0 0
  %435 = vmatpush1.bf16.msra.mxu0 %v427
  %436 = vmatprep.subr.bf16.mxu0 0
  %437 = vmatpush1.bf16.msra.mxu0 0
  %438 = vmatprep.subr.bf16.mxu0 0
  %439 = vmatpush1.bf16.msra.mxu0 0
  %440 = vmatprep.subr.bf16.mxu0 0
  %441 = vmatpush1.bf16.msra.mxu0 0
  %442 = vmatprep.subr.bf16.mxu0 0
  %443 = vmatpush1.bf16.msra.mxu0 0
  %444 = vmatprep.subr.bf16.mxu0 0
  %445 = vmatpush1.bf16.msra.mxu0 0
  %446 = vmatprep.subr.bf16.mxu0 0
  %447 = vmatpush1.bf16.msra.mxu0 0
  %448 = vmatprep.subr.bf16.mxu0 0
  %449 = vmatpush1.bf16.msra.mxu0 0
  %450 = vmatprep.subr.bf16.mxu0 0
  %451 = vmatpush1.bf16.msra.mxu0 0
  %452 = vmatprep.subr.bf16.mxu0 0
  %453 = vmatpush1.bf16.msra.mxu0 0
  %454 = vmatprep.subr.bf16.mxu0 0
  %455 = vmatpush1.bf16.msra.mxu0 0
  %456 = vmatprep.subr.bf16.mxu0 0
  %457 = vmatpush1.bf16.msra.mxu0 0
  %458 = vmatprep.subr.bf16.mxu0 0
  %459 = vmatpush1.bf16.msra.mxu0 0
  %460 = vmatprep.subr.bf16.mxu0 0
  %461 = vmatpush1.bf16.msra.mxu0 0
  %462 = vmatprep.subr.bf16.mxu0 0
  %463 = vmatpush1.bf16.msra.mxu0 0
  %464 = vmatprep.subr.bf16.mxu0 0
  %465 = vmatpush1.bf16.msra.mxu0 0
  %466 = vmatprep.mubr.f32.mxu0 0.0
  %467 = vmatmul.mubr.f32.gmra.mrb[0].mxu0 %v430
  %v468 = vpop.f32.mrb[0].mxu0
  %v469 = vadd.f32 0.0, %v468
  %v470 = vpop.f32.mrb[0].mxu0
  %471 = vmatprep.mubr.f32.mxu0 0.0
  %472 = vmatmul.mubr.f32.gmra.mrb[0].mxu0 %v432
  %v473 = vpop.f32.mrb[0].mxu0
  %v474 = vadd.f32 0.0, %v473
  %v475 = vpop.f32.mrb[0].mxu0
  %476 = vdwg.mxu0
  %v478 = vlaneseq
  %v479 = vshrl.u32 %v478, 7
  %v480 = vsub.s32 0, %v479
  %v481 = vrot.slane %v411, %v480
  %v483 = vadd.f32 %v481, %v469
  %v484 = vadd.f32 %v481, %v474
  %v485 = vld [vmem:[%s5 + $0x8] sm:$0xf]
  %v486 = vld [vmem:[%s5 + $0xc] sm:$0xf]
  %v489 = vrot.slane %v405, 4
  %v490 = vsel %vm417, %v421, %v489
  %v491 = vrot.slane %v406, 4
  %v492 = vsel %vm417, %v489, %v491
  %v495 = vunpack.c.l.b16 %v485
  %v496 = vunpack.c.l.b16 %v486
  %v497 = vpack.c.b16 %v496, %v495
  %v499 = vsel %vm429, %v490, 0
  %v501 = vsel %vm429, %v492, 0
  %503 = vmatprep.subr.bf16.mxu0 0
  %504 = vmatpush1.bf16.msra.mxu0 %v497
  %505 = vmatprep.subr.bf16.mxu0 0
  %506 = vmatpush1.bf16.msra.mxu0 0
  %507 = vmatprep.subr.bf16.mxu0 0
  %508 = vmatpush1.bf16.msra.mxu0 0
  %509 = vmatprep.subr.bf16.mxu0 0
  %510 = vmatpush1.bf16.msra.mxu0 0
  %511 = vmatprep.subr.bf16.mxu0 0
  %512 = vmatpush1.bf16.msra.mxu0 0
  %513 = vmatprep.subr.bf16.mxu0 0
  %514 = vmatpush1.bf16.msra.mxu0 0
  %515 = vmatprep.subr.bf16.mxu0 0
  %516 = vmatpush1.bf16.msra.mxu0 0
  %517 = vmatprep.subr.bf16.mxu0 0
  %518 = vmatpush1.bf16.msra.mxu0 0
  %519 = vmatprep.subr.bf16.mxu0 0
  %520 = vmatpush1.bf16.msra.mxu0 0
  %521 = vmatprep.subr.bf16.mxu0 0
  %522 = vmatpush1.bf16.msra.mxu0 0
  %523 = vmatprep.subr.bf16.mxu0 0
  %524 = vmatpush1.bf16.msra.mxu0 0
  %525 = vmatprep.subr.bf16.mxu0 0
  %526 = vmatpush1.bf16.msra.mxu0 0
  %527 = vmatprep.subr.bf16.mxu0 0
  %528 = vmatpush1.bf16.msra.mxu0 0
  %529 = vmatprep.subr.bf16.mxu0 0
  %530 = vmatpush1.bf16.msra.mxu0 0
  %531 = vmatprep.subr.bf16.mxu0 0
  %532 = vmatpush1.bf16.msra.mxu0 0
  %533 = vmatprep.subr.bf16.mxu0 0
  %534 = vmatpush1.bf16.msra.mxu0 0
  %535 = vmatprep.mubr.f32.mxu0 0.0
  %536 = vmatmul.mubr.f32.gmra.mrb[0].mxu0 %v499
  %v537 = vpop.f32.mrb[0].mxu0
  %v538 = vadd.f32 0.0, %v537
  %v539 = vpop.f32.mrb[0].mxu0
  %540 = vmatprep.mubr.f32.mxu0 0.0
  %541 = vmatmul.mubr.f32.gmra.mrb[0].mxu0 %v501
  %v542 = vpop.f32.mrb[0].mxu0
  %v543 = vadd.f32 0.0, %v542
  %v544 = vpop.f32.mrb[0].mxu0
  %545 = vdwg.mxu0
  %v546 = vadd.f32 %v483, %v538
  %v547 = vadd.f32 %v484, %v543
  %v548 = vld [vmem:[%s5 + $0x10] sm:$0xf]
  %v549 = vld [vmem:[%s5 + $0x14] sm:$0xf]
  %v552 = vrot.slane %v407, 4
  %v553 = vsel %vm417, %v491, %v552
  %v554 = vrot.slane %v408, 4
  %v555 = vsel %vm417, %v552, %v554
  %v558 = vunpack.c.l.b16 %v548
  %v559 = vunpack.c.l.b16 %v549
  %v560 = vpack.c.b16 %v559, %v558
  %v562 = vsel %vm429, %v553, 0
  %v564 = vsel %vm429, %v555, 0
  %566 = vmatprep.subr.bf16.mxu0 0
  %567 = vmatpush1.bf16.msra.mxu0 %v560
  %568 = vmatprep.subr.bf16.mxu0 0
  %569 = vmatpush1.bf16.msra.mxu0 0
  %570 = vmatprep.subr.bf16.mxu0 0
  %571 = vmatpush1.bf16.msra.mxu0 0
  %572 = vmatprep.subr.bf16.mxu0 0
  %573 = vmatpush1.bf16.msra.mxu0 0
  %574 = vmatprep.subr.bf16.mxu0 0
  %575 = vmatpush1.bf16.msra.mxu0 0
  %576 = vmatprep.subr.bf16.mxu0 0
  %577 = vmatpush1.bf16.msra.mxu0 0
  %578 = vmatprep.subr.bf16.mxu0 0
  %579 = vmatpush1.bf16.msra.mxu0 0
  %580 = vmatprep.subr.bf16.mxu0 0
  %581 = vmatpush1.bf16.msra.mxu0 0
  %582 = vmatprep.subr.bf16.mxu0 0
  %583 = vmatpush1.bf16.msra.mxu0 0
  %584 = vmatprep.subr.bf16.mxu0 0
  %585 = vmatpush1.bf16.msra.mxu0 0
  %586 = vmatprep.subr.bf16.mxu0 0
  %587 = vmatpush1.bf16.msra.mxu0 0
  %588 = vmatprep.subr.bf16.mxu0 0
  %589 = vmatpush1.bf16.msra.mxu0 0
  %590 = vmatprep.subr.bf16.mxu0 0
  %591 = vmatpush1.bf16.msra.mxu0 0
  %592 = vmatprep.subr.bf16.mxu0 0
  %593 = vmatpush1.bf16.msra.mxu0 0
  %594 = vmatprep.subr.bf16.mxu0 0
  %595 = vmatpush1.bf16.msra.mxu0 0
  %596 = vmatprep.subr.bf16.mxu0 0
  %597 = vmatpush1.bf16.msra.mxu0 0
  %598 = vmatprep.mubr.f32.mxu0 0.0
  %599 = vmatmul.mubr.f32.gmra.mrb[0].mxu0 %v562
  %v600 = vpop.f32.mrb[0].mxu0
  %v601 = vadd.f32 0.0, %v600
  %v602 = vpop.f32.mrb[0].mxu0
  %603 = vmatprep.mubr.f32.mxu0 0.0
  %604 = vmatmul.mubr.f32.gmra.mrb[0].mxu0 %v564
  %v605 = vpop.f32.mrb[0].mxu0
  %v606 = vadd.f32 0.0, %v605
  %v607 = vpop.f32.mrb[0].mxu0
  %608 = vdwg.mxu0
  %v609 = vadd.f32 %v546, %v601
  %v610 = vadd.f32 %v547, %v606
  %v611 = vld [vmem:[%s5 + $0x18] sm:$0xf]
  %v612 = vld [vmem:[%s5 + $0x1c] sm:$0xf]
  %v615 = vrot.slane %v409, 4
  %v616 = vsel %vm417, %v554, %v615
  %v617 = vrot.slane %v410, 4
  %v618 = vsel %vm417, %v615, %v617
  %v621 = vunpack.c.l.b16 %v611
  %v622 = vunpack.c.l.b16 %v612
  %v623 = vpack.c.b16 %v622, %v621
  %v625 = vsel %vm429, %v616, 0
  %v627 = vsel %vm429, %v618, 0
  %629 = vmatprep.subr.bf16.mxu0 0
  %630 = vmatpush1.bf16.msra.mxu0 %v623
  %631 = vmatprep.subr.bf16.mxu0 0
  %632 = vmatpush1.bf16.msra.mxu0 0
  %633 = vmatprep.subr.bf16.mxu0 0
  %634 = vmatpush1.bf16.msra.mxu0 0
  %635 = vmatprep.subr.bf16.mxu0 0
  %636 = vmatpush1.bf16.msra.mxu0 0
  %637 = vmatprep.subr.bf16.mxu0 0
  %638 = vmatpush1.bf16.msra.mxu0 0
  %639 = vmatprep.subr.bf16.mxu0 0
  %640 = vmatpush1.bf16.msra.mxu0 0
  %641 = vmatprep.subr.bf16.mxu0 0
  %642 = vmatpush1.bf16.msra.mxu0 0
  %643 = vmatprep.subr.bf16.mxu0 0
  %644 = vmatpush1.bf16.msra.mxu0 0
  %645 = vmatprep.subr.bf16.mxu0 0
  %646 = vmatpush1.bf16.msra.mxu0 0
  %647 = vmatprep.subr.bf16.mxu0 0
  %648 = vmatpush1.bf16.msra.mxu0 0
  %649 = vmatprep.subr.bf16.mxu0 0
  %650 = vmatpush1.bf16.msra.mxu0 0
  %651 = vmatprep.subr.bf16.mxu0 0
  %652 = vmatpush1.bf16.msra.mxu0 0
  %653 = vmatprep.subr.bf16.mxu0 0
  %654 = vmatpush1.bf16.msra.mxu0 0
  %655 = vmatprep.subr.bf16.mxu0 0
  %656 = vmatpush1.bf16.msra.mxu0 0
  %657 = vmatprep.subr.bf16.mxu0 0
  %658 = vmatpush1.bf16.msra.mxu0 0
  %659 = vmatprep.subr.bf16.mxu0 0
  %660 = vmatpush1.bf16.msra.mxu0 0
  %661 = vmatprep.mubr.f32.mxu0 0.0
  %662 = vmatmul.mubr.f32.gmra.mrb[0].mxu0 %v625
  %v663 = vpop.f32.mrb[0].mxu0
  %v664 = vadd.f32 0.0, %v663
  %v665 = vpop.f32.mrb[0].mxu0
  %666 = vmatprep.mubr.f32.mxu0 0.0
  %667 = vmatmul.mubr.f32.gmra.mrb[0].mxu0 %v627
  %v668 = vpop.f32.mrb[0].mxu0
  %v669 = vadd.f32 0.0, %v668
  %v670 = vpop.f32.mrb[0].mxu0
  %671 = vdwg.mxu0
  %v672 = vadd.f32 %v609, %v664
  %v673 = vadd.f32 %v610, %v669
  %v674 = vld [vmem:[%s6] sm:$0xf]
  %v675 = vld [vmem:[%s6 + $0x4] sm:$0xf]
  %v676 = vld [vmem:[%s6 + $0x8] sm:$0xf]
  %v677 = vld [vmem:[%s6 + $0xc] sm:$0xf]
  %v678 = vunpack.c.l.bf16 %v674
  %v679 = vunpack.c.l.bf16 %v675
  %v680 = vunpack.c.l.bf16 %v676
  %v681 = vunpack.c.l.bf16 %v677
  %v682 = vlaneseq
  %v683 = vand.u32 %v682, 127
  %vm684 = vcmp.ge.s32.totalorder %v683, 64
  %vm685 = vcmp.lt.s32.totalorder %v683, 96
  %vm686 = vmand %vm684, %vm685
  %v687 = vsel %vm686, 1.0, 0.5
  %vm688 = vcmask 261120
  %v690 = vsel %vm688, 0.0, 0
  %692 = vmatprep.subr.mxu0 0.0
  %693 = vmatpush1.msra.mxu0 %v678
  %694 = vmatprep.subr.mxu0 0.0
  %695 = vmatpush1.msra.mxu0 %v679
  %696 = vmatprep.subr.mxu0 0.0
  %697 = vmatpush1.msra.mxu0 %v680
  %698 = vmatprep.subr.mxu0 0.0
  %699 = vmatpush1.msra.mxu0 %v681
  %700 = vmatprep.subr.mxu0 0.0
  %701 = vmatpush1.msra.mxu0 0.0
  %702 = vmatprep.subr.mxu0 0.0
  %703 = vmatpush1.msra.mxu0 0.0
  %704 = vmatprep.subr.mxu0 0.0
  %705 = vmatpush1.msra.mxu0 0.0
  %706 = vmatprep.subr.mxu0 0.0
  %707 = vmatpush1.msra.mxu0 0.0
  %708 = vmatprep.subr.mxu0 0.0
  %709 = vmatpush1.msra.mxu0 0.0
  %710 = vmatprep.subr.mxu0 0.0
  %711 = vmatpush1.msra.mxu0 0.0
  %712 = vmatprep.subr.mxu0 0.0
  %713 = vmatpush1.msra.mxu0 0.0
  %714 = vmatprep.subr.mxu0 0.0
  %715 = vmatpush1.msra.mxu0 0.0
  %716 = vmatprep.subr.mxu0 0.0
  %717 = vmatpush1.msra.mxu0 0.0
  %718 = vmatprep.subr.mxu0 0.0
  %719 = vmatpush1.msra.mxu0 0.0
  %720 = vmatprep.subr.mxu0 0.0
  %721 = vmatpush1.msra.mxu0 0.0
  %722 = vmatprep.subr.mxu0 0.0
  %723 = vmatpush1.msra.mxu0 0.0
  %724 = vmatprep.subr.mxu0 0.0
  %725 = vmatpush1.msra.mxu0 0.0
  %726 = vmatprep.subr.mxu0 0.0
  %727 = vmatpush1.msra.mxu0 0.0
  %728 = vmatprep.subr.mxu0 0.0
  %729 = vmatpush1.msra.mxu0 0.0
  %730 = vmatprep.subr.mxu0 0.0
  %731 = vmatpush1.msra.mxu0 0.0
  %732 = vmatprep.subr.mxu0 0.0
  %733 = vmatpush1.msra.mxu0 0.0
  %734 = vmatprep.subr.mxu0 0.0
  %735 = vmatpush1.msra.mxu0 0.0
  %736 = vmatprep.subr.mxu0 0.0
  %737 = vmatpush1.msra.mxu0 0.0
  %738 = vmatprep.subr.mxu0 0.0
  %739 = vmatpush1.msra.mxu0 0.0
  %740 = vmatprep.subr.mxu0 0.0
  %741 = vmatpush1.msra.mxu0 0.0
  %742 = vmatprep.subr.mxu0 0.0
  %743 = vmatpush1.msra.mxu0 0.0
  %744 = vmatprep.subr.mxu0 0.0
  %745 = vmatpush1.msra.mxu0 0.0
  %746 = vmatprep.subr.mxu0 0.0
  %747 = vmatpush1.msra.mxu0 0.0
  %748 = vmatprep.subr.mxu0 0.0
  %749 = vmatpush1.msra.mxu0 0.0
  %750 = vmatprep.subr.mxu0 0.0
  %751 = vmatpush1.msra.mxu0 0.0
  %752 = vmatprep.subr.mxu0 0.0
  %753 = vmatpush1.msra.mxu0 0.0
  %754 = vmatprep.subr.mxu0 0.0
  %755 = vmatpush1.msra.mxu0 0.0
  %756 = vmatprep.mubr.f32.mxu0 0.0
  %757 = vmatmul.mubr.f32.gmra.mrb[0].mxu0 %v690
  %v758 = vpop.f32.mrb[0].mxu0
  %v759 = vadd.f32 0.0, %v758
  %v760 = vpop.f32.mrb[0].mxu0
  %761 = vdwg.mxu0
  %v762 = vadd.f32 %v672, %v759
  %v763 = vmul.f32 %v762, %v687
  %v764 = vtanh.pop %v763
  %v765 = vmul.f32 %v764, 0.5
  %v766 = vadd.f32 %v765, 0.5
  %v767 = vsel %vm686, %v764, %v766
  %v768 = vmul.f32 %v767, 0.0
  %770 = vrot.lane.b32.xlu0 %v767, 64
  %v771 = vpop.permute.xlu0 %770
  %v773 = vmul.f32 %v767, %v771
  %775 = vrot.lane.b32.xlu0 %v773, 32
  %v776 = vpop.permute.xlu0 %775
  %v778 = vadd.f32 %v768, %v776
  %v779 = vtanh.pop %v778
  %781 = vrot.lane.b32.xlu0 %v779, 64
  %v782 = vpop.permute.xlu0 %781
  %v784 = vmul.f32 %v767, %v782
  %786 = vrot.lane.b32.xlu0 %v784, 32
  %v787 = vpop.permute.xlu0 %786
  %v788 = vsel %vm688, %v787, 0
  %790 = vmatprep.subr.mxu0 0.0
  %791 = vmatpush1.msra.mxu0 %v678
  %792 = vmatprep.subr.mxu0 0.0
  %793 = vmatpush1.msra.mxu0 %v679
  %794 = vmatprep.subr.mxu0 0.0
  %795 = vmatpush1.msra.mxu0 %v680
  %796 = vmatprep.subr.mxu0 0.0
  %797 = vmatpush1.msra.mxu0 %v681
  %798 = vmatprep.subr.mxu0 0.0
  %799 = vmatpush1.msra.mxu0 0.0
  %800 = vmatprep.subr.mxu0 0.0
  %801 = vmatpush1.msra.mxu0 0.0
  %802 = vmatprep.subr.mxu0 0.0
  %803 = vmatpush1.msra.mxu0 0.0
  %804 = vmatprep.subr.mxu0 0.0
  %805 = vmatpush1.msra.mxu0 0.0
  %806 = vmatprep.subr.mxu0 0.0
  %807 = vmatpush1.msra.mxu0 0.0
  %808 = vmatprep.subr.mxu0 0.0
  %809 = vmatpush1.msra.mxu0 0.0
  %810 = vmatprep.subr.mxu0 0.0
  %811 = vmatpush1.msra.mxu0 0.0
  %812 = vmatprep.subr.mxu0 0.0
  %813 = vmatpush1.msra.mxu0 0.0
  %814 = vmatprep.subr.mxu0 0.0
  %815 = vmatpush1.msra.mxu0 0.0
  %816 = vmatprep.subr.mxu0 0.0
  %817 = vmatpush1.msra.mxu0 0.0
  %818 = vmatprep.subr.mxu0 0.0
  %819 = vmatpush1.msra.mxu0 0.0
  %820 = vmatprep.subr.mxu0 0.0
  %821 = vmatpush1.msra.mxu0 0.0
  %822 = vmatprep.subr.mxu0 0.0
  %823 = vmatpush1.msra.mxu0 0.0
  %824 = vmatprep.subr.mxu0 0.0
  %825 = vmatpush1.msra.mxu0 0.0
  %826 = vmatprep.subr.mxu0 0.0
  %827 = vmatpush1.msra.mxu0 0.0
  %828 = vmatprep.subr.mxu0 0.0
  %829 = vmatpush1.msra.mxu0 0.0
  %830 = vmatprep.subr.mxu0 0.0
  %831 = vmatpush1.msra.mxu0 0.0
  %832 = vmatprep.subr.mxu0 0.0
  %833 = vmatpush1.msra.mxu0 0.0
  %834 = vmatprep.subr.mxu0 0.0
  %835 = vmatpush1.msra.mxu0 0.0
  %836 = vmatprep.subr.mxu0 0.0
  %837 = vmatpush1.msra.mxu0 0.0
  %838 = vmatprep.subr.mxu0 0.0
  %839 = vmatpush1.msra.mxu0 0.0
  %840 = vmatprep.subr.mxu0 0.0
  %841 = vmatpush1.msra.mxu0 0.0
  %842 = vmatprep.subr.mxu0 0.0
  %843 = vmatpush1.msra.mxu0 0.0
  %844 = vmatprep.subr.mxu0 0.0
  %845 = vmatpush1.msra.mxu0 0.0
  %846 = vmatprep.subr.mxu0 0.0
  %847 = vmatpush1.msra.mxu0 0.0
  %848 = vmatprep.subr.mxu0 0.0
  %849 = vmatpush1.msra.mxu0 0.0
  %850 = vmatprep.subr.mxu0 0.0
  %851 = vmatpush1.msra.mxu0 0.0
  %852 = vmatprep.subr.mxu0 0.0
  %853 = vmatpush1.msra.mxu0 0.0
  %854 = vmatprep.mubr.f32.mxu0 0.0
  %855 = vmatmul.mubr.f32.gmra.mrb[0].mxu0 %v788
  %v856 = vpop.f32.mrb[0].mxu0
  %v857 = vadd.f32 0.0, %v856
  %v858 = vpop.f32.mrb[0].mxu0
  %859 = vdwg.mxu0
  %v861 = vrot.slane %v857, 6
  %v863 = vadd.f32 %v672, %v861
  %v864 = vmul.f32 %v863, %v687
  %v865 = vtanh.pop %v864
  %v866 = vmul.f32 %v865, 0.5
  %v867 = vadd.f32 %v866, 0.5
  %v868 = vsel %vm686, %v865, %v867
  %v870 = vrot.slane %v778, 6
  %v872 = vmul.f32 %v868, %v870
  %874 = vrot.lane.b32.xlu0 %v868, 64
  %v875 = vpop.permute.xlu0 %874
  %v877 = vmul.f32 %v868, %v875
  %879 = vrot.lane.b32.xlu0 %v877, 32
  %v880 = vpop.permute.xlu0 %879
  %v882 = vadd.f32 %v872, %v880
  %v883 = vtanh.pop %v882
  %885 = vrot.lane.b32.xlu0 %v883, 64
  %v886 = vpop.permute.xlu0 %885
  %v888 = vmul.f32 %v868, %v886
  %v890 = vrot.slane %v888, 2
  %891 = vrot.lane.b32.xlu0 %v890, 32
  %v892 = vpop.permute.xlu0 %891
  %v893 = vsel %vm688, %v892, 0
  %895 = vmatprep.subr.mxu0 0.0
  %896 = vmatpush1.msra.mxu0 %v678
  %897 = vmatprep.subr.mxu0 0.0
  %898 = vmatpush1.msra.mxu0 %v679
  %899 = vmatprep.subr.mxu0 0.0
  %900 = vmatpush1.msra.mxu0 %v680
  %901 = vmatprep.subr.mxu0 0.0
  %902 = vmatpush1.msra.mxu0 %v681
  %903 = vmatprep.subr.mxu0 0.0
  %904 = vmatpush1.msra.mxu0 0.0
  %905 = vmatprep.subr.mxu0 0.0
  %906 = vmatpush1.msra.mxu0 0.0
  %907 = vmatprep.subr.mxu0 0.0
  %908 = vmatpush1.msra.mxu0 0.0
  %909 = vmatprep.subr.mxu0 0.0
  %910 = vmatpush1.msra.mxu0 0.0
  %911 = vmatprep.subr.mxu0 0.0
  %912 = vmatpush1.msra.mxu0 0.0
  %913 = vmatprep.subr.mxu0 0.0
  %914 = vmatpush1.msra.mxu0 0.0
  %915 = vmatprep.subr.mxu0 0.0
  %916 = vmatpush1.msra.mxu0 0.0
  %917 = vmatprep.subr.mxu0 0.0
  %918 = vmatpush1.msra.mxu0 0.0
  %919 = vmatprep.subr.mxu0 0.0
  %920 = vmatpush1.msra.mxu0 0.0
  %921 = vmatprep.subr.mxu0 0.0
  %922 = vmatpush1.msra.mxu0 0.0
  %923 = vmatprep.subr.mxu0 0.0
  %924 = vmatpush1.msra.mxu0 0.0
  %925 = vmatprep.subr.mxu0 0.0
  %926 = vmatpush1.msra.mxu0 0.0
  %927 = vmatprep.subr.mxu0 0.0
  %928 = vmatpush1.msra.mxu0 0.0
  %929 = vmatprep.subr.mxu0 0.0
  %930 = vmatpush1.msra.mxu0 0.0
  %931 = vmatprep.subr.mxu0 0.0
  %932 = vmatpush1.msra.mxu0 0.0
  %933 = vmatprep.subr.mxu0 0.0
  %934 = vmatpush1.msra.mxu0 0.0
  %935 = vmatprep.subr.mxu0 0.0
  %936 = vmatpush1.msra.mxu0 0.0
  %937 = vmatprep.subr.mxu0 0.0
  %938 = vmatpush1.msra.mxu0 0.0
  %939 = vmatprep.subr.mxu0 0.0
  %940 = vmatpush1.msra.mxu0 0.0
  %941 = vmatprep.subr.mxu0 0.0
  %942 = vmatpush1.msra.mxu0 0.0
  %943 = vmatprep.subr.mxu0 0.0
  %944 = vmatpush1.msra.mxu0 0.0
  %945 = vmatprep.subr.mxu0 0.0
  %946 = vmatpush1.msra.mxu0 0.0
  %947 = vmatprep.subr.mxu0 0.0
  %948 = vmatpush1.msra.mxu0 0.0
  %949 = vmatprep.subr.mxu0 0.0
  %950 = vmatpush1.msra.mxu0 0.0
  %951 = vmatprep.subr.mxu0 0.0
  %952 = vmatpush1.msra.mxu0 0.0
  %953 = vmatprep.subr.mxu0 0.0
  %954 = vmatpush1.msra.mxu0 0.0
  %955 = vmatprep.subr.mxu0 0.0
  %956 = vmatpush1.msra.mxu0 0.0
  %957 = vmatprep.subr.mxu0 0.0
  %958 = vmatpush1.msra.mxu0 0.0
  %959 = vmatprep.mubr.f32.mxu0 0.0
  %960 = vmatmul.mubr.f32.gmra.mrb[0].mxu0 %v893
  %v961 = vpop.f32.mrb[0].mxu0
  %v962 = vadd.f32 0.0, %v961
  %v963 = vpop.f32.mrb[0].mxu0
  %964 = vdwg.mxu0
  %v966 = vrot.slane %v962, 4
  %v968 = vadd.f32 %v672, %v966
  %v969 = vmul.f32 %v968, %v687
  %v970 = vtanh.pop %v969
  %v971 = vmul.f32 %v970, 0.5
  %v972 = vadd.f32 %v971, 0.5
  %v973 = vsel %vm686, %v970, %v972
  %v975 = vrot.slane %v882, 6
  %v977 = vmul.f32 %v973, %v975
  %979 = vrot.lane.b32.xlu0 %v973, 64
  %v980 = vpop.permute.xlu0 %979
  %v982 = vmul.f32 %v973, %v980
  %984 = vrot.lane.b32.xlu0 %v982, 32
  %v985 = vpop.permute.xlu0 %984
  %v987 = vadd.f32 %v977, %v985
  %v988 = vtanh.pop %v987
  %990 = vrot.lane.b32.xlu0 %v988, 64
  %v991 = vpop.permute.xlu0 %990
  %v993 = vmul.f32 %v973, %v991
  %v995 = vrot.slane %v993, 4
  %996 = vrot.lane.b32.xlu0 %v995, 32
  %v997 = vpop.permute.xlu0 %996
  %v998 = vsel %vm688, %v997, 0
  %1000 = vmatprep.subr.mxu0 0.0
  %1001 = vmatpush1.msra.mxu0 %v678
  %1002 = vmatprep.subr.mxu0 0.0
  %1003 = vmatpush1.msra.mxu0 %v679
  %1004 = vmatprep.subr.mxu0 0.0
  %1005 = vmatpush1.msra.mxu0 %v680
  %1006 = vmatprep.subr.mxu0 0.0
  %1007 = vmatpush1.msra.mxu0 %v681
  %1008 = vmatprep.subr.mxu0 0.0
  %1009 = vmatpush1.msra.mxu0 0.0
  %1010 = vmatprep.subr.mxu0 0.0
  %1011 = vmatpush1.msra.mxu0 0.0
  %1012 = vmatprep.subr.mxu0 0.0
  %1013 = vmatpush1.msra.mxu0 0.0
  %1014 = vmatprep.subr.mxu0 0.0
  %1015 = vmatpush1.msra.mxu0 0.0
  %1016 = vmatprep.subr.mxu0 0.0
  %1017 = vmatpush1.msra.mxu0 0.0
  %1018 = vmatprep.subr.mxu0 0.0
  %1019 = vmatpush1.msra.mxu0 0.0
  %1020 = vmatprep.subr.mxu0 0.0
  %1021 = vmatpush1.msra.mxu0 0.0
  %1022 = vmatprep.subr.mxu0 0.0
  %1023 = vmatpush1.msra.mxu0 0.0
  %1024 = vmatprep.subr.mxu0 0.0
  %1025 = vmatpush1.msra.mxu0 0.0
  %1026 = vmatprep.subr.mxu0 0.0
  %1027 = vmatpush1.msra.mxu0 0.0
  %1028 = vmatprep.subr.mxu0 0.0
  %1029 = vmatpush1.msra.mxu0 0.0
  %1030 = vmatprep.subr.mxu0 0.0
  %1031 = vmatpush1.msra.mxu0 0.0
  %1032 = vmatprep.subr.mxu0 0.0
  %1033 = vmatpush1.msra.mxu0 0.0
  %1034 = vmatprep.subr.mxu0 0.0
  %1035 = vmatpush1.msra.mxu0 0.0
  %1036 = vmatprep.subr.mxu0 0.0
  %1037 = vmatpush1.msra.mxu0 0.0
  %1038 = vmatprep.subr.mxu0 0.0
  %1039 = vmatpush1.msra.mxu0 0.0
  %1040 = vmatprep.subr.mxu0 0.0
  %1041 = vmatpush1.msra.mxu0 0.0
  %1042 = vmatprep.subr.mxu0 0.0
  %1043 = vmatpush1.msra.mxu0 0.0
  %1044 = vmatprep.subr.mxu0 0.0
  %1045 = vmatpush1.msra.mxu0 0.0
  %1046 = vmatprep.subr.mxu0 0.0
  %1047 = vmatpush1.msra.mxu0 0.0
  %1048 = vmatprep.subr.mxu0 0.0
  %1049 = vmatpush1.msra.mxu0 0.0
  %1050 = vmatprep.subr.mxu0 0.0
  %1051 = vmatpush1.msra.mxu0 0.0
  %1052 = vmatprep.subr.mxu0 0.0
  %1053 = vmatpush1.msra.mxu0 0.0
  %1054 = vmatprep.subr.mxu0 0.0
  %1055 = vmatpush1.msra.mxu0 0.0
  %1056 = vmatprep.subr.mxu0 0.0
  %1057 = vmatpush1.msra.mxu0 0.0
  %1058 = vmatprep.subr.mxu0 0.0
  %1059 = vmatpush1.msra.mxu0 0.0
  %1060 = vmatprep.subr.mxu0 0.0
  %1061 = vmatpush1.msra.mxu0 0.0
  %1062 = vmatprep.subr.mxu0 0.0
  %1063 = vmatpush1.msra.mxu0 0.0
  %1064 = vmatprep.mubr.f32.mxu0 0.0
  %1065 = vmatmul.mubr.f32.gmra.mrb[0].mxu0 %v998
  %v1066 = vpop.f32.mrb[0].mxu0
  %v1067 = vadd.f32 0.0, %v1066
  %v1068 = vpop.f32.mrb[0].mxu0
  %1069 = vdwg.mxu0
  %v1071 = vrot.slane %v1067, 2
  %v1073 = vadd.f32 %v672, %v1071
  %v1074 = vmul.f32 %v1073, %v687
  %v1075 = vtanh.pop %v1074
  %v1076 = vmul.f32 %v1075, 0.5
  %v1077 = vadd.f32 %v1076, 0.5
  %v1078 = vsel %vm686, %v1075, %v1077
  %v1080 = vrot.slane %v987, 6
  %v1082 = vmul.f32 %v1078, %v1080
  %1084 = vrot.lane.b32.xlu0 %v1078, 64
  %v1085 = vpop.permute.xlu0 %1084
  %v1087 = vmul.f32 %v1078, %v1085
  %1089 = vrot.lane.b32.xlu0 %v1087, 32
  %v1090 = vpop.permute.xlu0 %1089
  %v1092 = vadd.f32 %v1082, %v1090
  %v1093 = vtanh.pop %v1092
  %1095 = vrot.lane.b32.xlu0 %v1093, 64
  %v1096 = vpop.permute.xlu0 %1095
  %v1098 = vmul.f32 %v1078, %v1096
  %v1100 = vrot.slane %v1098, 6
  %1101 = vrot.lane.b32.xlu0 %v1100, 32
  %v1102 = vpop.permute.xlu0 %1101
  %v1103 = vsel %vm688, %v1102, 0
  %1105 = vmatprep.subr.mxu0 0.0
  %1106 = vmatpush1.msra.mxu0 %v678
  %1107 = vmatprep.subr.mxu0 0.0
  %1108 = vmatpush1.msra.mxu0 %v679
  %1109 = vmatprep.subr.mxu0 0.0
  %1110 = vmatpush1.msra.mxu0 %v680
  %1111 = vmatprep.subr.mxu0 0.0
  %1112 = vmatpush1.msra.mxu0 %v681
  %1113 = vmatprep.subr.mxu0 0.0
  %1114 = vmatpush1.msra.mxu0 0.0
  %1115 = vmatprep.subr.mxu0 0.0
  %1116 = vmatpush1.msra.mxu0 0.0
  %1117 = vmatprep.subr.mxu0 0.0
  %1118 = vmatpush1.msra.mxu0 0.0
  %1119 = vmatprep.subr.mxu0 0.0
  %1120 = vmatpush1.msra.mxu0 0.0
  %1121 = vmatprep.subr.mxu0 0.0
  %1122 = vmatpush1.msra.mxu0 0.0
  %1123 = vmatprep.subr.mxu0 0.0
  %1124 = vmatpush1.msra.mxu0 0.0
  %1125 = vmatprep.subr.mxu0 0.0
  %1126 = vmatpush1.msra.mxu0 0.0
  %1127 = vmatprep.subr.mxu0 0.0
  %1128 = vmatpush1.msra.mxu0 0.0
  %1129 = vmatprep.subr.mxu0 0.0
  %1130 = vmatpush1.msra.mxu0 0.0
  %1131 = vmatprep.subr.mxu0 0.0
  %1132 = vmatpush1.msra.mxu0 0.0
  %1133 = vmatprep.subr.mxu0 0.0
  %1134 = vmatpush1.msra.mxu0 0.0
  %1135 = vmatprep.subr.mxu0 0.0
  %1136 = vmatpush1.msra.mxu0 0.0
  %1137 = vmatprep.subr.mxu0 0.0
  %1138 = vmatpush1.msra.mxu0 0.0
  %1139 = vmatprep.subr.mxu0 0.0
  %1140 = vmatpush1.msra.mxu0 0.0
  %1141 = vmatprep.subr.mxu0 0.0
  %1142 = vmatpush1.msra.mxu0 0.0
  %1143 = vmatprep.subr.mxu0 0.0
  %1144 = vmatpush1.msra.mxu0 0.0
  %1145 = vmatprep.subr.mxu0 0.0
  %1146 = vmatpush1.msra.mxu0 0.0
  %1147 = vmatprep.subr.mxu0 0.0
  %1148 = vmatpush1.msra.mxu0 0.0
  %1149 = vmatprep.subr.mxu0 0.0
  %1150 = vmatpush1.msra.mxu0 0.0
  %1151 = vmatprep.subr.mxu0 0.0
  %1152 = vmatpush1.msra.mxu0 0.0
  %1153 = vmatprep.subr.mxu0 0.0
  %1154 = vmatpush1.msra.mxu0 0.0
  %1155 = vmatprep.subr.mxu0 0.0
  %1156 = vmatpush1.msra.mxu0 0.0
  %1157 = vmatprep.subr.mxu0 0.0
  %1158 = vmatpush1.msra.mxu0 0.0
  %1159 = vmatprep.subr.mxu0 0.0
  %1160 = vmatpush1.msra.mxu0 0.0
  %1161 = vmatprep.subr.mxu0 0.0
  %1162 = vmatpush1.msra.mxu0 0.0
  %1163 = vmatprep.subr.mxu0 0.0
  %1164 = vmatpush1.msra.mxu0 0.0
  %1165 = vmatprep.subr.mxu0 0.0
  %1166 = vmatpush1.msra.mxu0 0.0
  %1167 = vmatprep.subr.mxu0 0.0
  %1168 = vmatpush1.msra.mxu0 0.0
  %1169 = vmatprep.mubr.f32.mxu0 0.0
  %1170 = vmatmul.mubr.f32.gmra.mrb[0].mxu0 %v1103
  %v1171 = vpop.f32.mrb[0].mxu0
  %v1172 = vadd.f32 0.0, %v1171
  %v1173 = vpop.f32.mrb[0].mxu0
  %1174 = vdwg.mxu0
  %v1175 = vadd.f32 %v673, %v1172
  %v1176 = vmul.f32 %v1175, %v687
  %v1177 = vtanh.pop %v1176
  %v1178 = vmul.f32 %v1177, 0.5
  %v1179 = vadd.f32 %v1178, 0.5
  %v1180 = vsel %vm686, %v1177, %v1179
  %v1182 = vrot.slane %v1092, 6
  %v1184 = vmul.f32 %v1180, %v1182
  %1186 = vrot.lane.b32.xlu0 %v1180, 64
  %v1187 = vpop.permute.xlu0 %1186
  %v1189 = vmul.f32 %v1180, %v1187
  %1191 = vrot.lane.b32.xlu0 %v1189, 32
  %v1192 = vpop.permute.xlu0 %1191
  %v1194 = vadd.f32 %v1184, %v1192
  %v1195 = vtanh.pop %v1194
  %1197 = vrot.lane.b32.xlu0 %v1195, 64
  %v1198 = vpop.permute.xlu0 %1197
  %v1200 = vmul.f32 %v1180, %v1198
  %1202 = vrot.lane.b32.xlu0 %v1200, 32
  %v1203 = vpop.permute.xlu0 %1202
  %v1204 = vsel %vm688, %v1203, 0
  %1206 = vmatprep.subr.mxu0 0.0
  %1207 = vmatpush1.msra.mxu0 %v678
  %1208 = vmatprep.subr.mxu0 0.0
  %1209 = vmatpush1.msra.mxu0 %v679
  %1210 = vmatprep.subr.mxu0 0.0
  %1211 = vmatpush1.msra.mxu0 %v680
  %1212 = vmatprep.subr.mxu0 0.0
  %1213 = vmatpush1.msra.mxu0 %v681
  %1214 = vmatprep.subr.mxu0 0.0
  %1215 = vmatpush1.msra.mxu0 0.0
  %1216 = vmatprep.subr.mxu0 0.0
  %1217 = vmatpush1.msra.mxu0 0.0
  %1218 = vmatprep.subr.mxu0 0.0
  %1219 = vmatpush1.msra.mxu0 0.0
  %1220 = vmatprep.subr.mxu0 0.0
  %1221 = vmatpush1.msra.mxu0 0.0
  %1222 = vmatprep.subr.mxu0 0.0
  %1223 = vmatpush1.msra.mxu0 0.0
  %1224 = vmatprep.subr.mxu0 0.0
  %1225 = vmatpush1.msra.mxu0 0.0
  %1226 = vmatprep.subr.mxu0 0.0
  %1227 = vmatpush1.msra.mxu0 0.0
  %1228 = vmatprep.subr.mxu0 0.0
  %1229 = vmatpush1.msra.mxu0 0.0
  %1230 = vmatprep.subr.mxu0 0.0
  %1231 = vmatpush1.msra.mxu0 0.0
  %1232 = vmatprep.subr.mxu0 0.0
  %1233 = vmatpush1.msra.mxu0 0.0
  %1234 = vmatprep.subr.mxu0 0.0
  %1235 = vmatpush1.msra.mxu0 0.0
  %1236 = vmatprep.subr.mxu0 0.0
  %1237 = vmatpush1.msra.mxu0 0.0
  %1238 = vmatprep.subr.mxu0 0.0
  %1239 = vmatpush1.msra.mxu0 0.0
  %1240 = vmatprep.subr.mxu0 0.0
  %1241 = vmatpush1.msra.mxu0 0.0
  %1242 = vmatprep.subr.mxu0 0.0
  %1243 = vmatpush1.msra.mxu0 0.0
  %1244 = vmatprep.subr.mxu0 0.0
  %1245 = vmatpush1.msra.mxu0 0.0
  %1246 = vmatprep.subr.mxu0 0.0
  %1247 = vmatpush1.msra.mxu0 0.0
  %1248 = vmatprep.subr.mxu0 0.0
  %1249 = vmatpush1.msra.mxu0 0.0
  %1250 = vmatprep.subr.mxu0 0.0
  %1251 = vmatpush1.msra.mxu0 0.0
  %1252 = vmatprep.subr.mxu0 0.0
  %1253 = vmatpush1.msra.mxu0 0.0
  %1254 = vmatprep.subr.mxu0 0.0
  %1255 = vmatpush1.msra.mxu0 0.0
  %1256 = vmatprep.subr.mxu0 0.0
  %1257 = vmatpush1.msra.mxu0 0.0
  %1258 = vmatprep.subr.mxu0 0.0
  %1259 = vmatpush1.msra.mxu0 0.0
  %1260 = vmatprep.subr.mxu0 0.0
  %1261 = vmatpush1.msra.mxu0 0.0
  %1262 = vmatprep.subr.mxu0 0.0
  %1263 = vmatpush1.msra.mxu0 0.0
  %1264 = vmatprep.subr.mxu0 0.0
  %1265 = vmatpush1.msra.mxu0 0.0
  %1266 = vmatprep.subr.mxu0 0.0
  %1267 = vmatpush1.msra.mxu0 0.0
  %1268 = vmatprep.subr.mxu0 0.0
  %1269 = vmatpush1.msra.mxu0 0.0
  %1270 = vmatprep.mubr.f32.mxu0 0.0
  %1271 = vmatmul.mubr.f32.gmra.mrb[0].mxu0 %v1204
  %v1272 = vpop.f32.mrb[0].mxu0
  %v1273 = vadd.f32 0.0, %v1272
  %v1274 = vpop.f32.mrb[0].mxu0
  %1275 = vdwg.mxu0
  %v1277 = vrot.slane %v1273, 6
  %v1279 = vadd.f32 %v673, %v1277
  %v1280 = vmul.f32 %v1279, %v687
  %v1281 = vtanh.pop %v1280
  %v1282 = vmul.f32 %v1281, 0.5
  %v1283 = vadd.f32 %v1282, 0.5
  %v1284 = vsel %vm686, %v1281, %v1283
  %v1286 = vrot.slane %v1194, 6
  %v1288 = vmul.f32 %v1284, %v1286
  %1290 = vrot.lane.b32.xlu0 %v1284, 64
  %v1291 = vpop.permute.xlu0 %1290
  %v1293 = vmul.f32 %v1284, %v1291
  %1295 = vrot.lane.b32.xlu0 %v1293, 32
  %v1296 = vpop.permute.xlu0 %1295
  %v1298 = vadd.f32 %v1288, %v1296
  %v1299 = vtanh.pop %v1298
  %1301 = vrot.lane.b32.xlu0 %v1299, 64
  %v1302 = vpop.permute.xlu0 %1301
  %v1304 = vmul.f32 %v1284, %v1302
  %v1306 = vrot.slane %v1304, 2
  %1307 = vrot.lane.b32.xlu0 %v1306, 32
  %v1308 = vpop.permute.xlu0 %1307
  %v1309 = vsel %vm688, %v1308, 0
  %1311 = vmatprep.subr.mxu0 0.0
  %1312 = vmatpush1.msra.mxu0 %v678
  %1313 = vmatprep.subr.mxu0 0.0
  %1314 = vmatpush1.msra.mxu0 %v679
  %1315 = vmatprep.subr.mxu0 0.0
  %1316 = vmatpush1.msra.mxu0 %v680
  %1317 = vmatprep.subr.mxu0 0.0
  %1318 = vmatpush1.msra.mxu0 %v681
  %1319 = vmatprep.subr.mxu0 0.0
  %1320 = vmatpush1.msra.mxu0 0.0
  %1321 = vmatprep.subr.mxu0 0.0
  %1322 = vmatpush1.msra.mxu0 0.0
  %1323 = vmatprep.subr.mxu0 0.0
  %1324 = vmatpush1.msra.mxu0 0.0
  %1325 = vmatprep.subr.mxu0 0.0
  %1326 = vmatpush1.msra.mxu0 0.0
  %1327 = vmatprep.subr.mxu0 0.0
  %1328 = vmatpush1.msra.mxu0 0.0
  %1329 = vmatprep.subr.mxu0 0.0
  %1330 = vmatpush1.msra.mxu0 0.0
  %1331 = vmatprep.subr.mxu0 0.0
  %1332 = vmatpush1.msra.mxu0 0.0
  %1333 = vmatprep.subr.mxu0 0.0
  %1334 = vmatpush1.msra.mxu0 0.0
  %1335 = vmatprep.subr.mxu0 0.0
  %1336 = vmatpush1.msra.mxu0 0.0
  %1337 = vmatprep.subr.mxu0 0.0
  %1338 = vmatpush1.msra.mxu0 0.0
  %1339 = vmatprep.subr.mxu0 0.0
  %1340 = vmatpush1.msra.mxu0 0.0
  %1341 = vmatprep.subr.mxu0 0.0
  %1342 = vmatpush1.msra.mxu0 0.0
  %1343 = vmatprep.subr.mxu0 0.0
  %1344 = vmatpush1.msra.mxu0 0.0
  %1345 = vmatprep.subr.mxu0 0.0
  %1346 = vmatpush1.msra.mxu0 0.0
  %1347 = vmatprep.subr.mxu0 0.0
  %1348 = vmatpush1.msra.mxu0 0.0
  %1349 = vmatprep.subr.mxu0 0.0
  %1350 = vmatpush1.msra.mxu0 0.0
  %1351 = vmatprep.subr.mxu0 0.0
  %1352 = vmatpush1.msra.mxu0 0.0
  %1353 = vmatprep.subr.mxu0 0.0
  %1354 = vmatpush1.msra.mxu0 0.0
  %1355 = vmatprep.subr.mxu0 0.0
  %1356 = vmatpush1.msra.mxu0 0.0
  %1357 = vmatprep.subr.mxu0 0.0
  %1358 = vmatpush1.msra.mxu0 0.0
  %1359 = vmatprep.subr.mxu0 0.0
  %1360 = vmatpush1.msra.mxu0 0.0
  %1361 = vmatprep.subr.mxu0 0.0
  %1362 = vmatpush1.msra.mxu0 0.0
  %1363 = vmatprep.subr.mxu0 0.0
  %1364 = vmatpush1.msra.mxu0 0.0
  %1365 = vmatprep.subr.mxu0 0.0
  %1366 = vmatpush1.msra.mxu0 0.0
  %1367 = vmatprep.subr.mxu0 0.0
  %1368 = vmatpush1.msra.mxu0 0.0
  %1369 = vmatprep.subr.mxu0 0.0
  %1370 = vmatpush1.msra.mxu0 0.0
  %1371 = vmatprep.subr.mxu0 0.0
  %1372 = vmatpush1.msra.mxu0 0.0
  %1373 = vmatprep.subr.mxu0 0.0
  %1374 = vmatpush1.msra.mxu0 0.0
  %1375 = vmatprep.mubr.f32.mxu0 0.0
  %1376 = vmatmul.mubr.f32.gmra.mrb[0].mxu0 %v1309
  %v1377 = vpop.f32.mrb[0].mxu0
  %v1378 = vadd.f32 0.0, %v1377
  %v1379 = vpop.f32.mrb[0].mxu0
  %1380 = vdwg.mxu0
  %v1382 = vrot.slane %v1378, 4
  %v1384 = vadd.f32 %v673, %v1382
  %v1385 = vmul.f32 %v1384, %v687
  %v1386 = vtanh.pop %v1385
  %v1387 = vmul.f32 %v1386, 0.5
  %v1388 = vadd.f32 %v1387, 0.5
  %v1389 = vsel %vm686, %v1386, %v1388
  %v1391 = vrot.slane %v1298, 6
  %v1393 = vmul.f32 %v1389, %v1391
  %1395 = vrot.lane.b32.xlu0 %v1389, 64
  %v1396 = vpop.permute.xlu0 %1395
  %v1398 = vmul.f32 %v1389, %v1396
  %1400 = vrot.lane.b32.xlu0 %v1398, 32
  %v1401 = vpop.permute.xlu0 %1400
  %v1403 = vadd.f32 %v1393, %v1401
  %v1404 = vtanh.pop %v1403
  %1406 = vrot.lane.b32.xlu0 %v1404, 64
  %v1407 = vpop.permute.xlu0 %1406
  %v1409 = vmul.f32 %v1389, %v1407
  %v1411 = vrot.slane %v1409, 4
  %1412 = vrot.lane.b32.xlu0 %v1411, 32
  %v1413 = vpop.permute.xlu0 %1412
  %v1414 = vsel %vm688, %v1413, 0
  %1416 = vmatprep.subr.mxu0 0.0
  %1417 = vmatpush1.msra.mxu0 %v678
  %1418 = vmatprep.subr.mxu0 0.0
  %1419 = vmatpush1.msra.mxu0 %v679
  %1420 = vmatprep.subr.mxu0 0.0
  %1421 = vmatpush1.msra.mxu0 %v680
  %1422 = vmatprep.subr.mxu0 0.0
  %1423 = vmatpush1.msra.mxu0 %v681
  %1424 = vmatprep.subr.mxu0 0.0
  %1425 = vmatpush1.msra.mxu0 0.0
  %1426 = vmatprep.subr.mxu0 0.0
  %1427 = vmatpush1.msra.mxu0 0.0
  %1428 = vmatprep.subr.mxu0 0.0
  %1429 = vmatpush1.msra.mxu0 0.0
  %1430 = vmatprep.subr.mxu0 0.0
  %1431 = vmatpush1.msra.mxu0 0.0
  %1432 = vmatprep.subr.mxu0 0.0
  %1433 = vmatpush1.msra.mxu0 0.0
  %1434 = vmatprep.subr.mxu0 0.0
  %1435 = vmatpush1.msra.mxu0 0.0
  %1436 = vmatprep.subr.mxu0 0.0
  %1437 = vmatpush1.msra.mxu0 0.0
  %1438 = vmatprep.subr.mxu0 0.0
  %1439 = vmatpush1.msra.mxu0 0.0
  %1440 = vmatprep.subr.mxu0 0.0
  %1441 = vmatpush1.msra.mxu0 0.0
  %1442 = vmatprep.subr.mxu0 0.0
  %1443 = vmatpush1.msra.mxu0 0.0
  %1444 = vmatprep.subr.mxu0 0.0
  %1445 = vmatpush1.msra.mxu0 0.0
  %1446 = vmatprep.subr.mxu0 0.0
  %1447 = vmatpush1.msra.mxu0 0.0
  %1448 = vmatprep.subr.mxu0 0.0
  %1449 = vmatpush1.msra.mxu0 0.0
  %1450 = vmatprep.subr.mxu0 0.0
  %1451 = vmatpush1.msra.mxu0 0.0
  %1452 = vmatprep.subr.mxu0 0.0
  %1453 = vmatpush1.msra.mxu0 0.0
  %1454 = vmatprep.subr.mxu0 0.0
  %1455 = vmatpush1.msra.mxu0 0.0
  %1456 = vmatprep.subr.mxu0 0.0
  %1457 = vmatpush1.msra.mxu0 0.0
  %1458 = vmatprep.subr.mxu0 0.0
  %1459 = vmatpush1.msra.mxu0 0.0
  %1460 = vmatprep.subr.mxu0 0.0
  %1461 = vmatpush1.msra.mxu0 0.0
  %1462 = vmatprep.subr.mxu0 0.0
  %1463 = vmatpush1.msra.mxu0 0.0
  %1464 = vmatprep.subr.mxu0 0.0
  %1465 = vmatpush1.msra.mxu0 0.0
  %1466 = vmatprep.subr.mxu0 0.0
  %1467 = vmatpush1.msra.mxu0 0.0
  %1468 = vmatprep.subr.mxu0 0.0
  %1469 = vmatpush1.msra.mxu0 0.0
  %1470 = vmatprep.subr.mxu0 0.0
  %1471 = vmatpush1.msra.mxu0 0.0
  %1472 = vmatprep.subr.mxu0 0.0
  %1473 = vmatpush1.msra.mxu0 0.0
  %1474 = vmatprep.subr.mxu0 0.0
  %1475 = vmatpush1.msra.mxu0 0.0
  %1476 = vmatprep.subr.mxu0 0.0
  %1477 = vmatpush1.msra.mxu0 0.0
  %1478 = vmatprep.subr.mxu0 0.0
  %1479 = vmatpush1.msra.mxu0 0.0
  %1480 = vmatprep.mubr.f32.mxu0 0.0
  %1481 = vmatmul.mubr.f32.gmra.mrb[0].mxu0 %v1414
  %v1482 = vpop.f32.mrb[0].mxu0
  %v1483 = vadd.f32 0.0, %v1482
  %v1484 = vpop.f32.mrb[0].mxu0
  %1485 = vdwg.mxu0
  %v1487 = vrot.slane %v1483, 2
  %v1489 = vadd.f32 %v673, %v1487
  %v1490 = vmul.f32 %v1489, %v687
  %v1491 = vtanh.pop %v1490
  %v1492 = vmul.f32 %v1491, 0.5
  %v1493 = vadd.f32 %v1492, 0.5
  %v1494 = vsel %vm686, %v1491, %v1493
  %v1496 = vrot.slane %v1403, 6
  %v1498 = vmul.f32 %v1494, %v1496
  %1500 = vrot.lane.b32.xlu0 %v1494, 64
  %v1501 = vpop.permute.xlu0 %1500
  %v1503 = vmul.f32 %v1494, %v1501
  %1505 = vrot.lane.b32.xlu0 %v1503, 32
  %v1506 = vpop.permute.xlu0 %1505
  %v1508 = vadd.f32 %v1498, %v1506
  %v1509 = vtanh.pop %v1508
  %1511 = vrot.lane.b32.xlu0 %v1509, 64
  %v1512 = vpop.permute.xlu0 %1511
  %v1514 = vmul.f32 %v1494, %v1512
  %v1515 = vld [vmem:[%s8] sm:$0xff]
  %v1516 = vld [vmem:[%s8 + $0x8] sm:$0xff]
  %v1517 = vld [vmem:[%s8 + $0x10] sm:$0xff]
  %v1518 = vld [vmem:[%s8 + $0x18] sm:$0xff]
  %v1519 = vld [vmem:[%s10] sm:$0x3]
  %v1521 = vlaneseq
  %v1522 = vshrl.u32 %v1521, 7
  %v1523 = vsub.s32 0, %v1522
  %v1524 = vrot.slane %v1519, %v1523
  %v1525 = vlaneseq
  %v1526 = vshrl.u32 %v1525, 7
  %v1527 = vsub.s32 1, %v1526
  %v1528 = vrot.slane %v1519, %v1527
  %v1532 = vrot.slane %v1514, 6
  %1533 = vrot.lane.b32.xlu0 %v1532, 32
  %v1534 = vpop.permute.xlu0 %1533
  %v1539 = vunpack.c.l.b16 %v1515
  %v1540 = vunpack.c.h.b16 %v1515
  %v1541 = vunpack.c.l.b16 %v1516
  %v1542 = vunpack.c.h.b16 %v1516
  %v1543 = vunpack.c.l.b16 %v1517
  %v1544 = vunpack.c.h.b16 %v1517
  %v1545 = vunpack.c.l.b16 %v1518
  %v1546 = vunpack.c.h.b16 %v1518
  %v1547 = vpack.c.b16 %v1541, %v1539
  %v1548 = vpack.c.b16 %v1542, %v1540
  %v1549 = vpack.c.b16 %v1545, %v1543
  %v1550 = vpack.c.b16 %v1546, %v1544
  %v1555 = vsel %vm688, %v1534, 0
  %1557 = vmatprep.subr.bf16.mxu0 %v1548
  %1558 = vmatpush1.bf16.msra.mxu0 %v1547
  %1559 = vmatprep.subr.bf16.mxu0 %v1550
  %1560 = vmatpush1.bf16.msra.mxu0 %v1549
  %1561 = vmatprep.subr.bf16.mxu0 0
  %1562 = vmatpush1.bf16.msra.mxu0 0
  %1563 = vmatprep.subr.bf16.mxu0 0
  %1564 = vmatpush1.bf16.msra.mxu0 0
  %1565 = vmatprep.subr.bf16.mxu0 0
  %1566 = vmatpush1.bf16.msra.mxu0 0
  %1567 = vmatprep.subr.bf16.mxu0 0
  %1568 = vmatpush1.bf16.msra.mxu0 0
  %1569 = vmatprep.subr.bf16.mxu0 0
  %1570 = vmatpush1.bf16.msra.mxu0 0
  %1571 = vmatprep.subr.bf16.mxu0 0
  %1572 = vmatpush1.bf16.msra.mxu0 0
  %1573 = vmatprep.subr.bf16.mxu0 0
  %1574 = vmatpush1.bf16.msra.mxu0 0
  %1575 = vmatprep.subr.bf16.mxu0 0
  %1576 = vmatpush1.bf16.msra.mxu0 0
  %1577 = vmatprep.subr.bf16.mxu0 0
  %1578 = vmatpush1.bf16.msra.mxu0 0
  %1579 = vmatprep.subr.bf16.mxu0 0
  %1580 = vmatpush1.bf16.msra.mxu0 0
  %1581 = vmatprep.subr.bf16.mxu0 0
  %1582 = vmatpush1.bf16.msra.mxu0 0
  %1583 = vmatprep.subr.bf16.mxu0 0
  %1584 = vmatpush1.bf16.msra.mxu0 0
  %1585 = vmatprep.subr.bf16.mxu0 0
  %1586 = vmatpush1.bf16.msra.mxu0 0
  %1587 = vmatprep.subr.bf16.mxu0 0
  %1588 = vmatpush1.bf16.msra.mxu0 0
  %1589 = vmatprep.mubr.f32.mxu0 0.0
  %1590 = vmatmul.mubr.f32.gmra.mrb[0].mxu0 %v1555
  %v1591 = vpop.f32.mrb[0].mxu0
  %v1592 = vadd.f32 %v1524, %v1591
  %v1593 = vpop.f32.mrb[0].mxu0
  %v1594 = vadd.f32 %v1528, %v1593
  %1595 = vdwg.mxu0
  %v1596 = vld [vmem:[%s9] sm:$0xff]
  %v1597 = vld [vmem:[%s9 + $0x8] sm:$0xff]
  %v1600 = vunpack.c.l.b16 %v1596
  %v1601 = vunpack.c.h.b16 %v1596
  %v1602 = vunpack.c.l.b16 %v1597
  %v1603 = vunpack.c.h.b16 %v1597
  %v1604 = vpack.c.b16 %v1602, %v1600
  %v1605 = vpack.c.b16 %v1603, %v1601
  %v1609 = vsel %vm429, %v401, 0
  %1611 = vmatprep.subr.bf16.mxu0 %v1605
  %1612 = vmatpush1.bf16.msra.mxu0 %v1604
  %1613 = vmatprep.subr.bf16.mxu0 0
  %1614 = vmatpush1.bf16.msra.mxu0 0
  %1615 = vmatprep.subr.bf16.mxu0 0
  %1616 = vmatpush1.bf16.msra.mxu0 0
  %1617 = vmatprep.subr.bf16.mxu0 0
  %1618 = vmatpush1.bf16.msra.mxu0 0
  %1619 = vmatprep.subr.bf16.mxu0 0
  %1620 = vmatpush1.bf16.msra.mxu0 0
  %1621 = vmatprep.subr.bf16.mxu0 0
  %1622 = vmatpush1.bf16.msra.mxu0 0
  %1623 = vmatprep.subr.bf16.mxu0 0
  %1624 = vmatpush1.bf16.msra.mxu0 0
  %1625 = vmatprep.subr.bf16.mxu0 0
  %1626 = vmatpush1.bf16.msra.mxu0 0
  %1627 = vmatprep.subr.bf16.mxu0 0
  %1628 = vmatpush1.bf16.msra.mxu0 0
  %1629 = vmatprep.subr.bf16.mxu0 0
  %1630 = vmatpush1.bf16.msra.mxu0 0
  %1631 = vmatprep.subr.bf16.mxu0 0
  %1632 = vmatpush1.bf16.msra.mxu0 0
  %1633 = vmatprep.subr.bf16.mxu0 0
  %1634 = vmatpush1.bf16.msra.mxu0 0
  %1635 = vmatprep.subr.bf16.mxu0 0
  %1636 = vmatpush1.bf16.msra.mxu0 0
  %1637 = vmatprep.subr.bf16.mxu0 0
  %1638 = vmatpush1.bf16.msra.mxu0 0
  %1639 = vmatprep.subr.bf16.mxu0 0
  %1640 = vmatpush1.bf16.msra.mxu0 0
  %1641 = vmatprep.subr.bf16.mxu0 0
  %1642 = vmatpush1.bf16.msra.mxu0 0
  %1643 = vmatprep.mubr.f32.mxu0 0.0
  %1644 = vmatmul.mubr.f32.gmra.mrb[0].mxu0 %v1609
  %v1645 = vpop.f32.mrb[0].mxu0
  %v1646 = vadd.f32 0.0, %v1645
  %v1647 = vpop.f32.mrb[0].mxu0
  %v1648 = vadd.f32 0.0, %v1647
  %1649 = vdwg.mxu0
  %v1650 = vadd.f32 %v1592, %v1646
  %v1651 = vadd.f32 %v1594, %v1648
  %v1652 = vld [vmem:[%s9 + $0x10] sm:$0xff]
  %v1653 = vld [vmem:[%s9 + $0x18] sm:$0xff]
  %v1654 = vrot.slane %v401, 2
  %v1657 = vunpack.c.l.b16 %v1652
  %v1658 = vunpack.c.h.b16 %v1652
  %v1659 = vunpack.c.l.b16 %v1653
  %v1660 = vunpack.c.h.b16 %v1653
  %v1661 = vpack.c.b16 %v1659, %v1657
  %v1662 = vpack.c.b16 %v1660, %v1658
  %v1665 = vsel %vm429, %v1654, 0
  %1667 = vmatprep.subr.bf16.mxu0 %v1662
  %1668 = vmatpush1.bf16.msra.mxu0 %v1661
  %1669 = vmatprep.subr.bf16.mxu0 0
  %1670 = vmatpush1.bf16.msra.mxu0 0
  %1671 = vmatprep.subr.bf16.mxu0 0
  %1672 = vmatpush1.bf16.msra.mxu0 0
  %1673 = vmatprep.subr.bf16.mxu0 0
  %1674 = vmatpush1.bf16.msra.mxu0 0
  %1675 = vmatprep.subr.bf16.mxu0 0
  %1676 = vmatpush1.bf16.msra.mxu0 0
  %1677 = vmatprep.subr.bf16.mxu0 0
  %1678 = vmatpush1.bf16.msra.mxu0 0
  %1679 = vmatprep.subr.bf16.mxu0 0
  %1680 = vmatpush1.bf16.msra.mxu0 0
  %1681 = vmatprep.subr.bf16.mxu0 0
  %1682 = vmatpush1.bf16.msra.mxu0 0
  %1683 = vmatprep.subr.bf16.mxu0 0
  %1684 = vmatpush1.bf16.msra.mxu0 0
  %1685 = vmatprep.subr.bf16.mxu0 0
  %1686 = vmatpush1.bf16.msra.mxu0 0
  %1687 = vmatprep.subr.bf16.mxu0 0
  %1688 = vmatpush1.bf16.msra.mxu0 0
  %1689 = vmatprep.subr.bf16.mxu0 0
  %1690 = vmatpush1.bf16.msra.mxu0 0
  %1691 = vmatprep.subr.bf16.mxu0 0
  %1692 = vmatpush1.bf16.msra.mxu0 0
  %1693 = vmatprep.subr.bf16.mxu0 0
  %1694 = vmatpush1.bf16.msra.mxu0 0
  %1695 = vmatprep.subr.bf16.mxu0 0
  %1696 = vmatpush1.bf16.msra.mxu0 0
  %1697 = vmatprep.subr.bf16.mxu0 0
  %1698 = vmatpush1.bf16.msra.mxu0 0
  %1699 = vmatprep.mubr.f32.mxu0 0.0
  %1700 = vmatmul.mubr.f32.gmra.mrb[0].mxu0 %v1665
  %v1701 = vpop.f32.mrb[0].mxu0
  %v1702 = vadd.f32 0.0, %v1701
  %v1703 = vpop.f32.mrb[0].mxu0
  %v1704 = vadd.f32 0.0, %v1703
  %1705 = vdwg.mxu0
  %v1706 = vadd.f32 %v1650, %v1702
  %v1707 = vadd.f32 %v1651, %v1704
  %v1708 = vld [vmem:[%s9 + $0x20] sm:$0xff]
  %v1709 = vld [vmem:[%s9 + $0x28] sm:$0xff]
  %v1710 = vrot.slane %v401, 4
  %v1713 = vunpack.c.l.b16 %v1708
  %v1714 = vunpack.c.h.b16 %v1708
  %v1715 = vunpack.c.l.b16 %v1709
  %v1716 = vunpack.c.h.b16 %v1709
  %v1717 = vpack.c.b16 %v1715, %v1713
  %v1718 = vpack.c.b16 %v1716, %v1714
  %v1721 = vsel %vm429, %v1710, 0
  %1723 = vmatprep.subr.bf16.mxu0 %v1718
  %1724 = vmatpush1.bf16.msra.mxu0 %v1717
  %1725 = vmatprep.subr.bf16.mxu0 0
  %1726 = vmatpush1.bf16.msra.mxu0 0
  %1727 = vmatprep.subr.bf16.mxu0 0
  %1728 = vmatpush1.bf16.msra.mxu0 0
  %1729 = vmatprep.subr.bf16.mxu0 0
  %1730 = vmatpush1.bf16.msra.mxu0 0
  %1731 = vmatprep.subr.bf16.mxu0 0
  %1732 = vmatpush1.bf16.msra.mxu0 0
  %1733 = vmatprep.subr.bf16.mxu0 0
  %1734 = vmatpush1.bf16.msra.mxu0 0
  %1735 = vmatprep.subr.bf16.mxu0 0
  %1736 = vmatpush1.bf16.msra.mxu0 0
  %1737 = vmatprep.subr.bf16.mxu0 0
  %1738 = vmatpush1.bf16.msra.mxu0 0
  %1739 = vmatprep.subr.bf16.mxu0 0
  %1740 = vmatpush1.bf16.msra.mxu0 0
  %1741 = vmatprep.subr.bf16.mxu0 0
  %1742 = vmatpush1.bf16.msra.mxu0 0
  %1743 = vmatprep.subr.bf16.mxu0 0
  %1744 = vmatpush1.bf16.msra.mxu0 0
  %1745 = vmatprep.subr.bf16.mxu0 0
  %1746 = vmatpush1.bf16.msra.mxu0 0
  %1747 = vmatprep.subr.bf16.mxu0 0
  %1748 = vmatpush1.bf16.msra.mxu0 0
  %1749 = vmatprep.subr.bf16.mxu0 0
  %1750 = vmatpush1.bf16.msra.mxu0 0
  %1751 = vmatprep.subr.bf16.mxu0 0
  %1752 = vmatpush1.bf16.msra.mxu0 0
  %1753 = vmatprep.subr.bf16.mxu0 0
  %1754 = vmatpush1.bf16.msra.mxu0 0
  %1755 = vmatprep.mubr.f32.mxu0 0.0
  %1756 = vmatmul.mubr.f32.gmra.mrb[0].mxu0 %v1721
  %v1757 = vpop.f32.mrb[0].mxu0
  %v1758 = vadd.f32 0.0, %v1757
  %v1759 = vpop.f32.mrb[0].mxu0
  %v1760 = vadd.f32 0.0, %v1759
  %1761 = vdwg.mxu0
  %v1762 = vadd.f32 %v1706, %v1758
  %v1763 = vadd.f32 %v1707, %v1760
  %v1764 = vld [vmem:[%s9 + $0x30] sm:$0xff]
  %v1765 = vld [vmem:[%s9 + $0x38] sm:$0xff]
  %v1766 = vrot.slane %v401, 6
  %v1769 = vunpack.c.l.b16 %v1764
  %v1770 = vunpack.c.h.b16 %v1764
  %v1771 = vunpack.c.l.b16 %v1765
  %v1772 = vunpack.c.h.b16 %v1765
  %v1773 = vpack.c.b16 %v1771, %v1769
  %v1774 = vpack.c.b16 %v1772, %v1770
  %v1777 = vsel %vm429, %v1766, 0
  %1779 = vmatprep.subr.bf16.mxu0 %v1774
  %1780 = vmatpush1.bf16.msra.mxu0 %v1773
  %1781 = vmatprep.subr.bf16.mxu0 0
  %1782 = vmatpush1.bf16.msra.mxu0 0
  %1783 = vmatprep.subr.bf16.mxu0 0
  %1784 = vmatpush1.bf16.msra.mxu0 0
  %1785 = vmatprep.subr.bf16.mxu0 0
  %1786 = vmatpush1.bf16.msra.mxu0 0
  %1787 = vmatprep.subr.bf16.mxu0 0
  %1788 = vmatpush1.bf16.msra.mxu0 0
  %1789 = vmatprep.subr.bf16.mxu0 0
  %1790 = vmatpush1.bf16.msra.mxu0 0
  %1791 = vmatprep.subr.bf16.mxu0 0
  %1792 = vmatpush1.bf16.msra.mxu0 0
  %1793 = vmatprep.subr.bf16.mxu0 0
  %1794 = vmatpush1.bf16.msra.mxu0 0
  %1795 = vmatprep.subr.bf16.mxu0 0
  %1796 = vmatpush1.bf16.msra.mxu0 0
  %1797 = vmatprep.subr.bf16.mxu0 0
  %1798 = vmatpush1.bf16.msra.mxu0 0
  %1799 = vmatprep.subr.bf16.mxu0 0
  %1800 = vmatpush1.bf16.msra.mxu0 0
  %1801 = vmatprep.subr.bf16.mxu0 0
  %1802 = vmatpush1.bf16.msra.mxu0 0
  %1803 = vmatprep.subr.bf16.mxu0 0
  %1804 = vmatpush1.bf16.msra.mxu0 0
  %1805 = vmatprep.subr.bf16.mxu0 0
  %1806 = vmatpush1.bf16.msra.mxu0 0
  %1807 = vmatprep.subr.bf16.mxu0 0
  %1808 = vmatpush1.bf16.msra.mxu0 0
  %1809 = vmatprep.subr.bf16.mxu0 0
  %1810 = vmatpush1.bf16.msra.mxu0 0
  %1811 = vmatprep.mubr.f32.mxu0 0.0
  %1812 = vmatmul.mubr.f32.gmra.mrb[0].mxu0 %v1777
  %v1813 = vpop.f32.mrb[0].mxu0
  %v1814 = vadd.f32 0.0, %v1813
  %v1815 = vpop.f32.mrb[0].mxu0
  %v1816 = vadd.f32 0.0, %v1815
  %1817 = vdwg.mxu0
  %v1818 = vadd.f32 %v1762, %v1814
  %v1819 = vadd.f32 %v1763, %v1816
  %v1820 = vld [vmem:[%s9 + $0x40] sm:$0xff]
  %v1821 = vld [vmem:[%s9 + $0x48] sm:$0xff]
  %v1824 = vunpack.c.l.b16 %v1820
  %v1825 = vunpack.c.h.b16 %v1820
  %v1826 = vunpack.c.l.b16 %v1821
  %v1827 = vunpack.c.h.b16 %v1821
  %v1828 = vpack.c.b16 %v1826, %v1824
  %v1829 = vpack.c.b16 %v1827, %v1825
  %v1832 = vsel %vm429, %v402, 0
  %1834 = vmatprep.subr.bf16.mxu0 %v1829
  %1835 = vmatpush1.bf16.msra.mxu0 %v1828
  %1836 = vmatprep.subr.bf16.mxu0 0
  %1837 = vmatpush1.bf16.msra.mxu0 0
  %1838 = vmatprep.subr.bf16.mxu0 0
  %1839 = vmatpush1.bf16.msra.mxu0 0
  %1840 = vmatprep.subr.bf16.mxu0 0
  %1841 = vmatpush1.bf16.msra.mxu0 0
  %1842 = vmatprep.subr.bf16.mxu0 0
  %1843 = vmatpush1.bf16.msra.mxu0 0
  %1844 = vmatprep.subr.bf16.mxu0 0
  %1845 = vmatpush1.bf16.msra.mxu0 0
  %1846 = vmatprep.subr.bf16.mxu0 0
  %1847 = vmatpush1.bf16.msra.mxu0 0
  %1848 = vmatprep.subr.bf16.mxu0 0
  %1849 = vmatpush1.bf16.msra.mxu0 0
  %1850 = vmatprep.subr.bf16.mxu0 0
  %1851 = vmatpush1.bf16.msra.mxu0 0
  %1852 = vmatprep.subr.bf16.mxu0 0
  %1853 = vmatpush1.bf16.msra.mxu0 0
  %1854 = vmatprep.subr.bf16.mxu0 0
  %1855 = vmatpush1.bf16.msra.mxu0 0
  %1856 = vmatprep.subr.bf16.mxu0 0
  %1857 = vmatpush1.bf16.msra.mxu0 0
  %1858 = vmatprep.subr.bf16.mxu0 0
  %1859 = vmatpush1.bf16.msra.mxu0 0
  %1860 = vmatprep.subr.bf16.mxu0 0
  %1861 = vmatpush1.bf16.msra.mxu0 0
  %1862 = vmatprep.subr.bf16.mxu0 0
  %1863 = vmatpush1.bf16.msra.mxu0 0
  %1864 = vmatprep.subr.bf16.mxu0 0
  %1865 = vmatpush1.bf16.msra.mxu0 0
  %1866 = vmatprep.mubr.f32.mxu0 0.0
  %1867 = vmatmul.mubr.f32.gmra.mrb[0].mxu0 %v1832
  %v1868 = vpop.f32.mrb[0].mxu0
  %v1869 = vadd.f32 0.0, %v1868
  %v1870 = vpop.f32.mrb[0].mxu0
  %v1871 = vadd.f32 0.0, %v1870
  %1872 = vdwg.mxu0
  %v1873 = vadd.f32 %v1818, %v1869
  %v1874 = vadd.f32 %v1819, %v1871
  %v1875 = vld [vmem:[%s9 + $0x50] sm:$0xff]
  %v1876 = vld [vmem:[%s9 + $0x58] sm:$0xff]
  %v1877 = vrot.slane %v402, 2
  %v1880 = vunpack.c.l.b16 %v1875
  %v1881 = vunpack.c.h.b16 %v1875
  %v1882 = vunpack.c.l.b16 %v1876
  %v1883 = vunpack.c.h.b16 %v1876
  %v1884 = vpack.c.b16 %v1882, %v1880
  %v1885 = vpack.c.b16 %v1883, %v1881
  %v1888 = vsel %vm429, %v1877, 0
  %1890 = vmatprep.subr.bf16.mxu0 %v1885
  %1891 = vmatpush1.bf16.msra.mxu0 %v1884
  %1892 = vmatprep.subr.bf16.mxu0 0
  %1893 = vmatpush1.bf16.msra.mxu0 0
  %1894 = vmatprep.subr.bf16.mxu0 0
  %1895 = vmatpush1.bf16.msra.mxu0 0
  %1896 = vmatprep.subr.bf16.mxu0 0
  %1897 = vmatpush1.bf16.msra.mxu0 0
  %1898 = vmatprep.subr.bf16.mxu0 0
  %1899 = vmatpush1.bf16.msra.mxu0 0
  %1900 = vmatprep.subr.bf16.mxu0 0
  %1901 = vmatpush1.bf16.msra.mxu0 0
  %1902 = vmatprep.subr.bf16.mxu0 0
  %1903 = vmatpush1.bf16.msra.mxu0 0
  %1904 = vmatprep.subr.bf16.mxu0 0
  %1905 = vmatpush1.bf16.msra.mxu0 0
  %1906 = vmatprep.subr.bf16.mxu0 0
  %1907 = vmatpush1.bf16.msra.mxu0 0
  %1908 = vmatprep.subr.bf16.mxu0 0
  %1909 = vmatpush1.bf16.msra.mxu0 0
  %1910 = vmatprep.subr.bf16.mxu0 0
  %1911 = vmatpush1.bf16.msra.mxu0 0
  %1912 = vmatprep.subr.bf16.mxu0 0
  %1913 = vmatpush1.bf16.msra.mxu0 0
  %1914 = vmatprep.subr.bf16.mxu0 0
  %1915 = vmatpush1.bf16.msra.mxu0 0
  %1916 = vmatprep.subr.bf16.mxu0 0
  %1917 = vmatpush1.bf16.msra.mxu0 0
  %1918 = vmatprep.subr.bf16.mxu0 0
  %1919 = vmatpush1.bf16.msra.mxu0 0
  %1920 = vmatprep.subr.bf16.mxu0 0
  %1921 = vmatpush1.bf16.msra.mxu0 0
  %1922 = vmatprep.mubr.f32.mxu0 0.0
  %1923 = vmatmul.mubr.f32.gmra.mrb[0].mxu0 %v1888
  %v1924 = vpop.f32.mrb[0].mxu0
  %v1925 = vadd.f32 0.0, %v1924
  %v1926 = vpop.f32.mrb[0].mxu0
  %v1927 = vadd.f32 0.0, %v1926
  %1928 = vdwg.mxu0
  %v1929 = vadd.f32 %v1873, %v1925
  %v1930 = vadd.f32 %v1874, %v1927
  %v1931 = vmax.f32 %v1929, 0.0
  %v1932 = vmax.f32 %v1930, 0.0
  %v1933 = vld [vmem:[%s11] sm:$0xff]
  %v1934 = vld [vmem:[%s11 + $0x8] sm:$0xff]
  %v1935 = vld [vmem:[%s11 + $0x10] sm:$0xff]
  %v1936 = vld [vmem:[%s11 + $0x18] sm:$0xff]
  %v1937 = vld [vmem:[%s11 + $0x20] sm:$0xff]
  %v1938 = vld [vmem:[%s11 + $0x28] sm:$0xff]
  %v1939 = vld [vmem:[%s11 + $0x30] sm:$0xff]
  %v1940 = vld [vmem:[%s11 + $0x38] sm:$0xff]
  %v1941 = vld [vmem:[%s11 + $0x40] sm:$0xff]
  %v1942 = vld [vmem:[%s11 + $0x48] sm:$0xff]
  %v1943 = vld [vmem:[%s11 + $0x50] sm:$0xff]
  %v1944 = vld [vmem:[%s11 + $0x58] sm:$0xff]
  %v1945 = vld [vmem:[%s11 + $0x60] sm:$0xff]
  %v1946 = vld [vmem:[%s11 + $0x68] sm:$0xff]
  %v1947 = vld [vmem:[%s11 + $0x70] sm:$0xff]
  %v1948 = vld [vmem:[%s11 + $0x78] sm:$0xff]
  %v1949 = vld [vmem:[%s11 + $0x80] sm:$0xff]
  %v1950 = vld [vmem:[%s11 + $0x88] sm:$0xff]
  %v1951 = vld [vmem:[%s11 + $0x90] sm:$0xff]
  %v1952 = vld [vmem:[%s11 + $0x98] sm:$0xff]
  %v1953 = vld [vmem:[%s11 + $0xa0] sm:$0xff]
  %v1954 = vld [vmem:[%s11 + $0xa8] sm:$0xff]
  %v1955 = vld [vmem:[%s11 + $0xb0] sm:$0xff]
  %v1956 = vld [vmem:[%s11 + $0xb8] sm:$0xff]
  %v1957 = vld [vmem:[%s11 + $0xc0] sm:$0xff]
  %v1958 = vld [vmem:[%s11 + $0xc8] sm:$0xff]
  %v1959 = vld [vmem:[%s11 + $0xd0] sm:$0xff]
  %v1960 = vld [vmem:[%s11 + $0xd8] sm:$0xff]
  %v1961 = vld [vmem:[%s11 + $0xe0] sm:$0xff]
  %v1962 = vld [vmem:[%s11 + $0xe8] sm:$0xff]
  %v1963 = vld [vmem:[%s11 + $0xf0] sm:$0xff]
  %v1964 = vld [vmem:[%s11 + $0xf8] sm:$0xff]
  %v1965 = vld [vmem:[%s12] sm:$0x3]
  %v1967 = vlaneseq
  %v1968 = vshrl.u32 %v1967, 7
  %v1969 = vsub.s32 0, %v1968
  %v1970 = vrot.slane %v1965, %v1969
  %v1971 = vlaneseq
  %v1972 = vshrl.u32 %v1971, 7
  %v1973 = vsub.s32 1, %v1972
  %v1974 = vrot.slane %v1965, %v1973
  %v2009 = vunpack.c.l.b16 %v1933
  %v2010 = vunpack.c.h.b16 %v1933
  %v2011 = vunpack.c.l.b16 %v1934
  %v2012 = vunpack.c.h.b16 %v1934
  %v2013 = vunpack.c.l.b16 %v1935
  %v2014 = vunpack.c.h.b16 %v1935
  %v2015 = vunpack.c.l.b16 %v1936
  %v2016 = vunpack.c.h.b16 %v1936
  %v2017 = vunpack.c.l.b16 %v1937
  %v2018 = vunpack.c.h.b16 %v1937
  %v2019 = vunpack.c.l.b16 %v1938
  %v2020 = vunpack.c.h.b16 %v1938
  %v2021 = vunpack.c.l.b16 %v1939
  %v2022 = vunpack.c.h.b16 %v1939
  %v2023 = vunpack.c.l.b16 %v1940
  %v2024 = vunpack.c.h.b16 %v1940
  %v2025 = vunpack.c.l.b16 %v1941
  %v2026 = vunpack.c.h.b16 %v1941
  %v2027 = vunpack.c.l.b16 %v1942
  %v2028 = vunpack.c.h.b16 %v1942
  %v2029 = vunpack.c.l.b16 %v1943
  %v2030 = vunpack.c.h.b16 %v1943
  %v2031 = vunpack.c.l.b16 %v1944
  %v2032 = vunpack.c.h.b16 %v1944
  %v2033 = vunpack.c.l.b16 %v1945
  %v2034 = vunpack.c.h.b16 %v1945
  %v2035 = vunpack.c.l.b16 %v1946
  %v2036 = vunpack.c.h.b16 %v1946
  %v2037 = vunpack.c.l.b16 %v1947
  %v2038 = vunpack.c.h.b16 %v1947
  %v2039 = vunpack.c.l.b16 %v1948
  %v2040 = vunpack.c.h.b16 %v1948
  %v2041 = vunpack.c.l.b16 %v1949
  %v2042 = vunpack.c.h.b16 %v1949
  %v2043 = vunpack.c.l.b16 %v1950
  %v2044 = vunpack.c.h.b16 %v1950
  %v2045 = vunpack.c.l.b16 %v1951
  %v2046 = vunpack.c.h.b16 %v1951
  %v2047 = vunpack.c.l.b16 %v1952
  %v2048 = vunpack.c.h.b16 %v1952
  %v2049 = vunpack.c.l.b16 %v1953
  %v2050 = vunpack.c.h.b16 %v1953
  %v2051 = vunpack.c.l.b16 %v1954
  %v2052 = vunpack.c.h.b16 %v1954
  %v2053 = vunpack.c.l.b16 %v1955
  %v2054 = vunpack.c.h.b16 %v1955
  %v2055 = vunpack.c.l.b16 %v1956
  %v2056 = vunpack.c.h.b16 %v1956
  %v2057 = vunpack.c.l.b16 %v1957
  %v2058 = vunpack.c.h.b16 %v1957
  %v2059 = vunpack.c.l.b16 %v1958
  %v2060 = vunpack.c.h.b16 %v1958
  %v2061 = vunpack.c.l.b16 %v1959
  %v2062 = vunpack.c.h.b16 %v1959
  %v2063 = vunpack.c.l.b16 %v1960
  %v2064 = vunpack.c.h.b16 %v1960
  %v2065 = vunpack.c.l.b16 %v1961
  %v2066 = vunpack.c.h.b16 %v1961
  %v2067 = vunpack.c.l.b16 %v1962
  %v2068 = vunpack.c.h.b16 %v1962
  %v2069 = vunpack.c.l.b16 %v1963
  %v2070 = vunpack.c.h.b16 %v1963
  %v2071 = vunpack.c.l.b16 %v1964
  %v2072 = vunpack.c.h.b16 %v1964
  %v2073 = vpack.c.b16 %v2011, %v2009
  %v2074 = vpack.c.b16 %v2012, %v2010
  %v2075 = vpack.c.b16 %v2015, %v2013
  %v2076 = vpack.c.b16 %v2016, %v2014
  %v2077 = vpack.c.b16 %v2019, %v2017
  %v2078 = vpack.c.b16 %v2020, %v2018
  %v2079 = vpack.c.b16 %v2023, %v2021
  %v2080 = vpack.c.b16 %v2024, %v2022
  %v2081 = vpack.c.b16 %v2027, %v2025
  %v2082 = vpack.c.b16 %v2028, %v2026
  %v2083 = vpack.c.b16 %v2031, %v2029
  %v2084 = vpack.c.b16 %v2032, %v2030
  %v2085 = vpack.c.b16 %v2035, %v2033
  %v2086 = vpack.c.b16 %v2036, %v2034
  %v2087 = vpack.c.b16 %v2039, %v2037
  %v2088 = vpack.c.b16 %v2040, %v2038
  %v2089 = vpack.c.b16 %v2043, %v2041
  %v2090 = vpack.c.b16 %v2044, %v2042
  %v2091 = vpack.c.b16 %v2047, %v2045
  %v2092 = vpack.c.b16 %v2048, %v2046
  %v2093 = vpack.c.b16 %v2051, %v2049
  %v2094 = vpack.c.b16 %v2052, %v2050
  %v2095 = vpack.c.b16 %v2055, %v2053
  %v2096 = vpack.c.b16 %v2056, %v2054
  %v2097 = vpack.c.b16 %v2059, %v2057
  %v2098 = vpack.c.b16 %v2060, %v2058
  %v2099 = vpack.c.b16 %v2063, %v2061
  %v2100 = vpack.c.b16 %v2064, %v2062
  %v2101 = vpack.c.b16 %v2067, %v2065
  %v2102 = vpack.c.b16 %v2068, %v2066
  %v2103 = vpack.c.b16 %v2071, %v2069
  %v2104 = vpack.c.b16 %v2072, %v2070
  %2137 = vmatprep.subr.bf16.mxu0 %v2074
  %2138 = vmatpush1.bf16.msra.mxu0 %v2073
  %2139 = vmatprep.subr.bf16.mxu0 %v2076
  %2140 = vmatpush1.bf16.msra.mxu0 %v2075
  %2141 = vmatprep.subr.bf16.mxu0 %v2078
  %2142 = vmatpush1.bf16.msra.mxu0 %v2077
  %2143 = vmatprep.subr.bf16.mxu0 %v2080
  %2144 = vmatpush1.bf16.msra.mxu0 %v2079
  %2145 = vmatprep.subr.bf16.mxu0 %v2082
  %2146 = vmatpush1.bf16.msra.mxu0 %v2081
  %2147 = vmatprep.subr.bf16.mxu0 %v2084
  %2148 = vmatpush1.bf16.msra.mxu0 %v2083
  %2149 = vmatprep.subr.bf16.mxu0 %v2086
  %2150 = vmatpush1.bf16.msra.mxu0 %v2085
  %2151 = vmatprep.subr.bf16.mxu0 %v2088
  %2152 = vmatpush1.bf16.msra.mxu0 %v2087
  %2153 = vmatprep.subr.bf16.mxu0 %v2090
  %2154 = vmatpush1.bf16.msra.mxu0 %v2089
  %2155 = vmatprep.subr.bf16.mxu0 %v2092
  %2156 = vmatpush1.bf16.msra.mxu0 %v2091
  %2157 = vmatprep.subr.bf16.mxu0 %v2094
  %2158 = vmatpush1.bf16.msra.mxu0 %v2093
  %2159 = vmatprep.subr.bf16.mxu0 %v2096
  %2160 = vmatpush1.bf16.msra.mxu0 %v2095
  %2161 = vmatprep.subr.bf16.mxu0 %v2098
  %2162 = vmatpush1.bf16.msra.mxu0 %v2097
  %2163 = vmatprep.subr.bf16.mxu0 %v2100
  %2164 = vmatpush1.bf16.msra.mxu0 %v2099
  %2165 = vmatprep.subr.bf16.mxu0 %v2102
  %2166 = vmatpush1.bf16.msra.mxu0 %v2101
  %2167 = vmatprep.subr.bf16.mxu0 %v2104
  %2168 = vmatpush1.bf16.msra.mxu0 %v2103
  %2169 = vmatprep.mubr.f32.mxu0 %v1932
  %2170 = vmatmul.mubr.f32.gmra.mrb[0].mxu0 %v1931
  %v2171 = vpop.f32.mrb[0].mxu0
  %v2172 = vadd.f32 %v1970, %v2171
  %v2173 = vpop.f32.mrb[0].mxu0
  %v2174 = vadd.f32 %v1974, %v2173
  %2175 = vdwg.mxu0
  %v2176 = vmax.f32 %v2172, 0.0
  %v2177 = vmax.f32 %v2174, 0.0
  %v2178 = vld [vmem:[%s13] sm:$0xff]
  %v2179 = vld [vmem:[%s13 + $0x8] sm:$0xf]
  %v2180 = vld [vmem:[%s13 + $0xc] sm:$0xff]
  %v2181 = vld [vmem:[%s13 + $0x14] sm:$0xf]
  %v2182 = vld [vmem:[%s13 + $0x18] sm:$0xff]
  %v2183 = vld [vmem:[%s13 + $0x20] sm:$0xf]
  %v2184 = vld [vmem:[%s13 + $0x24] sm:$0xff]
  %v2185 = vld [vmem:[%s13 + $0x2c] sm:$0xf]
  %v2186 = vld [vmem:[%s13 + $0x30] sm:$0xff]
  %v2187 = vld [vmem:[%s13 + $0x38] sm:$0xf]
  %v2188 = vld [vmem:[%s13 + $0x3c] sm:$0xff]
  %v2189 = vld [vmem:[%s13 + $0x44] sm:$0xf]
  %v2190 = vld [vmem:[%s13 + $0x48] sm:$0xff]
  %v2191 = vld [vmem:[%s13 + $0x50] sm:$0xf]
  %v2192 = vld [vmem:[%s13 + $0x54] sm:$0xff]
  %v2193 = vld [vmem:[%s13 + $0x5c] sm:$0xf]
  %v2194 = vld [vmem:[%s13 + $0x60] sm:$0xff]
  %v2195 = vld [vmem:[%s13 + $0x68] sm:$0xf]
  %v2196 = vld [vmem:[%s13 + $0x6c] sm:$0xff]
  %v2197 = vld [vmem:[%s13 + $0x74] sm:$0xf]
  %v2198 = vld [vmem:[%s13 + $0x78] sm:$0xff]
  %v2199 = vld [vmem:[%s13 + $0x80] sm:$0xf]
  %v2200 = vld [vmem:[%s13 + $0x84] sm:$0xff]
  %v2201 = vld [vmem:[%s13 + $0x8c] sm:$0xf]
  %v2202 = vld [vmem:[%s13 + $0x90] sm:$0xff]
  %v2203 = vld [vmem:[%s13 + $0x98] sm:$0xf]
  %v2204 = vld [vmem:[%s13 + $0x9c] sm:$0xff]
  %v2205 = vld [vmem:[%s13 + $0xa4] sm:$0xf]
  %v2206 = vld [vmem:[%s13 + $0xa8] sm:$0xff]
  %v2207 = vld [vmem:[%s13 + $0xb0] sm:$0xf]
  %v2208 = vld [vmem:[%s13 + $0xb4] sm:$0xff]
  %v2209 = vld [vmem:[%s13 + $0xbc] sm:$0xf]
  %v2210 = vld [vmem:[%s13 + $0xc0] sm:$0xff]
  %v2211 = vld [vmem:[%s13 + $0xc8] sm:$0xf]
  %v2212 = vld [vmem:[%s13 + $0xcc] sm:$0xff]
  %v2213 = vld [vmem:[%s13 + $0xd4] sm:$0xf]
  %v2214 = vld [vmem:[%s13 + $0xd8] sm:$0xff]
  %v2215 = vld [vmem:[%s13 + $0xe0] sm:$0xf]
  %v2216 = vld [vmem:[%s13 + $0xe4] sm:$0xff]
  %v2217 = vld [vmem:[%s13 + $0xec] sm:$0xf]
  %v2218 = vld [vmem:[%s13 + $0xf0] sm:$0xff]
  %v2219 = vld [vmem:[%s13 + $0xf8] sm:$0xf]
  %v2220 = vld [vmem:[%s13 + $0xfc] sm:$0xff]
  %v2221 = vld [vmem:[%s13 + $0x104] sm:$0xf]
  %v2222 = vld [vmem:[%s13 + $0x108] sm:$0xff]
  %v2223 = vld [vmem:[%s13 + $0x110] sm:$0xf]
  %v2224 = vld [vmem:[%s13 + $0x114] sm:$0xff]
  %v2225 = vld [vmem:[%s13 + $0x11c] sm:$0xf]
  %v2226 = vld [vmem:[%s13 + $0x120] sm:$0xff]
  %v2227 = vld [vmem:[%s13 + $0x128] sm:$0xf]
  %v2228 = vld [vmem:[%s13 + $0x12c] sm:$0xff]
  %v2229 = vld [vmem:[%s13 + $0x134] sm:$0xf]
  %v2230 = vld [vmem:[%s13 + $0x138] sm:$0xff]
  %v2231 = vld [vmem:[%s13 + $0x140] sm:$0xf]
  %v2232 = vld [vmem:[%s13 + $0x144] sm:$0xff]
  %v2233 = vld [vmem:[%s13 + $0x14c] sm:$0xf]
  %v2234 = vld [vmem:[%s14] sm:$0x7]
  %v2236 = vlaneseq
  %v2237 = vshrl.u32 %v2236, 7
  %v2238 = vsub.s32 0, %v2237
  %v2239 = vrot.slane %v2234, %v2238
  %v2240 = vlaneseq
  %v2241 = vshrl.u32 %v2240, 7
  %v2242 = vsub.s32 1, %v2241
  %v2243 = vrot.slane %v2234, %v2242
  %v2244 = vlaneseq
  %v2245 = vshrl.u32 %v2244, 7
  %v2246 = vsub.s32 2, %v2245
  %v2247 = vrot.slane %v2234, %v2246
  %v2307 = vunpack.c.l.b16 %v2178
  %v2308 = vunpack.c.h.b16 %v2178
  %v2309 = vunpack.c.l.b16 %v2179
  %v2310 = vunpack.c.l.b16 %v2180
  %v2311 = vunpack.c.h.b16 %v2180
  %v2312 = vunpack.c.l.b16 %v2181
  %v2313 = vunpack.c.l.b16 %v2182
  %v2314 = vunpack.c.h.b16 %v2182
  %v2315 = vunpack.c.l.b16 %v2183
  %v2316 = vunpack.c.l.b16 %v2184
  %v2317 = vunpack.c.h.b16 %v2184
  %v2318 = vunpack.c.l.b16 %v2185
  %v2319 = vunpack.c.l.b16 %v2186
  %v2320 = vunpack.c.h.b16 %v2186
  %v2321 = vunpack.c.l.b16 %v2187
  %v2322 = vunpack.c.l.b16 %v2188
  %v2323 = vunpack.c.h.b16 %v2188
  %v2324 = vunpack.c.l.b16 %v2189
  %v2325 = vunpack.c.l.b16 %v2190
  %v2326 = vunpack.c.h.b16 %v2190
  %v2327 = vunpack.c.l.b16 %v2191
  %v2328 = vunpack.c.l.b16 %v2192
  %v2329 = vunpack.c.h.b16 %v2192
  %v2330 = vunpack.c.l.b16 %v2193
  %v2331 = vunpack.c.l.b16 %v2194
  %v2332 = vunpack.c.h.b16 %v2194
  %v2333 = vunpack.c.l.b16 %v2195
  %v2334 = vunpack.c.l.b16 %v2196
  %v2335 = vunpack.c.h.b16 %v2196
  %v2336 = vunpack.c.l.b16 %v2197
  %v2337 = vunpack.c.l.b16 %v2198
  %v2338 = vunpack.c.h.b16 %v2198
  %v2339 = vunpack.c.l.b16 %v2199
  %v2340 = vunpack.c.l.b16 %v2200
  %v2341 = vunpack.c.h.b16 %v2200
  %v2342 = vunpack.c.l.b16 %v2201
  %v2343 = vunpack.c.l.b16 %v2202
  %v2344 = vunpack.c.h.b16 %v2202
  %v2345 = vunpack.c.l.b16 %v2203
  %v2346 = vunpack.c.l.b16 %v2204
  %v2347 = vunpack.c.h.b16 %v2204
  %v2348 = vunpack.c.l.b16 %v2205
  %v2349 = vunpack.c.l.b16 %v2206
  %v2350 = vunpack.c.h.b16 %v2206
  %v2351 = vunpack.c.l.b16 %v2207
  %v2352 = vunpack.c.l.b16 %v2208
  %v2353 = vunpack.c.h.b16 %v2208
  %v2354 = vunpack.c.l.b16 %v2209
  %v2355 = vunpack.c.l.b16 %v2210
  %v2356 = vunpack.c.h.b16 %v2210
  %v2357 = vunpack.c.l.b16 %v2211
  %v2358 = vunpack.c.l.b16 %v2212
  %v2359 = vunpack.c.h.b16 %v2212
  %v2360 = vunpack.c.l.b16 %v2213
  %v2361 = vunpack.c.l.b16 %v2214
  %v2362 = vunpack.c.h.b16 %v2214
  %v2363 = vunpack.c.l.b16 %v2215
  %v2364 = vunpack.c.l.b16 %v2216
  %v2365 = vunpack.c.h.b16 %v2216
  %v2366 = vunpack.c.l.b16 %v2217
  %v2367 = vunpack.c.l.b16 %v2218
  %v2368 = vunpack.c.h.b16 %v2218
  %v2369 = vunpack.c.l.b16 %v2219
  %v2370 = vunpack.c.l.b16 %v2220
  %v2371 = vunpack.c.h.b16 %v2220
  %v2372 = vunpack.c.l.b16 %v2221
  %v2373 = vunpack.c.l.b16 %v2222
  %v2374 = vunpack.c.h.b16 %v2222
  %v2375 = vunpack.c.l.b16 %v2223
  %v2376 = vunpack.c.l.b16 %v2224
  %v2377 = vunpack.c.h.b16 %v2224
  %v2378 = vunpack.c.l.b16 %v2225
  %v2379 = vunpack.c.l.b16 %v2226
  %v2380 = vunpack.c.h.b16 %v2226
  %v2381 = vunpack.c.l.b16 %v2227
  %v2382 = vunpack.c.l.b16 %v2228
  %v2383 = vunpack.c.h.b16 %v2228
  %v2384 = vunpack.c.l.b16 %v2229
  %v2385 = vunpack.c.l.b16 %v2230
  %v2386 = vunpack.c.h.b16 %v2230
  %v2387 = vunpack.c.l.b16 %v2231
  %v2388 = vunpack.c.l.b16 %v2232
  %v2389 = vunpack.c.h.b16 %v2232
  %v2390 = vunpack.c.l.b16 %v2233
  %v2391 = vpack.c.b16 %v2310, %v2307
  %v2392 = vpack.c.b16 %v2311, %v2308
  %v2393 = vpack.c.b16 %v2312, %v2309
  %v2394 = vpack.c.b16 %v2316, %v2313
  %v2395 = vpack.c.b16 %v2317, %v2314
  %v2396 = vpack.c.b16 %v2318, %v2315
  %v2397 = vpack.c.b16 %v2322, %v2319
  %v2398 = vpack.c.b16 %v2323, %v2320
  %v2399 = vpack.c.b16 %v2324, %v2321
  %v2400 = vpack.c.b16 %v2328, %v2325
  %v2401 = vpack.c.b16 %v2329, %v2326
  %v2402 = vpack.c.b16 %v2330, %v2327
  %v2403 = vpack.c.b16 %v2334, %v2331
  %v2404 = vpack.c.b16 %v2335, %v2332
  %v2405 = vpack.c.b16 %v2336, %v2333
  %v2406 = vpack.c.b16 %v2340, %v2337
  %v2407 = vpack.c.b16 %v2341, %v2338
  %v2408 = vpack.c.b16 %v2342, %v2339
  %v2409 = vpack.c.b16 %v2346, %v2343
  %v2410 = vpack.c.b16 %v2347, %v2344
  %v2411 = vpack.c.b16 %v2348, %v2345
  %v2412 = vpack.c.b16 %v2352, %v2349
  %v2413 = vpack.c.b16 %v2353, %v2350
  %v2414 = vpack.c.b16 %v2354, %v2351
  %v2415 = vpack.c.b16 %v2358, %v2355
  %v2416 = vpack.c.b16 %v2359, %v2356
  %v2417 = vpack.c.b16 %v2360, %v2357
  %v2418 = vpack.c.b16 %v2364, %v2361
  %v2419 = vpack.c.b16 %v2365, %v2362
  %v2420 = vpack.c.b16 %v2366, %v2363
  %v2421 = vpack.c.b16 %v2370, %v2367
  %v2422 = vpack.c.b16 %v2371, %v2368
  %v2423 = vpack.c.b16 %v2372, %v2369
  %v2424 = vpack.c.b16 %v2376, %v2373
  %v2425 = vpack.c.b16 %v2377, %v2374
  %v2426 = vpack.c.b16 %v2378, %v2375
  %v2427 = vpack.c.b16 %v2382, %v2379
  %v2428 = vpack.c.b16 %v2383, %v2380
  %v2429 = vpack.c.b16 %v2384, %v2381
  %v2430 = vpack.c.b16 %v2388, %v2385
  %v2431 = vpack.c.b16 %v2389, %v2386
  %v2432 = vpack.c.b16 %v2390, %v2387
  %vm2475 = vcmask 785408
  %v2477 = vsel %vm2475, %v2177, 0
  %2479 = vmatprep.subr.bf16.mxu0 %v2392
  %2480 = vmatpush1.bf16.msra.mxu0 %v2391
  %2481 = vmatprep.subr.bf16.mxu0 %v2395
  %2482 = vmatpush1.bf16.msra.mxu0 %v2394
  %2483 = vmatprep.subr.bf16.mxu0 %v2398
  %2484 = vmatpush1.bf16.msra.mxu0 %v2397
  %2485 = vmatprep.subr.bf16.mxu0 %v2401
  %2486 = vmatpush1.bf16.msra.mxu0 %v2400
  %2487 = vmatprep.subr.bf16.mxu0 %v2404
  %2488 = vmatpush1.bf16.msra.mxu0 %v2403
  %2489 = vmatprep.subr.bf16.mxu0 %v2407
  %2490 = vmatpush1.bf16.msra.mxu0 %v2406
  %2491 = vmatprep.subr.bf16.mxu0 %v2410
  %2492 = vmatpush1.bf16.msra.mxu0 %v2409
  %2493 = vmatprep.subr.bf16.mxu0 %v2413
  %2494 = vmatpush1.bf16.msra.mxu0 %v2412
  %2495 = vmatprep.subr.bf16.mxu0 %v2416
  %2496 = vmatpush1.bf16.msra.mxu0 %v2415
  %2497 = vmatprep.subr.bf16.mxu0 %v2419
  %2498 = vmatpush1.bf16.msra.mxu0 %v2418
  %2499 = vmatprep.subr.bf16.mxu0 %v2422
  %2500 = vmatpush1.bf16.msra.mxu0 %v2421
  %2501 = vmatprep.subr.bf16.mxu0 %v2425
  %2502 = vmatpush1.bf16.msra.mxu0 %v2424
  %2503 = vmatprep.subr.bf16.mxu0 %v2428
  %2504 = vmatpush1.bf16.msra.mxu0 %v2427
  %2505 = vmatprep.subr.bf16.mxu0 %v2431
  %2506 = vmatpush1.bf16.msra.mxu0 %v2430
  %2507 = vmatprep.subr.bf16.mxu0 0
  %2508 = vmatpush1.bf16.msra.mxu0 0
  %2509 = vmatprep.subr.bf16.mxu0 0
  %2510 = vmatpush1.bf16.msra.mxu0 0
  %2511 = vmatprep.mubr.f32.mxu0 %v2477
  %2512 = vmatmul.mubr.f32.gmra.mrb[0].mxu0 %v2176
  %v2513 = vpop.f32.mrb[0].mxu0
  %v2514 = vadd.f32 %v2239, %v2513
  %v2515 = vpop.f32.mrb[0].mxu0
  %v2516 = vadd.f32 %v2243, %v2515
  %2517 = vdwg.mxu0
  %2518 = vmatprep.subr.bf16.mxu0 0
  %2519 = vmatpush1.bf16.msra.mxu0 %v2393
  %2520 = vmatprep.subr.bf16.mxu0 0
  %2521 = vmatpush1.bf16.msra.mxu0 %v2396
  %2522 = vmatprep.subr.bf16.mxu0 0
  %2523 = vmatpush1.bf16.msra.mxu0 %v2399
  %2524 = vmatprep.subr.bf16.mxu0 0
  %2525 = vmatpush1.bf16.msra.mxu0 %v2402
  %2526 = vmatprep.subr.bf16.mxu0 0
  %2527 = vmatpush1.bf16.msra.mxu0 %v2405
  %2528 = vmatprep.subr.bf16.mxu0 0
  %2529 = vmatpush1.bf16.msra.mxu0 %v2408
  %2530 = vmatprep.subr.bf16.mxu0 0
  %2531 = vmatpush1.bf16.msra.mxu0 %v2411
  %2532 = vmatprep.subr.bf16.mxu0 0
  %2533 = vmatpush1.bf16.msra.mxu0 %v2414
  %2534 = vmatprep.subr.bf16.mxu0 0
  %2535 = vmatpush1.bf16.msra.mxu0 %v2417
  %2536 = vmatprep.subr.bf16.mxu0 0
  %2537 = vmatpush1.bf16.msra.mxu0 %v2420
  %2538 = vmatprep.subr.bf16.mxu0 0
  %2539 = vmatpush1.bf16.msra.mxu0 %v2423
  %2540 = vmatprep.subr.bf16.mxu0 0
  %2541 = vmatpush1.bf16.msra.mxu0 %v2426
  %2542 = vmatprep.subr.bf16.mxu0 0
  %2543 = vmatpush1.bf16.msra.mxu0 %v2429
  %2544 = vmatprep.subr.bf16.mxu0 0
  %2545 = vmatpush1.bf16.msra.mxu0 %v2432
  %2546 = vmatprep.subr.bf16.mxu0 0
  %2547 = vmatpush1.bf16.msra.mxu0 0
  %2548 = vmatprep.subr.bf16.mxu0 0
  %2549 = vmatpush1.bf16.msra.mxu0 0
  %2550 = vmatprep.mubr.f32.mxu0 %v2477
  %2551 = vmatmul.mubr.f32.gmra.mrb[0].mxu0 %v2176
  %v2552 = vpop.f32.mrb[0].mxu0
  %v2553 = vadd.f32 %v2247, %v2552
  %v2554 = vpop.f32.mrb[0].mxu0
  %2555 = vdwg.mxu0
  %v2556 = vmax.f32 %v2514, 0.0
  %v2557 = vmax.f32 %v2516, 0.0
  %v2558 = vmax.f32 %v2553, 0.0
  %v2559 = vld [vmem:[%s15] sm:$0xf]
  %v2560 = vld [vmem:[%s15 + $0x4] sm:$0xf]
  %v2561 = vld [vmem:[%s15 + $0x8] sm:$0xf]
  %v2562 = vld [vmem:[%s15 + $0xc] sm:$0xf]
  %v2563 = vld [vmem:[%s15 + $0x10] sm:$0xf]
  %v2564 = vld [vmem:[%s15 + $0x14] sm:$0xf]
  %v2565 = vld [vmem:[%s15 + $0x18] sm:$0xf]
  %v2566 = vld [vmem:[%s15 + $0x1c] sm:$0xf]
  %v2567 = vld [vmem:[%s15 + $0x20] sm:$0xf]
  %v2568 = vld [vmem:[%s15 + $0x24] sm:$0xf]
  %v2569 = vld [vmem:[%s15 + $0x28] sm:$0xf]
  %v2570 = vld [vmem:[%s15 + $0x2c] sm:$0xf]
  %v2571 = vld [vmem:[%s15 + $0x30] sm:$0xf]
  %v2572 = vld [vmem:[%s15 + $0x34] sm:$0xf]
  %v2573 = vld [vmem:[%s15 + $0x38] sm:$0xf]
  %v2574 = vld [vmem:[%s15 + $0x3c] sm:$0xf]
  %v2591 = vunpack.c.l.b16 %v2559
  %v2592 = vunpack.c.l.b16 %v2560
  %v2593 = vunpack.c.l.b16 %v2561
  %v2594 = vunpack.c.l.b16 %v2562
  %v2595 = vunpack.c.l.b16 %v2563
  %v2596 = vunpack.c.l.b16 %v2564
  %v2597 = vunpack.c.l.b16 %v2565
  %v2598 = vunpack.c.l.b16 %v2566
  %v2599 = vunpack.c.l.b16 %v2567
  %v2600 = vunpack.c.l.b16 %v2568
  %v2601 = vunpack.c.l.b16 %v2569
  %v2602 = vunpack.c.l.b16 %v2570
  %v2603 = vunpack.c.l.b16 %v2571
  %v2604 = vunpack.c.l.b16 %v2572
  %v2605 = vunpack.c.l.b16 %v2573
  %v2606 = vunpack.c.l.b16 %v2574
  %v2607 = vpack.c.b16 %v2592, %v2591
  %v2608 = vpack.c.b16 %v2594, %v2593
  %v2609 = vpack.c.b16 %v2596, %v2595
  %v2610 = vpack.c.b16 %v2598, %v2597
  %v2611 = vpack.c.b16 %v2600, %v2599
  %v2612 = vpack.c.b16 %v2602, %v2601
  %v2613 = vpack.c.b16 %v2604, %v2603
  %v2614 = vpack.c.b16 %v2606, %v2605
  %2623 = vmatprep.subr.bf16.mxu0 0
  %2624 = vmatpush1.bf16.msra.mxu0 %v2607
  %2625 = vmatprep.subr.bf16.mxu0 0
  %2626 = vmatpush1.bf16.msra.mxu0 %v2608
  %2627 = vmatprep.subr.bf16.mxu0 0
  %2628 = vmatpush1.bf16.msra.mxu0 %v2609
  %2629 = vmatprep.subr.bf16.mxu0 0
  %2630 = vmatpush1.bf16.msra.mxu0 %v2610
  %2631 = vmatprep.subr.bf16.mxu0 0
  %2632 = vmatpush1.bf16.msra.mxu0 %v2611
  %2633 = vmatprep.subr.bf16.mxu0 0
  %2634 = vmatpush1.bf16.msra.mxu0 %v2612
  %2635 = vmatprep.subr.bf16.mxu0 0
  %2636 = vmatpush1.bf16.msra.mxu0 %v2613
  %2637 = vmatprep.subr.bf16.mxu0 0
  %2638 = vmatpush1.bf16.msra.mxu0 %v2614
  %2639 = vmatprep.subr.bf16.mxu0 0
  %2640 = vmatpush1.bf16.msra.mxu0 0
  %2641 = vmatprep.subr.bf16.mxu0 0
  %2642 = vmatpush1.bf16.msra.mxu0 0
  %2643 = vmatprep.subr.bf16.mxu0 0
  %2644 = vmatpush1.bf16.msra.mxu0 0
  %2645 = vmatprep.subr.bf16.mxu0 0
  %2646 = vmatpush1.bf16.msra.mxu0 0
  %2647 = vmatprep.subr.bf16.mxu0 0
  %2648 = vmatpush1.bf16.msra.mxu0 0
  %2649 = vmatprep.subr.bf16.mxu0 0
  %2650 = vmatpush1.bf16.msra.mxu0 0
  %2651 = vmatprep.subr.bf16.mxu0 0
  %2652 = vmatpush1.bf16.msra.mxu0 0
  %2653 = vmatprep.subr.bf16.mxu0 0
  %2654 = vmatpush1.bf16.msra.mxu0 0
  %2655 = vmatprep.mubr.f32.mxu0 0.0
  %2656 = vmatmul.mubr.f32.gmra.mrb[0].mxu0 %v2556
  %v2657 = vpop.f32.mrb[0].mxu0
  %v2658 = vadd.f32 0.0, %v2657
  %v2659 = vpop.f32.mrb[0].mxu0
  %2660 = vdwg.mxu0
  %v2661 = vld [vmem:[%s16] sm:$0xf]
  %v2662 = vld [vmem:[%s16 + $0x4] sm:$0xf]
  %v2663 = vld [vmem:[%s16 + $0x8] sm:$0xf]
  %v2664 = vld [vmem:[%s16 + $0xc] sm:$0xf]
  %v2665 = vld [vmem:[%s16 + $0x10] sm:$0xf]
  %v2666 = vld [vmem:[%s16 + $0x14] sm:$0xf]
  %v2667 = vld [vmem:[%s16 + $0x18] sm:$0xf]
  %v2668 = vld [vmem:[%s16 + $0x1c] sm:$0xf]
  %v2669 = vld [vmem:[%s16 + $0x20] sm:$0xf]
  %v2670 = vld [vmem:[%s16 + $0x24] sm:$0xf]
  %v2671 = vld [vmem:[%s16 + $0x28] sm:$0xf]
  %v2672 = vld [vmem:[%s16 + $0x2c] sm:$0xf]
  %v2673 = vld [vmem:[%s16 + $0x30] sm:$0xf]
  %v2674 = vld [vmem:[%s16 + $0x34] sm:$0xf]
  %v2675 = vld [vmem:[%s16 + $0x38] sm:$0xf]
  %v2676 = vld [vmem:[%s16 + $0x3c] sm:$0xf]
  %v2693 = vunpack.c.l.b16 %v2661
  %v2694 = vunpack.c.l.b16 %v2662
  %v2695 = vunpack.c.l.b16 %v2663
  %v2696 = vunpack.c.l.b16 %v2664
  %v2697 = vunpack.c.l.b16 %v2665
  %v2698 = vunpack.c.l.b16 %v2666
  %v2699 = vunpack.c.l.b16 %v2667
  %v2700 = vunpack.c.l.b16 %v2668
  %v2701 = vunpack.c.l.b16 %v2669
  %v2702 = vunpack.c.l.b16 %v2670
  %v2703 = vunpack.c.l.b16 %v2671
  %v2704 = vunpack.c.l.b16 %v2672
  %v2705 = vunpack.c.l.b16 %v2673
  %v2706 = vunpack.c.l.b16 %v2674
  %v2707 = vunpack.c.l.b16 %v2675
  %v2708 = vunpack.c.l.b16 %v2676
  %v2709 = vpack.c.b16 %v2694, %v2693
  %v2710 = vpack.c.b16 %v2696, %v2695
  %v2711 = vpack.c.b16 %v2698, %v2697
  %v2712 = vpack.c.b16 %v2700, %v2699
  %v2713 = vpack.c.b16 %v2702, %v2701
  %v2714 = vpack.c.b16 %v2704, %v2703
  %v2715 = vpack.c.b16 %v2706, %v2705
  %v2716 = vpack.c.b16 %v2708, %v2707
  %2725 = vmatprep.subr.bf16.mxu0 0
  %2726 = vmatpush1.bf16.msra.mxu0 %v2709
  %2727 = vmatprep.subr.bf16.mxu0 0
  %2728 = vmatpush1.bf16.msra.mxu0 %v2710
  %2729 = vmatprep.subr.bf16.mxu0 0
  %2730 = vmatpush1.bf16.msra.mxu0 %v2711
  %2731 = vmatprep.subr.bf16.mxu0 0
  %2732 = vmatpush1.bf16.msra.mxu0 %v2712
  %2733 = vmatprep.subr.bf16.mxu0 0
  %2734 = vmatpush1.bf16.msra.mxu0 %v2713
  %2735 = vmatprep.subr.bf16.mxu0 0
  %2736 = vmatpush1.bf16.msra.mxu0 %v2714
  %2737 = vmatprep.subr.bf16.mxu0 0
  %2738 = vmatpush1.bf16.msra.mxu0 %v2715
  %2739 = vmatprep.subr.bf16.mxu0 0
  %2740 = vmatpush1.bf16.msra.mxu0 %v2716
  %2741 = vmatprep.subr.bf16.mxu0 0
  %2742 = vmatpush1.bf16.msra.mxu0 0
  %2743 = vmatprep.subr.bf16.mxu0 0
  %2744 = vmatpush1.bf16.msra.mxu0 0
  %2745 = vmatprep.subr.bf16.mxu0 0
  %2746 = vmatpush1.bf16.msra.mxu0 0
  %2747 = vmatprep.subr.bf16.mxu0 0
  %2748 = vmatpush1.bf16.msra.mxu0 0
  %2749 = vmatprep.subr.bf16.mxu0 0
  %2750 = vmatpush1.bf16.msra.mxu0 0
  %2751 = vmatprep.subr.bf16.mxu0 0
  %2752 = vmatpush1.bf16.msra.mxu0 0
  %2753 = vmatprep.subr.bf16.mxu0 0
  %2754 = vmatpush1.bf16.msra.mxu0 0
  %2755 = vmatprep.subr.bf16.mxu0 0
  %2756 = vmatpush1.bf16.msra.mxu0 0
  %2757 = vmatprep.mubr.f32.mxu0 0.0
  %2758 = vmatmul.mubr.f32.gmra.mrb[0].mxu0 %v2557
  %v2759 = vpop.f32.mrb[0].mxu0
  %v2760 = vadd.f32 0.0, %v2759
  %v2761 = vpop.f32.mrb[0].mxu0
  %2762 = vdwg.mxu0
  %v2763 = vld [vmem:[%s17] sm:$0xf]
  %v2764 = vld [vmem:[%s17 + $0x4] sm:$0xf]
  %v2765 = vld [vmem:[%s17 + $0x8] sm:$0xf]
  %v2766 = vld [vmem:[%s17 + $0xc] sm:$0xf]
  %v2767 = vld [vmem:[%s17 + $0x10] sm:$0xf]
  %v2768 = vld [vmem:[%s17 + $0x14] sm:$0xf]
  %v2769 = vld [vmem:[%s17 + $0x18] sm:$0xf]
  %v2770 = vld [vmem:[%s17 + $0x1c] sm:$0xf]
  %v2771 = vld [vmem:[%s17 + $0x20] sm:$0xf]
  %v2772 = vld [vmem:[%s17 + $0x24] sm:$0xf]
  %v2773 = vld [vmem:[%s17 + $0x28] sm:$0xf]
  %v2774 = vld [vmem:[%s17 + $0x2c] sm:$0xf]
  %v2775 = vld [vmem:[%s17 + $0x30] sm:$0xf]
  %v2776 = vld [vmem:[%s17 + $0x34] sm:$0xf]
  %v2777 = vld [vmem:[%s17 + $0x38] sm:$0xf]
  %v2778 = vld [vmem:[%s17 + $0x3c] sm:$0xf]
  %v2795 = vunpack.c.l.b16 %v2763
  %v2796 = vunpack.c.l.b16 %v2764
  %v2797 = vunpack.c.l.b16 %v2765
  %v2798 = vunpack.c.l.b16 %v2766
  %v2799 = vunpack.c.l.b16 %v2767
  %v2800 = vunpack.c.l.b16 %v2768
  %v2801 = vunpack.c.l.b16 %v2769
  %v2802 = vunpack.c.l.b16 %v2770
  %v2803 = vunpack.c.l.b16 %v2771
  %v2804 = vunpack.c.l.b16 %v2772
  %v2805 = vunpack.c.l.b16 %v2773
  %v2806 = vunpack.c.l.b16 %v2774
  %v2807 = vunpack.c.l.b16 %v2775
  %v2808 = vunpack.c.l.b16 %v2776
  %v2809 = vunpack.c.l.b16 %v2777
  %v2810 = vunpack.c.l.b16 %v2778
  %v2811 = vpack.c.b16 %v2796, %v2795
  %v2812 = vpack.c.b16 %v2798, %v2797
  %v2813 = vpack.c.b16 %v2800, %v2799
  %v2814 = vpack.c.b16 %v2802, %v2801
  %v2815 = vpack.c.b16 %v2804, %v2803
  %v2816 = vpack.c.b16 %v2806, %v2805
  %v2817 = vpack.c.b16 %v2808, %v2807
  %v2818 = vpack.c.b16 %v2810, %v2809
  %2827 = vmatprep.subr.bf16.mxu0 0
  %2828 = vmatpush1.bf16.msra.mxu0 %v2811
  %2829 = vmatprep.subr.bf16.mxu0 0
  %2830 = vmatpush1.bf16.msra.mxu0 %v2812
  %2831 = vmatprep.subr.bf16.mxu0 0
  %2832 = vmatpush1.bf16.msra.mxu0 %v2813
  %2833 = vmatprep.subr.bf16.mxu0 0
  %2834 = vmatpush1.bf16.msra.mxu0 %v2814
  %2835 = vmatprep.subr.bf16.mxu0 0
  %2836 = vmatpush1.bf16.msra.mxu0 %v2815
  %2837 = vmatprep.subr.bf16.mxu0 0
  %2838 = vmatpush1.bf16.msra.mxu0 %v2816
  %2839 = vmatprep.subr.bf16.mxu0 0
  %2840 = vmatpush1.bf16.msra.mxu0 %v2817
  %2841 = vmatprep.subr.bf16.mxu0 0
  %2842 = vmatpush1.bf16.msra.mxu0 %v2818
  %2843 = vmatprep.subr.bf16.mxu0 0
  %2844 = vmatpush1.bf16.msra.mxu0 0
  %2845 = vmatprep.subr.bf16.mxu0 0
  %2846 = vmatpush1.bf16.msra.mxu0 0
  %2847 = vmatprep.subr.bf16.mxu0 0
  %2848 = vmatpush1.bf16.msra.mxu0 0
  %2849 = vmatprep.subr.bf16.mxu0 0
  %2850 = vmatpush1.bf16.msra.mxu0 0
  %2851 = vmatprep.subr.bf16.mxu0 0
  %2852 = vmatpush1.bf16.msra.mxu0 0
  %2853 = vmatprep.subr.bf16.mxu0 0
  %2854 = vmatpush1.bf16.msra.mxu0 0
  %2855 = vmatprep.subr.bf16.mxu0 0
  %2856 = vmatpush1.bf16.msra.mxu0 0
  %2857 = vmatprep.subr.bf16.mxu0 0
  %2858 = vmatpush1.bf16.msra.mxu0 0
  %2859 = vmatprep.mubr.f32.mxu0 0.0
  %2860 = vmatmul.mubr.f32.gmra.mrb[0].mxu0 %v2558
  %v2861 = vpop.f32.mrb[0].mxu0
  %v2862 = vadd.f32 0.0, %v2861
  %v2863 = vpop.f32.mrb[0].mxu0
  %2864 = vdwg.mxu0
  %2866 = vrot.lane.b32.xlu0 %v2760, 16
  %v2867 = vpop.permute.xlu0 %2866
  %2870 = vrot.lane.b32.xlu0 %v2862, 32
  %v2871 = vpop.permute.xlu0 %2870
  %v2873 = vsel %vm429, %v2658, %v2867
  %v2874 = vsel %vm688, %v2873, %v2871
  %v2875 = vld [vmem:[%s18] sm:$0x1]
  %v2877 = vlaneseq
  %v2878 = vshrl.u32 %v2877, 7
  %v2879 = vsub.s32 0, %v2878
  %v2880 = vrot.slane %v2875, %v2879
  %v2882 = vadd.f32 %v2874, %v2880
  %v2883 = vld [vmem:[%s19] sm:$0xf]
  %v2884 = vld [vmem:[%s19 + $0x4] sm:$0xf]
  %v2885 = vld [vmem:[%s19 + $0x8] sm:$0xf]
  %v2886 = vld [vmem:[%s19 + $0xc] sm:$0xf]
  %v2887 = vld [vmem:[%s19 + $0x10] sm:$0xf]
  %v2888 = vld [vmem:[%s19 + $0x14] sm:$0xf]
  %v2889 = vld [vmem:[%s19 + $0x18] sm:$0xf]
  %v2890 = vld [vmem:[%s19 + $0x1c] sm:$0xf]
  %v2891 = vld [vmem:[%s19 + $0x20] sm:$0xf]
  %v2892 = vld [vmem:[%s19 + $0x24] sm:$0xf]
  %v2893 = vld [vmem:[%s19 + $0x28] sm:$0xf]
  %v2894 = vld [vmem:[%s19 + $0x2c] sm:$0xf]
  %v2895 = vld [vmem:[%s19 + $0x30] sm:$0xf]
  %v2896 = vld [vmem:[%s19 + $0x34] sm:$0xf]
  %v2897 = vld [vmem:[%s19 + $0x38] sm:$0xf]
  %v2898 = vld [vmem:[%s19 + $0x3c] sm:$0xf]
  %v2899 = vld [vmem:[%s19 + $0x40] sm:$0xf]
  %v2900 = vld [vmem:[%s19 + $0x44] sm:$0xf]
  %v2901 = vld [vmem:[%s19 + $0x48] sm:$0xf]
  %v2902 = vld [vmem:[%s19 + $0x4c] sm:$0xf]
  %v2903 = vld [vmem:[%s19 + $0x50] sm:$0xf]
  %v2904 = vld [vmem:[%s19 + $0x54] sm:$0xf]
  %v2905 = vld [vmem:[%s19 + $0x58] sm:$0xf]
  %v2906 = vld [vmem:[%s19 + $0x5c] sm:$0xf]
  %v2907 = vld [vmem:[%s19 + $0x60] sm:$0xf]
  %v2908 = vld [vmem:[%s19 + $0x64] sm:$0xf]
  %v2909 = vld [vmem:[%s19 + $0x68] sm:$0xf]
  %v2910 = vld [vmem:[%s19 + $0x6c] sm:$0xf]
  %v2911 = vld [vmem:[%s20] sm:$0x1]
  %v2913 = vlaneseq
  %v2914 = vshrl.u32 %v2913, 7
  %v2915 = vsub.s32 0, %v2914
  %v2916 = vrot.slane %v2911, %v2915
  %v2946 = vunpack.c.l.b16 %v2883
  %v2947 = vunpack.c.l.b16 %v2884
  %v2948 = vunpack.c.l.b16 %v2885
  %v2949 = vunpack.c.l.b16 %v2886
  %v2950 = vunpack.c.l.b16 %v2887
  %v2951 = vunpack.c.l.b16 %v2888
  %v2952 = vunpack.c.l.b16 %v2889
  %v2953 = vunpack.c.l.b16 %v2890
  %v2954 = vunpack.c.l.b16 %v2891
  %v2955 = vunpack.c.l.b16 %v2892
  %v2956 = vunpack.c.l.b16 %v2893
  %v2957 = vunpack.c.l.b16 %v2894
  %v2958 = vunpack.c.l.b16 %v2895
  %v2959 = vunpack.c.l.b16 %v2896
  %v2960 = vunpack.c.l.b16 %v2897
  %v2961 = vunpack.c.l.b16 %v2898
  %v2962 = vunpack.c.l.b16 %v2899
  %v2963 = vunpack.c.l.b16 %v2900
  %v2964 = vunpack.c.l.b16 %v2901
  %v2965 = vunpack.c.l.b16 %v2902
  %v2966 = vunpack.c.l.b16 %v2903
  %v2967 = vunpack.c.l.b16 %v2904
  %v2968 = vunpack.c.l.b16 %v2905
  %v2969 = vunpack.c.l.b16 %v2906
  %v2970 = vunpack.c.l.b16 %v2907
  %v2971 = vunpack.c.l.b16 %v2908
  %v2972 = vunpack.c.l.b16 %v2909
  %v2973 = vunpack.c.l.b16 %v2910
  %v2974 = vpack.c.b16 %v2947, %v2946
  %v2975 = vpack.c.b16 %v2949, %v2948
  %v2976 = vpack.c.b16 %v2951, %v2950
  %v2977 = vpack.c.b16 %v2953, %v2952
  %v2978 = vpack.c.b16 %v2955, %v2954
  %v2979 = vpack.c.b16 %v2957, %v2956
  %v2980 = vpack.c.b16 %v2959, %v2958
  %v2981 = vpack.c.b16 %v2961, %v2960
  %v2982 = vpack.c.b16 %v2963, %v2962
  %v2983 = vpack.c.b16 %v2965, %v2964
  %v2984 = vpack.c.b16 %v2967, %v2966
  %v2985 = vpack.c.b16 %v2969, %v2968
  %v2986 = vpack.c.b16 %v2971, %v2970
  %v2987 = vpack.c.b16 %v2973, %v2972
  %3002 = vmatprep.subr.bf16.mxu0 0
  %3003 = vmatpush1.bf16.msra.mxu0 %v2974
  %3004 = vmatprep.subr.bf16.mxu0 0
  %3005 = vmatpush1.bf16.msra.mxu0 %v2975
  %3006 = vmatprep.subr.bf16.mxu0 0
  %3007 = vmatpush1.bf16.msra.mxu0 %v2976
  %3008 = vmatprep.subr.bf16.mxu0 0
  %3009 = vmatpush1.bf16.msra.mxu0 %v2977
  %3010 = vmatprep.subr.bf16.mxu0 0
  %3011 = vmatpush1.bf16.msra.mxu0 %v2978
  %3012 = vmatprep.subr.bf16.mxu0 0
  %3013 = vmatpush1.bf16.msra.mxu0 %v2979
  %3014 = vmatprep.subr.bf16.mxu0 0
  %3015 = vmatpush1.bf16.msra.mxu0 %v2980
  %3016 = vmatprep.subr.bf16.mxu0 0
  %3017 = vmatpush1.bf16.msra.mxu0 %v2981
  %3018 = vmatprep.subr.bf16.mxu0 0
  %3019 = vmatpush1.bf16.msra.mxu0 %v2982
  %3020 = vmatprep.subr.bf16.mxu0 0
  %3021 = vmatpush1.bf16.msra.mxu0 %v2983
  %3022 = vmatprep.subr.bf16.mxu0 0
  %3023 = vmatpush1.bf16.msra.mxu0 %v2984
  %3024 = vmatprep.subr.bf16.mxu0 0
  %3025 = vmatpush1.bf16.msra.mxu0 %v2985
  %3026 = vmatprep.subr.bf16.mxu0 0
  %3027 = vmatpush1.bf16.msra.mxu0 %v2986
  %3028 = vmatprep.subr.bf16.mxu0 0
  %3029 = vmatpush1.bf16.msra.mxu0 %v2987
  %3030 = vmatprep.subr.bf16.mxu0 0
  %3031 = vmatpush1.bf16.msra.mxu0 0
  %3032 = vmatprep.subr.bf16.mxu0 0
  %3033 = vmatpush1.bf16.msra.mxu0 0
  %3034 = vmatprep.mubr.f32.mxu0 %v2477
  %3035 = vmatmul.mubr.f32.gmra.mrb[0].mxu0 %v2176
  %v3036 = vpop.f32.mrb[0].mxu0
  %v3037 = vadd.f32 %v2916, %v3036
  %v3038 = vpop.f32.mrb[0].mxu0
  %3039 = vdwg.mxu0
  %v3040 = vmax.f32 %v3037, 0.0
  %v3041 = vld [vmem:[%s21] sm:$0x1]
  %v3043 = vlaneseq
  %v3044 = vshrl.u32 %v3043, 7
  %v3045 = vsub.s32 0, %v3044
  %v3046 = vrot.slane %v3041, %v3045
  %v3048 = vmul.f32 %v3040, %v3046
  %v3049 = vsel %vm153, %v3048, 0.0
  %3050 = vadd.xlane.f32.xlu0 %v3049
  %v3051 = vpop.xlane.xlu0 %3050
  %v3052 = vld [vmem:[#allocation2] sm:$0x1]
  %v3054 = vlaneseq
  %v3055 = vshrl.u32 %v3054, 7
  %v3056 = vsub.s32 0, %v3055
  %v3057 = vrot.slane %v3052, %v3056
  %v3059 = vadd.f32 %v3051, %v3057
  %3061 = vrot.lane.b32.xlu0 %v3059, 48
  %v3062 = vpop.permute.xlu0 %3061
  %vm3064 = vcmask 392192
  %v3065 = vsel %vm3064, %v2882, %v3062
  %vm3066 = vcmask 400384
  %v3067 = vsel %vm3066, %v3065, 0.0
  %3068 = vst [vmem:[%s23] sm:$0x3] %v3067
  // Predicated region
  $region94: #{_lambda_.1} parent=0 // pred_check
    _
  $region95: #{_lambda_.1} parent=0 // pred_check_branch
    %3070 = sbr.rel (0) target = $region97
  $region96: #{_lambda_.1} parent=0 // pred_region
    _
  $region97: #{_lambda_.1} parent=0 // pred_fallthru
    _
  // Predicated region
  $region98: #{_lambda_.1} parent=0 // pred_check
    _
  $region99: #{_lambda_.1} parent=0 // pred_check_branch
    %3072 = sbr.rel (0) target = $region101
  $region100: #{_lambda_.1} parent=0 // pred_region
    _
  $region101: #{_lambda_.1} parent=0 // pred_fallthru
    _

</llo_original>
